<compile_context>
chip_gen: v7x
topology: tpu7x:2x2x1
jax: 0.10.0
libtpu: 0.0.40
codegen_flags: <defaults>
</compile_context>

<pallas_src>
import jax
import jax.numpy as jnp
from jax import lax
from jax.experimental import pallas as pl
from jax.experimental.pallas import tpu as pltpu

LANE = 128   # TPU lane width: channel dims are padded to a multiple of this
PADW = 8     # sublane padding on each side of the W axis of the deconv scratch


# --------------------------------------------------------------------------
# Kernel 1: fused  deconv(k=2,s=2)  ->  conv3x3(p=1)  ->  BN partial stats
# --------------------------------------------------------------------------
def fused_deconv_conv_kernel(x_top_ref, x_body_ref, x_bot_ref,
                             wd0_ref, wd1_ref, bd_ref,
                             wA_ref, wB_ref, wC_ref, wD_ref, bc_ref,
                             z_ref, stats_ref,
                             p0_ref, p1_ref):
    s = pl.program_id(1)
    n_strips = pl.num_programs(1)
    tile_h = x_body_ref.shape[1]
    W = x_body_ref.shape[2]
    Cin = x_body_ref.shape[3]
    Cp = z_ref.shape[4]
    Ws = 2 * W
    M = tile_h * Ws
    mm_dtype = wd0_ref.dtype
    f32 = jnp.float32

    bd = bd_ref[...]                                   # (1, 2*Cp) f32
    bc = bc_ref[...]                                   # (1, Cp)   f32

    def deconv(x2d, w_ref):
        # x2d: (R, Cin) mm_dtype,  w_ref: (Cin, 2*Cp)  ->  (R, 2*Cp) f32 (bias included)
        return jnp.dot(x2d, w_ref[...], preferred_element_type=f32) + bd

    xb = x_body_ref[0].reshape(tile_h * W, Cin).astype(mm_dtype)
    xt = x_top_ref[0].reshape(W, Cin).astype(mm_dtype)
    xu = x_bot_ref[0].reshape(W, Cin).astype(mm_dtype)

    # a in {0,1} selects the deconv output sub-row (upsampled row 2h + a);
    # columns of the deconv weight are ordered (b, channel) so a plain reshape of the
    # matmul result scatters the width sub-pixels:  (R, 2*Cp) -> (rows, 2W, Cp).
    y0 = deconv(xb, wd0_ref)                           # even sub-rows of the strip
    y1 = deconv(xb, wd1_ref)                           # odd  sub-rows of the strip
    top_ok = (s > 0).astype(f32)                       # image boundary => conv zero-pad
    bot_ok = (s < n_strips - 1).astype(f32)
    yt = deconv(xt, wd1_ref) * top_ok                  # sub-row a=1 of the row above the strip
    yu = deconv(xu, wd0_ref) * bot_ok                  # sub-row a=0 of the row below the strip

    # Even / odd deconv-row planes in VMEM scratch, W-padded so that all stores are
    # sublane-aligned and the three horizontal conv taps are hoisted static slices.
    p0_ref[...] = jnp.zeros_like(p0_ref)
    p1_ref[...] = jnp.zeros_like(p1_ref)
    lo, hi = PADW, PADW + Ws
    # p0 rows: [0..tile_h) = even sub-rows of the strip, [tile_h] = bottom halo row.
    p0_ref[0:tile_h, lo:hi, :] = y0.reshape(tile_h, Ws, Cp)
    p0_ref[tile_h, lo:hi, :] = yu.reshape(Ws, Cp)
    # p1 rows: [0] = top halo row, [1..tile_h] = odd sub-rows of the strip.
    p1_ref[0, lo:hi, :] = yt.reshape(Ws, Cp)
    p1_ref[1:tile_h + 1, lo:hi, :] = y1.reshape(tile_h, Ws, Cp)

    # 3x3 conv, decomposed over even/odd output rows:
    #   even out row 2h reads deconv rows {2h-1, 2h, 2h+1} = {p1[h], p0[h], p1[h+1]}
    #   odd  out row 2h+1 reads            {2h, 2h+1, 2h+2} = {p0[h], p1[h+1], p0[h+1]}
    # Bases B and C feed both outputs, so their weights are column-concatenated
    # (N = 2*Cp) and the matmul result is split -> 12 matmuls total, K = Cp.
    accE = jnp.zeros((M, Cp), f32)
    accO = jnp.zeros((M, Cp), f32)
    for dw in range(3):                                # static unroll over the W taps
        c0 = PADW - 1 + dw
        A = p1_ref[0:tile_h, c0:c0 + Ws, :].reshape(M, Cp).astype(mm_dtype)
        accE = accE + jnp.dot(A, wA_ref[dw], preferred_element_type=f32)
        D = p0_ref[1:tile_h + 1, c0:c0 + Ws, :].reshape(M, Cp).astype(mm_dtype)
        accO = accO + jnp.dot(D, wD_ref[dw], preferred_element_type=f32)
        B = p0_ref[0:tile_h, c0:c0 + Ws, :].reshape(M, Cp).astype(mm_dtype)
        rB = jnp.dot(B, wB_ref[dw], preferred_element_type=f32)     # (M, 2*Cp)
        accE = accE + rB[:, :Cp]
        accO = accO + rB[:, Cp:]
        C = p1_ref[1:tile_h + 1, c0:c0 + Ws, :].reshape(M, Cp).astype(mm_dtype)
        rC = jnp.dot(C, wC_ref[dw], preferred_element_type=f32)
        accE = accE + rC[:, :Cp]
        accO = accO + rC[:, Cp:]
    accE = accE + bc
    accO = accO + bc

    # Store the conv output with even/odd rows on a separate (size-2) axis:
    # (N, H, 2, 2W, Cp) reshapes to (N, 2H, 2W, Cp) for free outside the kernel.
    z_ref[0, :, 0, :, :] = accE.reshape(tile_h, Ws, Cp)
    z_ref[0, :, 1, :, :] = accO.reshape(tile_h, Ws, Cp)

    # Per-strip BatchNorm partial stats: channel sum and centered M2 (Chan combination
    # in the wrapper) -- cheap VPU work under the MXU, no extra HBM pass over z.
    cnt = jnp.float32(2 * M)
    ssum = jnp.sum(accE, axis=0, keepdims=True) + jnp.sum(accO, axis=0, keepdims=True)
    mu = ssum / cnt
    m2 = (jnp.sum((accE - mu) ** 2, axis=0, keepdims=True)
          + jnp.sum((accO - mu) ** 2, axis=0, keepdims=True))
    stats_ref[0, 0, 0:1, :] = ssum
    stats_ref[0, 0, 1:2, :] = m2


# --------------------------------------------------------------------------
# Kernel 2: normalize (scale/shift) + ReLU, elementwise, lane-dense blocks
# --------------------------------------------------------------------------
def bn_relu_kernel(z_ref, scale_ref, shift_ref, o_ref):
    z = z_ref[...]
    sc = scale_ref[...].reshape(1, 1, 1, 1, -1)
    sh = shift_ref[...].reshape(1, 1, 1, 1, -1)
    o_ref[...] = jnp.maximum(z * sc + sh, 0.0)
    # TODO(synk): the final NHWC->NCHW transpose could be folded into this kernel's
    #             out_spec with an in-kernel transpose; it is left to XLA for safety.


# --------------------------------------------------------------------------
# Wrapper implementing Deconv2DBlock.forward (NCHW in, NCHW out)
# --------------------------------------------------------------------------
def _pick_tile_h(H, Ws, Cp, budget_bytes=8 * 1024 * 1024):
    """Largest divisor of H whose per-step VMEM working set fits the budget."""
    best = 1
    for t in range(1, H + 1):
        if H % t:
            continue
        est = (
            2 * (t * 2 * Ws * Cp * 4)                     # z output block, double-buffered
            + 2 * (t + 1) * (Ws + 2 * PADW) * Cp * 4      # p0 / p1 scratch (f32)
            + 2 * t * Ws * Cp * 4                         # accE / accO
            + 4 * t * Ws * Cp * 4                         # transient tap slices / deconv rows
        )
        if est <= budget_bytes:
            best = t
    return best


def deconv2d_block_forward(x_nchw, params, *, tile_h=None, use_bf16_mxu=True):
    wd, bd, wc, bc, gamma, beta, eps = (
        params["wd"], params["bd"], params["wc"], params["bc"],
        params["gamma"], params["beta"], params["eps"],
    )
    N, Cin, H, W = x_nchw.shape
    Cout = wd.shape[1]
    assert wc.shape == (Cout, Cout, 3, 3)
    assert W % 4 == 0, "W must be a multiple of 4 so 2*W is sublane aligned"

    f32 = jnp.float32
    Cp = ((Cout + LANE - 1) // LANE) * LANE               # lane-dense channel padding
    Ws = 2 * W
    mm_dtype = jnp.bfloat16 if use_bf16_mxu else jnp.float32

    if tile_h is None:
        tile_h = _pick_tile_h(H, Ws, Cp)
    assert H % tile_h == 0
    S = H // tile_h

    x_nhwc = jnp.transpose(x_nchw, (0, 2, 3, 1)).astype(f32)          # (N, H, W, Cin)
    # One zero row above/below keeps the halo index maps affine; the halo value is
    # masked to zero in-kernel at the image boundary anyway.
    # TODO(synk): a clamped index_map would avoid this small pad of the input.
    x_hpad = jnp.pad(x_nhwc, ((0, 0), (1, 1), (0, 0), (0, 0)))

    # ---- trace-time weight / bias reorganisation -------------------------
    # ConvTranspose2d weight (Cin, Cout, 2, 2): split by output sub-row a, cols = (b, c).
    def deconv_w(a):
        w = jnp.transpose(wd[:, :, a, :], (0, 2, 1))                  # (Cin, b, Cout)
        w = jnp.pad(w, ((0, 0), (0, 0), (0, Cp - Cout)))
        return w.reshape(Cin, 2 * Cp).astype(mm_dtype)

    wd0, wd1 = deconv_w(0), deconv_w(1)
    bd_p = jnp.pad(bd, (0, Cp - Cout)).astype(f32)
    bd2 = jnp.tile(bd_p, 2).reshape(1, 2 * Cp)

    # Conv2d weight (Cout, Cout, 3, 3) -> (kh, kw, cin, cout), zero-padded channels.
    wc_hwio = jnp.pad(jnp.transpose(wc, (2, 3, 1, 0)),
                      ((0, 0), (0, 0), (0, Cp - Cout), (0, Cp - Cout)))
    w_A = wc_hwio[0].astype(mm_dtype)                                 # even rows, kh=0
    w_D = wc_hwio[2].astype(mm_dtype)                                 # odd rows,  kh=2
    w_B = jnp.concatenate([wc_hwio[1], wc_hwio[0]], axis=-1).astype(mm_dtype)  # E:kh=1 | O:kh=0
    w_C = jnp.concatenate([wc_hwio[2], wc_hwio[1]], axis=-1).astype(mm_dtype)  # E:kh=2 | O:kh=1
    bc2 = jnp.pad(bc, (0, Cp - Cout)).reshape(1, Cp).astype(f32)
    gamma_p = jnp.pad(gamma, (0, Cp - Cout)).astype(f32)
    beta_p = jnp.pad(beta, (0, Cp - Cout)).astype(f32)

    cparams = pltpu.CompilerParams(
        dimension_semantics=("parallel", "parallel"),
        vmem_limit_bytes=48 * 1024 * 1024,
    )

    # ---- stage 1: fused deconv + conv3x3 + BN partial stats --------------
    z, stats = pl.pallas_call(
        fused_deconv_conv_kernel,
        out_shape=(
            jax.ShapeDtypeStruct((N, H, 2, Ws, Cp), f32),   # conv output (even/odd row axis)
            jax.ShapeDtypeStruct((N, S, 2, Cp), f32),       # per-strip (sum, M2)
        ),
        grid=(N, S),
        in_specs=[
            pl.BlockSpec((1, 1, W, Cin), lambda n, s: (n, s * tile_h, 0, 0)),            # row above strip
            pl.BlockSpec((1, tile_h, W, Cin), lambda n, s: (n, s, 0, 0)),                # strip body
            pl.BlockSpec((1, 1, W, Cin), lambda n, s: (n, (s + 1) * tile_h + 1, 0, 0)),  # row below strip
            pl.BlockSpec((Cin, 2 * Cp), lambda n, s: (0, 0)),
            pl.BlockSpec((Cin, 2 * Cp), lambda n, s: (0, 0)),
            pl.BlockSpec((1, 2 * Cp), lambda n, s: (0, 0)),
            pl.BlockSpec((3, Cp, Cp), lambda n, s: (0, 0, 0)),
            pl.BlockSpec((3, Cp, 2 * Cp), lambda n, s: (0, 0, 0)),
            pl.BlockSpec((3, Cp, 2 * Cp), lambda n, s: (0, 0, 0)),
            pl.BlockSpec((3, Cp, Cp), lambda n, s: (0, 0, 0)),
            pl.BlockSpec((1, Cp), lambda n, s: (0, 0)),
        ],
        out_specs=(
            pl.BlockSpec((1, tile_h, 2, Ws, Cp), lambda n, s: (n, s, 0, 0, 0)),
            pl.BlockSpec((1, 1, 2, Cp), lambda n, s: (n, s, 0, 0)),
        ),
        scratch_shapes=[
            pltpu.VMEM((tile_h + 1, Ws + 2 * PADW, Cp), f32),
            pltpu.VMEM((tile_h + 1, Ws + 2 * PADW, Cp), f32),
        ],
        compiler_params=cparams,
    )(x_hpad, x_nhwc, x_hpad, wd0, wd1, bd2, w_A, w_B, w_C, w_D, bc2)

    # ---- stage 2: combine BN stats (Chan's parallel variance, tiny arrays) ----
    cnt = float(2 * tile_h * Ws)                   # elements per (n, strip) per channel
    total = float(N * S) * cnt                     # = N * 2H * 2W
    sums = stats[:, :, 0, :]                       # (N, S, Cp)
    m2s = stats[:, :, 1, :]
    strip_means = sums / cnt
    mean = jnp.sum(sums, axis=(0, 1)) / total
    m2 = jnp.sum(m2s, axis=(0, 1)) + cnt * jnp.sum((strip_means - mean) ** 2, axis=(0, 1))
    var = m2 / total                               # biased variance (BN training forward)
    scale = gamma_p * lax.rsqrt(var + eps)
    shift = beta_p - mean * scale
    scale2 = scale.reshape(1, Cp).astype(f32)
    shift2 = shift.reshape(1, Cp).astype(f32)

    # ---- stage 3: normalize + ReLU ---------------------------------------
    z_norm = pl.pallas_call(
        bn_relu_kernel,
        out_shape=jax.ShapeDtypeStruct((N, H, 2, Ws, Cp), f32),
        grid=(N, S),
        in_specs=[
            pl.BlockSpec((1, tile_h, 2, Ws, Cp), lambda n, s: (n, s, 0, 0, 0)),
            pl.BlockSpec((1, Cp), lambda n, s: (0, 0)),
            pl.BlockSpec((1, Cp), lambda n, s: (0, 0)),
        ],
        out_specs=pl.BlockSpec((1, tile_h, 2, Ws, Cp), lambda n, s: (n, s, 0, 0, 0)),
        compiler_params=cparams,
    )(z, scale2, shift2)

    out_nhwc = z_norm.reshape(N, 2 * H, Ws, Cp)[..., :Cout]   # free reshape + channel slice
    return jnp.transpose(out_nhwc, (0, 3, 1, 2))              # back to NCHW


# --------------------------------------------------------------------------
# Pure-JAX reference (correctness check only)
# --------------------------------------------------------------------------
def reference_forward(x_nchw, params):
    wd, bd, wc, bc, gamma, beta, eps = (
        params["wd"], params["bd"], params["wc"], params["bc"],
        params["gamma"], params["beta"], params["eps"],
    )
    N, Cin, H, W = x_nchw.shape
    Cout = wd.shape[1]
    x = jnp.transpose(x_nchw, (0, 2, 3, 1))
    # ConvTranspose2d k=2 s=2: out[n, 2h+a, 2w+b, d] = sum_c x[n,h,w,c] * wd[c,d,a,b] + bd[d]
    y = jnp.einsum("nhwc,cdab->nhwabd", x, wd)
    y = jnp.transpose(y, (0, 1, 3, 2, 4, 5)).reshape(N, 2 * H, 2 * W, Cout) + bd
    # Conv2d k=3 s=1 p=1
    z = lax.conv_general_dilated(
        y, jnp.transpose(wc, (2, 3, 1, 0)), window_strides=(1, 1), padding="SAME",
        dimension_numbers=("NHWC", "HWIO", "NHWC"),
    ) + bc
    mean = jnp.mean(z, axis=(0, 1, 2))
    var = jnp.mean((z - mean) ** 2, axis=(0, 1, 2))
    zn = (z - mean) * lax.rsqrt(var + eps) * gamma + beta
    return jnp.transpose(jnp.maximum(zn, 0.0), (0, 3, 1, 2))


if __name__ == "__main__":
    key = jax.random.PRNGKey(0)
    N, Cin, Cout, H, W = 2, 4, 8, 8, 8

    k_x, k_wd, k_bd, k_wc, k_bc = jax.random.split(key, 5)
    x = jax.random.normal(k_x, (N, Cin, H, W), jnp.float32)          # NCHW input

    params = dict(
        # ConvTranspose2d weight: (in_planes, out_planes, 2, 2)
        wd=jax.random.normal(k_wd, (Cin, Cout, 2, 2), jnp.float32) * 0.2,
        bd=jax.random.normal(k_bd, (Cout,), jnp.float32) * 0.1,
        # Conv2d weight: (out_planes, out_planes, 3, 3)
        wc=jax.random.normal(k_wc, (Cout, Cout, 3, 3), jnp.float32) * 0.2,
        bc=jax.random.normal(k_bc, (Cout,), jnp.float32) * 0.1,
        # BatchNorm2d default init
        gamma=jnp.ones((Cout,), jnp.float32),
        beta=jnp.zeros((Cout,), jnp.float32),
        eps=jnp.float32(1e-5),
    )

    fwd = jax.jit(deconv2d_block_forward, static_argnames=("tile_h", "use_bf16_mxu"))

    ref = jax.block_until_ready(reference_forward(x, params))

    # 1) f32 MXU path, 4 H-strips (exercises the cross-strip halo logic), tight tolerance.
    out_f32 = jax.block_until_ready(fwd(x, params, tile_h=2, use_bf16_mxu=False))
    assert out_f32.shape == (N, Cout, 2 * H, 2 * W), out_f32.shape
    err_f32 = float(jnp.max(jnp.abs(out_f32 - ref)))
    assert jnp.allclose(out_f32, ref, rtol=2e-3, atol=2e-3), err_f32

    # 2) bf16-MXU performance path (f32 accumulation / bias / BN), looser tolerance.
    out_bf16 = jax.block_until_ready(fwd(x, params, tile_h=4, use_bf16_mxu=True))
    assert out_bf16.shape == (N, Cout, 2 * H, 2 * W), out_bf16.shape
    err_bf16 = float(jnp.max(jnp.abs(out_bf16 - ref)))
    assert jnp.allclose(out_bf16, ref, rtol=5e-2, atol=5e-2), err_bf16

    print("KERNEL_OK")
</pallas_src>

<mosaic_0001>
module attributes {stable_mosaic.version = 11 : i64} {
  func.func @bn_relu_kernel(%arg0: i32, %arg1: i32, %arg2: memref<1x2x2x16x128xf32, #tpu.memory_space<vmem>>, %arg3: memref<1x128xf32, #tpu.memory_space<vmem>>, %arg4: memref<1x128xf32, #tpu.memory_space<vmem>>, %arg5: memref<1x2x2x16x128xf32, #tpu.memory_space<vmem>>) attributes {dimension_semantics = [#tpu.dimension_semantics<parallel>, #tpu.dimension_semantics<parallel>], iteration_bounds = array<i64: 2, 4>, scalar_prefetch = 0 : i64, scratch_operands = 0 : i64, tpu.core_type = #tpu.core_type<tc>, window_params = [{transform_indices = @transform_0, window_bounds = array<i64: 1, 2, 2, 16, 128>}, {pipeline_mode = #tpu.pipeline_mode<synchronous>, transform_indices = @transform_1, window_bounds = array<i64: 1, 128>}, {pipeline_mode = #tpu.pipeline_mode<synchronous>, transform_indices = @transform_2, window_bounds = array<i64: 1, 128>}, {transform_indices = @transform_3, window_bounds = array<i64: 1, 2, 2, 16, 128>}]} {
    %c0 = arith.constant 0 : index
    %c0_0 = arith.constant 0 : index
    %c0_1 = arith.constant 0 : index
    %c0_2 = arith.constant 0 : index
    %c0_3 = arith.constant 0 : index
    %0 = vector.load %arg2[%c0, %c0_0, %c0_1, %c0_2, %c0_3] : memref<1x2x2x16x128xf32, #tpu.memory_space<vmem>>, vector<1x2x2x16x128xf32>
    %c0_4 = arith.constant 0 : index
    %c0_5 = arith.constant 0 : index
    %1 = vector.load %arg3[%c0_4, %c0_5] : memref<1x128xf32, #tpu.memory_space<vmem>>, vector<1x128xf32>
    %2 = vector.shape_cast %1 : vector<1x128xf32> to vector<1x1x1x1x128xf32>
    %c0_6 = arith.constant 0 : index
    %c0_7 = arith.constant 0 : index
    %3 = vector.load %arg4[%c0_6, %c0_7] : memref<1x128xf32, #tpu.memory_space<vmem>>, vector<1x128xf32>
    %4 = vector.shape_cast %3 : vector<1x128xf32> to vector<1x1x1x1x128xf32>
    %5 = vector.broadcast %2 : vector<1x1x1x1x128xf32> to vector<1x2x2x16x128xf32>
    %6 = arith.mulf %0, %5 : vector<1x2x2x16x128xf32>
    %7 = vector.broadcast %4 : vector<1x1x1x1x128xf32> to vector<1x2x2x16x128xf32>
    %8 = arith.addf %6, %7 : vector<1x2x2x16x128xf32>
    %cst = arith.constant 0.000000e+00 : f32
    %9 = vector.broadcast %cst : f32 to vector<1x2x2x16x128xf32>
    %10 = arith.maximumf %8, %9 : vector<1x2x2x16x128xf32>
    %c0_8 = arith.constant 0 : index
    %c0_9 = arith.constant 0 : index
    %c0_10 = arith.constant 0 : index
    %c0_11 = arith.constant 0 : index
    %c0_12 = arith.constant 0 : index
    %11 = vector.load %arg5[%c0_8, %c0_9, %c0_10, %c0_11, %c0_12] : memref<1x2x2x16x128xf32, #tpu.memory_space<vmem>>, vector<1x2x2x16x128xf32>
    tpu.vector_store %arg5[%c0_8, %c0_9, %c0_10, %c0_11, %c0_12], %10 {strides = array<i32>} : memref<1x2x2x16x128xf32, #tpu.memory_space<vmem>>, vector<1x2x2x16x128xf32>,
    return
  }
  func.func @transform_0(%arg0: i32, %arg1: i32) -> (i32, i32, i32, i32, i32) {
    %c0_i32 = arith.constant 0 : i32
    %c0_i32_0 = arith.constant 0 : i32
    %c0_i32_1 = arith.constant 0 : i32
    %c0_i32_2 = arith.constant 0 : i32
    return %arg0, %arg1, %c0_i32, %c0_i32_0, %c0_i32_1 : i32, i32, i32, i32, i32
  }
  func.func @transform_1(%arg0: i32, %arg1: i32) -> (i32, i32) {
    %c0_i32 = arith.constant 0 : i32
    %c0_i32_0 = arith.constant 0 : i32
    %c0_i32_1 = arith.constant 0 : i32
    return %c0_i32, %c0_i32_0 : i32, i32
  }
  func.func @transform_2(%arg0: i32, %arg1: i32) -> (i32, i32) {
    %c0_i32 = arith.constant 0 : i32
    %c0_i32_0 = arith.constant 0 : i32
    %c0_i32_1 = arith.constant 0 : i32
    return %c0_i32, %c0_i32_0 : i32, i32
  }
  func.func @transform_3(%arg0: i32, %arg1: i32) -> (i32, i32, i32, i32, i32) {
    %c0_i32 = arith.constant 0 : i32
    %c0_i32_0 = arith.constant 0 : i32
    %c0_i32_1 = arith.constant 0 : i32
    %c0_i32_2 = arith.constant 0 : i32
    return %arg0, %arg1, %c0_i32, %c0_i32_0, %c0_i32_1 : i32, i32, i32, i32, i32
  }
}

module attributes {stable_mosaic.version = 11 : i64} {
  func.func @fused_deconv_conv_kernel(%arg0: i32, %arg1: i32, %arg2: memref<1x1x8x4xf32, #tpu.memory_space<vmem>>, %arg3: memref<1x2x8x4xf32, #tpu.memory_space<vmem>>, %arg4: memref<1x1x8x4xf32, #tpu.memory_space<vmem>>, %arg5: memref<4x256xf32, #tpu.memory_space<vmem>>, %arg6: memref<4x256xf32, #tpu.memory_space<vmem>>, %arg7: memref<1x256xf32, #tpu.memory_space<vmem>>, %arg8: memref<3x128x128xf32, #tpu.memory_space<vmem>>, %arg9: memref<3x128x256xf32, #tpu.memory_space<vmem>>, %arg10: memref<3x128x256xf32, #tpu.memory_space<vmem>>, %arg11: memref<3x128x128xf32, #tpu.memory_space<vmem>>, %arg12: memref<1x128xf32, #tpu.memory_space<vmem>>, %arg13: memref<1x2x2x16x128xf32, #tpu.memory_space<vmem>>, %arg14: memref<1x1x2x128xf32, #tpu.memory_space<vmem>>, %arg15: memref<3x32x128xf32, #tpu.memory_space<vmem>>, %arg16: memref<3x32x128xf32, #tpu.memory_space<vmem>>) attributes {dimension_semantics = [#tpu.dimension_semantics<parallel>, #tpu.dimension_semantics<parallel>], iteration_bounds = array<i64: 2, 4>, scalar_prefetch = 0 : i64, scratch_operands = 2 : i64, tpu.core_type = #tpu.core_type<tc>, window_params = [{transform_indices = @transform_0, window_bounds = array<i64: 1, 1, 8, 4>}, {transform_indices = @transform_1, window_bounds = array<i64: 1, 2, 8, 4>}, {transform_indices = @transform_2, window_bounds = array<i64: 1, 1, 8, 4>}, {pipeline_mode = #tpu.pipeline_mode<synchronous>, transform_indices = @transform_3, window_bounds = array<i64: 4, 256>}, {pipeline_mode = #tpu.pipeline_mode<synchronous>, transform_indices = @transform_4, window_bounds = array<i64: 4, 256>}, {pipeline_mode = #tpu.pipeline_mode<synchronous>, transform_indices = @transform_5, window_bounds = array<i64: 1, 256>}, {pipeline_mode = #tpu.pipeline_mode<synchronous>, transform_indices = @transform_6, window_bounds = array<i64: 3, 128, 128>}, {pipeline_mode = #tpu.pipeline_mode<synchronous>, transform_indices = @transform_7, window_bounds = array<i64: 3, 128, 256>}, {pipeline_mode = #tpu.pipeline_mode<synchronous>, transform_indices = @transform_8, window_bounds = array<i64: 3, 128, 256>}, {pipeline_mode = #tpu.pipeline_mode<synchronous>, transform_indices = @transform_9, window_bounds = array<i64: 3, 128, 128>}, {pipeline_mode = #tpu.pipeline_mode<synchronous>, transform_indices = @transform_10, window_bounds = array<i64: 1, 128>}, {transform_indices = @transform_11, window_bounds = array<i64: 1, 2, 2, 16, 128>}, {transform_indices = @transform_12, window_bounds = array<i64: 1, 1, 2, 128>}]} {
    %c0 = arith.constant 0 : index
    %c0_0 = arith.constant 0 : index
    %0 = vector.load %arg7[%c0, %c0_0] : memref<1x256xf32, #tpu.memory_space<vmem>>, vector<1x256xf32>
    %c0_1 = arith.constant 0 : index
    %c0_2 = arith.constant 0 : index
    %1 = vector.load %arg12[%c0_1, %c0_2] : memref<1x128xf32, #tpu.memory_space<vmem>>, vector<1x128xf32>
    %c0_3 = arith.constant 0 : index
    %c0_4 = arith.constant 0 : index
    %c0_5 = arith.constant 0 : index
    %c0_6 = arith.constant 0 : index
    %2 = vector.load %arg3[%c0_3, %c0_4, %c0_5, %c0_6] : memref<1x2x8x4xf32, #tpu.memory_space<vmem>>, vector<1x2x8x4xf32>
    %3 = vector.shape_cast %2 : vector<1x2x8x4xf32> to vector<2x8x4xf32>
    %4 = vector.shape_cast %3 : vector<2x8x4xf32> to vector<16x4xf32>
    %c0_7 = arith.constant 0 : index
    %c0_8 = arith.constant 0 : index
    %c0_9 = arith.constant 0 : index
    %c0_10 = arith.constant 0 : index
    %5 = vector.load %arg2[%c0_7, %c0_8, %c0_9, %c0_10] : memref<1x1x8x4xf32, #tpu.memory_space<vmem>>, vector<1x1x8x4xf32>
    %6 = vector.shape_cast %5 : vector<1x1x8x4xf32> to vector<1x8x4xf32>
    %7 = vector.shape_cast %6 : vector<1x8x4xf32> to vector<8x4xf32>
    %c0_11 = arith.constant 0 : index
    %c0_12 = arith.constant 0 : index
    %c0_13 = arith.constant 0 : index
    %c0_14 = arith.constant 0 : index
    %8 = vector.load %arg4[%c0_11, %c0_12, %c0_13, %c0_14] : memref<1x1x8x4xf32, #tpu.memory_space<vmem>>, vector<1x1x8x4xf32>
    %9 = vector.shape_cast %8 : vector<1x1x8x4xf32> to vector<1x8x4xf32>
    %10 = vector.shape_cast %9 : vector<1x8x4xf32> to vector<8x4xf32>
    %c0_15 = arith.constant 0 : index
    %c0_16 = arith.constant 0 : index
    %11 = vector.load %arg5[%c0_15, %c0_16] : memref<4x256xf32, #tpu.memory_space<vmem>>, vector<4x256xf32>
    %cst = arith.constant dense<0.000000e+00> : vector<16x256xf32>
    %12 = tpu.matmul %4, %11, %cst {dimension_numbers = #tpu.dot_dimension_numbers<[1], [0], [0], [1], [0, 0, 1, 1], [], []>} : vector<16x4xf32>, vector<4x256xf32>, vector<16x256xf32> -> vector<16x256xf32>
    %13 = vector.broadcast %0 : vector<1x256xf32> to vector<16x256xf32>
    %14 = arith.addf %12, %13 : vector<16x256xf32>
    %c0_17 = arith.constant 0 : index
    %c0_18 = arith.constant 0 : index
    %15 = vector.load %arg6[%c0_17, %c0_18] : memref<4x256xf32, #tpu.memory_space<vmem>>, vector<4x256xf32>
    %cst_19 = arith.constant dense<0.000000e+00> : vector<16x256xf32>
    %16 = tpu.matmul %4, %15, %cst_19 {dimension_numbers = #tpu.dot_dimension_numbers<[1], [0], [0], [1], [0, 0, 1, 1], [], []>} : vector<16x4xf32>, vector<4x256xf32>, vector<16x256xf32> -> vector<16x256xf32>
    %17 = vector.broadcast %0 : vector<1x256xf32> to vector<16x256xf32>
    %18 = arith.addf %16, %17 : vector<16x256xf32>
    %c0_i32 = arith.constant 0 : i32
    %19 = arith.cmpi sgt, %arg1, %c0_i32 : i32
    %20 = arith.extui %19 : i1 to i32
    %21 = arith.sitofp %20 : i32 to f32
    %c3_i32 = arith.constant 3 : i32
    %22 = arith.cmpi slt, %arg1, %c3_i32 : i32
    %23 = arith.extui %22 : i1 to i32
    %24 = arith.sitofp %23 : i32 to f32
    %c0_20 = arith.constant 0 : index
    %c0_21 = arith.constant 0 : index
    %25 = vector.load %arg6[%c0_20, %c0_21] : memref<4x256xf32, #tpu.memory_space<vmem>>, vector<4x256xf32>
    %cst_22 = arith.constant dense<0.000000e+00> : vector<8x256xf32>
    %26 = tpu.matmul %7, %25, %cst_22 {dimension_numbers = #tpu.dot_dimension_numbers<[1], [0], [0], [1], [0, 0, 1, 1], [], []>} : vector<8x4xf32>, vector<4x256xf32>, vector<8x256xf32> -> vector<8x256xf32>
    %27 = vector.broadcast %0 : vector<1x256xf32> to vector<8x256xf32>
    %28 = arith.addf %26, %27 : vector<8x256xf32>
    %29 = vector.broadcast %21 : f32 to vector<8x256xf32>
    %30 = arith.mulf %28, %29 : vector<8x256xf32>
    %c0_23 = arith.constant 0 : index
    %c0_24 = arith.constant 0 : index
    %31 = vector.load %arg5[%c0_23, %c0_24] : memref<4x256xf32, #tpu.memory_space<vmem>>, vector<4x256xf32>
    %cst_25 = arith.constant dense<0.000000e+00> : vector<8x256xf32>
    %32 = tpu.matmul %10, %31, %cst_25 {dimension_numbers = #tpu.dot_dimension_numbers<[1], [0], [0], [1], [0, 0, 1, 1], [], []>} : vector<8x4xf32>, vector<4x256xf32>, vector<8x256xf32> -> vector<8x256xf32>
    %33 = vector.broadcast %0 : vector<1x256xf32> to vector<8x256xf32>
    %34 = arith.addf %32, %33 : vector<8x256xf32>
    %35 = vector.broadcast %24 : f32 to vector<8x256xf32>
    %36 = arith.mulf %34, %35 : vector<8x256xf32>
    %cst_26 = arith.constant 0.000000e+00 : f32
    %37 = vector.broadcast %cst_26 : f32 to vector<3x32x128xf32>
    %c0_27 = arith.constant 0 : index
    %c0_28 = arith.constant 0 : index
    %c0_29 = arith.constant 0 : index
    %38 = vector.load %arg15[%c0_27, %c0_28, %c0_29] : memref<3x32x128xf32, #tpu.memory_space<vmem>>, vector<3x32x128xf32>
    tpu.vector_store %arg15[%c0_27, %c0_28, %c0_29], %37 {strides = array<i32>} : memref<3x32x128xf32, #tpu.memory_space<vmem>>, vector<3x32x128xf32>,
    %cst_30 = arith.constant 0.000000e+00 : f32
    %39 = vector.broadcast %cst_30 : f32 to vector<3x32x128xf32>
    %c0_31 = arith.constant 0 : index
    %c0_32 = arith.constant 0 : index
    %c0_33 = arith.constant 0 : index
    %40 = vector.load %arg16[%c0_31, %c0_32, %c0_33] : memref<3x32x128xf32, #tpu.memory_space<vmem>>, vector<3x32x128xf32>
    tpu.vector_store %arg16[%c0_31, %c0_32, %c0_33], %39 {strides = array<i32>} : memref<3x32x128xf32, #tpu.memory_space<vmem>>, vector<3x32x128xf32>,
    %41 = vector.shape_cast %14 : vector<16x256xf32> to vector<2x16x128xf32>
    %c0_34 = arith.constant 0 : index
    %c8 = arith.constant 8 : index
    %c0_35 = arith.constant 0 : index
    %42 = vector.load %arg15[%c0_34, %c8, %c0_35] : memref<3x32x128xf32, #tpu.memory_space<vmem>>, vector<2x16x128xf32>
    tpu.vector_store %arg15[%c0_34, %c8, %c0_35], %41 {strides = array<i32>} : memref<3x32x128xf32, #tpu.memory_space<vmem>>, vector<2x16x128xf32>,
    %43 = vector.shape_cast %36 : vector<8x256xf32> to vector<16x128xf32>
    %c2 = arith.constant 2 : index
    %c8_36 = arith.constant 8 : index
    %c0_37 = arith.constant 0 : index
    %44 = vector.load %arg15[%c2, %c8_36, %c0_37] : memref<3x32x128xf32, #tpu.memory_space<vmem>>, vector<1x16x128xf32>
    %45 = vector.shape_cast %44 : vector<1x16x128xf32> to vector<16x128xf32>
    %46 = vector.shape_cast %43 : vector<16x128xf32> to vector<1x16x128xf32>
    tpu.vector_store %arg15[%c2, %c8_36, %c0_37], %46 {strides = array<i32>} : memref<3x32x128xf32, #tpu.memory_space<vmem>>, vector<1x16x128xf32>,
    %47 = vector.shape_cast %30 : vector<8x256xf32> to vector<16x128xf32>
    %c0_38 = arith.constant 0 : index
    %c8_39 = arith.constant 8 : index
    %c0_40 = arith.constant 0 : index
    %48 = vector.load %arg16[%c0_38, %c8_39, %c0_40] : memref<3x32x128xf32, #tpu.memory_space<vmem>>, vector<1x16x128xf32>
    %49 = vector.shape_cast %48 : vector<1x16x128xf32> to vector<16x128xf32>
    %50 = vector.shape_cast %47 : vector<16x128xf32> to vector<1x16x128xf32>
    tpu.vector_store %arg16[%c0_38, %c8_39, %c0_40], %50 {strides = array<i32>} : memref<3x32x128xf32, #tpu.memory_space<vmem>>, vector<1x16x128xf32>,
    %51 = vector.shape_cast %18 : vector<16x256xf32> to vector<2x16x128xf32>
    %c1 = arith.constant 1 : index
    %c8_41 = arith.constant 8 : index
    %c0_42 = arith.constant 0 : index
    %52 = vector.load %arg16[%c1, %c8_41, %c0_42] : memref<3x32x128xf32, #tpu.memory_space<vmem>>, vector<2x16x128xf32>
    tpu.vector_store %arg16[%c1, %c8_41, %c0_42], %51 {strides = array<i32>} : memref<3x32x128xf32, #tpu.memory_space<vmem>>, vector<2x16x128xf32>,
    %cst_43 = arith.constant 0.000000e+00 : f32
    %53 = vector.broadcast %cst_43 : f32 to vector<32x128xf32>
    %cst_44 = arith.constant 0.000000e+00 : f32
    %54 = vector.broadcast %cst_44 : f32 to vector<32x128xf32>
    %c0_45 = arith.constant 0 : index
    %c7 = arith.constant 7 : index
    %c0_46 = arith.constant 0 : index
    %55 = vector.load %arg16[%c0_45, %c7, %c0_46] : memref<3x32x128xf32, #tpu.memory_space<vmem>>, vector<2x16x128xf32>
    %56 = vector.shape_cast %55 : vector<2x16x128xf32> to vector<32x128xf32>
    %c0_47 = arith.constant 0 : index
    %c0_48 = arith.constant 0 : index
    %c0_49 = arith.constant 0 : index
    %57 = vector.load %arg8[%c0_47, %c0_48, %c0_49] : memref<3x128x128xf32, #tpu.memory_space<vmem>>, vector<1x128x128xf32>
    %58 = vector.shape_cast %57 : vector<1x128x128xf32> to vector<128x128xf32>
    %cst_50 = arith.constant dense<0.000000e+00> : vector<32x128xf32>
    %59 = tpu.matmul %56, %58, %cst_50 {dimension_numbers = #tpu.dot_dimension_numbers<[1], [0], [0], [1], [0, 0, 1, 1], [], []>} : vector<32x128xf32>, vector<128x128xf32>, vector<32x128xf32> -> vector<32x128xf32>
    %60 = arith.addf %53, %59 : vector<32x128xf32>
    %c1_51 = arith.constant 1 : index
    %c7_52 = arith.constant 7 : index
    %c0_53 = arith.constant 0 : index
    %61 = vector.load %arg15[%c1_51, %c7_52, %c0_53] : memref<3x32x128xf32, #tpu.memory_space<vmem>>, vector<2x16x128xf32>
    %62 = vector.shape_cast %61 : vector<2x16x128xf32> to vector<32x128xf32>
    %c0_54 = arith.constant 0 : index
    %c0_55 = arith.constant 0 : index
    %c0_56 = arith.constant 0 : index
    %63 = vector.load %arg11[%c0_54, %c0_55, %c0_56] : memref<3x128x128xf32, #tpu.memory_space<vmem>>, vector<1x128x128xf32>
    %64 = vector.shape_cast %63 : vector<1x128x128xf32> to vector<128x128xf32>
    %cst_57 = arith.constant dense<0.000000e+00> : vector<32x128xf32>
    %65 = tpu.matmul %62, %64, %cst_57 {dimension_numbers = #tpu.dot_dimension_numbers<[1], [0], [0], [1], [0, 0, 1, 1], [], []>} : vector<32x128xf32>, vector<128x128xf32>, vector<32x128xf32> -> vector<32x128xf32>
    %66 = arith.addf %54, %65 : vector<32x128xf32>
    %c0_58 = arith.constant 0 : index
    %c7_59 = arith.constant 7 : index
    %c0_60 = arith.constant 0 : index
    %67 = vector.load %arg15[%c0_58, %c7_59, %c0_60] : memref<3x32x128xf32, #tpu.memory_space<vmem>>, vector<2x16x128xf32>
    %68 = vector.shape_cast %67 : vector<2x16x128xf32> to vector<32x128xf32>
    %c0_61 = arith.constant 0 : index
    %c0_62 = arith.constant 0 : index
    %c0_63 = arith.constant 0 : index
    %69 = vector.load %arg9[%c0_61, %c0_62, %c0_63] : memref<3x128x256xf32, #tpu.memory_space<vmem>>, vector<1x128x256xf32>
    %70 = vector.shape_cast %69 : vector<1x128x256xf32> to vector<128x256xf32>
    %cst_64 = arith.constant dense<0.000000e+00> : vector<32x256xf32>
    %71 = tpu.matmul %68, %70, %cst_64 {dimension_numbers = #tpu.dot_dimension_numbers<[1], [0], [0], [1], [0, 0, 1, 1], [], []>} : vector<32x128xf32>, vector<128x256xf32>, vector<32x256xf32> -> vector<32x256xf32>
    %72 = vector.extract_strided_slice %71 {offsets = [0, 0], sizes = [32, 128], strides = [1, 1]} : vector<32x256xf32> to vector<32x128xf32>
    %73 = arith.addf %60, %72 : vector<32x128xf32>
    %74 = vector.extract_strided_slice %71 {offsets = [0, 128], sizes = [32, 128], strides = [1, 1]} : vector<32x256xf32> to vector<32x128xf32>
    %75 = arith.addf %66, %74 : vector<32x128xf32>
    %c1_65 = arith.constant 1 : index
    %c7_66 = arith.constant 7 : index
    %c0_67 = arith.constant 0 : index
    %76 = vector.load %arg16[%c1_65, %c7_66, %c0_67] : memref<3x32x128xf32, #tpu.memory_space<vmem>>, vector<2x16x128xf32>
    %77 = vector.shape_cast %76 : vector<2x16x128xf32> to vector<32x128xf32>
    %c0_68 = arith.constant 0 : index
    %c0_69 = arith.constant 0 : index
    %c0_70 = arith.constant 0 : index
    %78 = vector.load %arg10[%c0_68, %c0_69, %c0_70] : memref<3x128x256xf32, #tpu.memory_space<vmem>>, vector<1x128x256xf32>
    %79 = vector.shape_cast %78 : vector<1x128x256xf32> to vector<128x256xf32>
    %cst_71 = arith.constant dense<0.000000e+00> : vector<32x256xf32>
    %80 = tpu.matmul %77, %79, %cst_71 {dimension_numbers = #tpu.dot_dimension_numbers<[1], [0], [0], [1], [0, 0, 1, 1], [], []>} : vector<32x128xf32>, vector<128x256xf32>, vector<32x256xf32> -> vector<32x256xf32>
    %81 = vector.extract_strided_slice %80 {offsets = [0, 0], sizes = [32, 128], strides = [1, 1]} : vector<32x256xf32> to vector<32x128xf32>
    %82 = arith.addf %73, %81 : vector<32x128xf32>
    %83 = vector.extract_strided_slice %80 {offsets = [0, 128], sizes = [32, 128], strides = [1, 1]} : vector<32x256xf32> to vector<32x128xf32>
    %84 = arith.addf %75, %83 : vector<32x128xf32>
    %c0_72 = arith.constant 0 : index
    %c8_73 = arith.constant 8 : index
    %c0_74 = arith.constant 0 : index
    %85 = vector.load %arg16[%c0_72, %c8_73, %c0_74] : memref<3x32x128xf32, #tpu.memory_space<vmem>>, vector<2x16x128xf32>
    %86 = vector.shape_cast %85 : vector<2x16x128xf32> to vector<32x128xf32>
    %c1_75 = arith.constant 1 : index
    %c0_76 = arith.constant 0 : index
    %c0_77 = arith.constant 0 : index
    %87 = vector.load %arg8[%c1_75, %c0_76, %c0_77] : memref<3x128x128xf32, #tpu.memory_space<vmem>>, vector<1x128x128xf32>
    %88 = vector.shape_cast %87 : vector<1x128x128xf32> to vector<128x128xf32>
    %cst_78 = arith.constant dense<0.000000e+00> : vector<32x128xf32>
    %89 = tpu.matmul %86, %88, %cst_78 {dimension_numbers = #tpu.dot_dimension_numbers<[1], [0], [0], [1], [0, 0, 1, 1], [], []>} : vector<32x128xf32>, vector<128x128xf32>, vector<32x128xf32> -> vector<32x128xf32>
    %90 = arith.addf %82, %89 : vector<32x128xf32>
    %c1_79 = arith.constant 1 : index
    %c8_80 = arith.constant 8 : index
    %c0_81 = arith.constant 0 : index
    %91 = vector.load %arg15[%c1_79, %c8_80, %c0_81] : memref<3x32x128xf32, #tpu.memory_space<vmem>>, vector<2x16x128xf32>
    %92 = vector.shape_cast %91 : vector<2x16x128xf32> to vector<32x128xf32>
    %c1_82 = arith.constant 1 : index
    %c0_83 = arith.constant 0 : index
    %c0_84 = arith.constant 0 : index
    %93 = vector.load %arg11[%c1_82, %c0_83, %c0_84] : memref<3x128x128xf32, #tpu.memory_space<vmem>>, vector<1x128x128xf32>
    %94 = vector.shape_cast %93 : vector<1x128x128xf32> to vector<128x128xf32>
    %cst_85 = arith.constant dense<0.000000e+00> : vector<32x128xf32>
    %95 = tpu.matmul %92, %94, %cst_85 {dimension_numbers = #tpu.dot_dimension_numbers<[1], [0], [0], [1], [0, 0, 1, 1], [], []>} : vector<32x128xf32>, vector<128x128xf32>, vector<32x128xf32> -> vector<32x128xf32>
    %96 = arith.addf %84, %95 : vector<32x128xf32>
    %c0_86 = arith.constant 0 : index
    %c8_87 = arith.constant 8 : index
    %c0_88 = arith.constant 0 : index
    %97 = vector.load %arg15[%c0_86, %c8_87, %c0_88] : memref<3x32x128xf32, #tpu.memory_space<vmem>>, vector<2x16x128xf32>
    %98 = vector.shape_cast %97 : vector<2x16x128xf32> to vector<32x128xf32>
    %c1_89 = arith.constant 1 : index
    %c0_90 = arith.constant 0 : index
    %c0_91 = arith.constant 0 : index
    %99 = vector.load %arg9[%c1_89, %c0_90, %c0_91] : memref<3x128x256xf32, #tpu.memory_space<vmem>>, vector<1x128x256xf32>
    %100 = vector.shape_cast %99 : vector<1x128x256xf32> to vector<128x256xf32>
    %cst_92 = arith.constant dense<0.000000e+00> : vector<32x256xf32>
    %101 = tpu.matmul %98, %100, %cst_92 {dimension_numbers = #tpu.dot_dimension_numbers<[1], [0], [0], [1], [0, 0, 1, 1], [], []>} : vector<32x128xf32>, vector<128x256xf32>, vector<32x256xf32> -> vector<32x256xf32>
    %102 = vector.extract_strided_slice %101 {offsets = [0, 0], sizes = [32, 128], strides = [1, 1]} : vector<32x256xf32> to vector<32x128xf32>
    %103 = arith.addf %90, %102 : vector<32x128xf32>
    %104 = vector.extract_strided_slice %101 {offsets = [0, 128], sizes = [32, 128], strides = [1, 1]} : vector<32x256xf32> to vector<32x128xf32>
    %105 = arith.addf %96, %104 : vector<32x128xf32>
    %c1_93 = arith.constant 1 : index
    %c8_94 = arith.constant 8 : index
    %c0_95 = arith.constant 0 : index
    %106 = vector.load %arg16[%c1_93, %c8_94, %c0_95] : memref<3x32x128xf32, #tpu.memory_space<vmem>>, vector<2x16x128xf32>
    %107 = vector.shape_cast %106 : vector<2x16x128xf32> to vector<32x128xf32>
    %c1_96 = arith.constant 1 : index
    %c0_97 = arith.constant 0 : index
    %c0_98 = arith.constant 0 : index
    %108 = vector.load %arg10[%c1_96, %c0_97, %c0_98] : memref<3x128x256xf32, #tpu.memory_space<vmem>>, vector<1x128x256xf32>
    %109 = vector.shape_cast %108 : vector<1x128x256xf32> to vector<128x256xf32>
    %cst_99 = arith.constant dense<0.000000e+00> : vector<32x256xf32>
    %110 = tpu.matmul %107, %109, %cst_99 {dimension_numbers = #tpu.dot_dimension_numbers<[1], [0], [0], [1], [0, 0, 1, 1], [], []>} : vector<32x128xf32>, vector<128x256xf32>, vector<32x256xf32> -> vector<32x256xf32>
    %111 = vector.extract_strided_slice %110 {offsets = [0, 0], sizes = [32, 128], strides = [1, 1]} : vector<32x256xf32> to vector<32x128xf32>
    %112 = arith.addf %103, %111 : vector<32x128xf32>
    %113 = vector.extract_strided_slice %110 {offsets = [0, 128], sizes = [32, 128], strides = [1, 1]} : vector<32x256xf32> to vector<32x128xf32>
    %114 = arith.addf %105, %113 : vector<32x128xf32>
    %c0_100 = arith.constant 0 : index
    %c9 = arith.constant 9 : index
    %c0_101 = arith.constant 0 : index
    %115 = vector.load %arg16[%c0_100, %c9, %c0_101] : memref<3x32x128xf32, #tpu.memory_space<vmem>>, vector<2x16x128xf32>
    %116 = vector.shape_cast %115 : vector<2x16x128xf32> to vector<32x128xf32>
    %c2_102 = arith.constant 2 : index
    %c0_103 = arith.constant 0 : index
    %c0_104 = arith.constant 0 : index
    %117 = vector.load %arg8[%c2_102, %c0_103, %c0_104] : memref<3x128x128xf32, #tpu.memory_space<vmem>>, vector<1x128x128xf32>
    %118 = vector.shape_cast %117 : vector<1x128x128xf32> to vector<128x128xf32>
    %cst_105 = arith.constant dense<0.000000e+00> : vector<32x128xf32>
    %119 = tpu.matmul %116, %118, %cst_105 {dimension_numbers = #tpu.dot_dimension_numbers<[1], [0], [0], [1], [0, 0, 1, 1], [], []>} : vector<32x128xf32>, vector<128x128xf32>, vector<32x128xf32> -> vector<32x128xf32>
    %120 = arith.addf %112, %119 : vector<32x128xf32>
    %c1_106 = arith.constant 1 : index
    %c9_107 = arith.constant 9 : index
    %c0_108 = arith.constant 0 : index
    %121 = vector.load %arg15[%c1_106, %c9_107, %c0_108] : memref<3x32x128xf32, #tpu.memory_space<vmem>>, vector<2x16x128xf32>
    %122 = vector.shape_cast %121 : vector<2x16x128xf32> to vector<32x128xf32>
    %c2_109 = arith.constant 2 : index
    %c0_110 = arith.constant 0 : index
    %c0_111 = arith.constant 0 : index
    %123 = vector.load %arg11[%c2_109, %c0_110, %c0_111] : memref<3x128x128xf32, #tpu.memory_space<vmem>>, vector<1x128x128xf32>
    %124 = vector.shape_cast %123 : vector<1x128x128xf32> to vector<128x128xf32>
    %cst_112 = arith.constant dense<0.000000e+00> : vector<32x128xf32>
    %125 = tpu.matmul %122, %124, %cst_112 {dimension_numbers = #tpu.dot_dimension_numbers<[1], [0], [0], [1], [0, 0, 1, 1], [], []>} : vector<32x128xf32>, vector<128x128xf32>, vector<32x128xf32> -> vector<32x128xf32>
    %126 = arith.addf %114, %125 : vector<32x128xf32>
    %c0_113 = arith.constant 0 : index
    %c9_114 = arith.constant 9 : index
    %c0_115 = arith.constant 0 : index
    %127 = vector.load %arg15[%c0_113, %c9_114, %c0_115] : memref<3x32x128xf32, #tpu.memory_space<vmem>>, vector<2x16x128xf32>
    %128 = vector.shape_cast %127 : vector<2x16x128xf32> to vector<32x128xf32>
    %c2_116 = arith.constant 2 : index
    %c0_117 = arith.constant 0 : index
    %c0_118 = arith.constant 0 : index
    %129 = vector.load %arg9[%c2_116, %c0_117, %c0_118] : memref<3x128x256xf32, #tpu.memory_space<vmem>>, vector<1x128x256xf32>
    %130 = vector.shape_cast %129 : vector<1x128x256xf32> to vector<128x256xf32>
    %cst_119 = arith.constant dense<0.000000e+00> : vector<32x256xf32>
    %131 = tpu.matmul %128, %130, %cst_119 {dimension_numbers = #tpu.dot_dimension_numbers<[1], [0], [0], [1], [0, 0, 1, 1], [], []>} : vector<32x128xf32>, vector<128x256xf32>, vector<32x256xf32> -> vector<32x256xf32>
    %132 = vector.extract_strided_slice %131 {offsets = [0, 0], sizes = [32, 128], strides = [1, 1]} : vector<32x256xf32> to vector<32x128xf32>
    %133 = arith.addf %120, %132 : vector<32x128xf32>
    %134 = vector.extract_strided_slice %131 {offsets = [0, 128], sizes = [32, 128], strides = [1, 1]} : vector<32x256xf32> to vector<32x128xf32>
    %135 = arith.addf %126, %134 : vector<32x128xf32>
    %c1_120 = arith.constant 1 : index
    %c9_121 = arith.constant 9 : index
    %c0_122 = arith.constant 0 : index
    %136 = vector.load %arg16[%c1_120, %c9_121, %c0_122] : memref<3x32x128xf32, #tpu.memory_space<vmem>>, vector<2x16x128xf32>
    %137 = vector.shape_cast %136 : vector<2x16x128xf32> to vector<32x128xf32>
    %c2_123 = arith.constant 2 : index
    %c0_124 = arith.constant 0 : index
    %c0_125 = arith.constant 0 : index
    %138 = vector.load %arg10[%c2_123, %c0_124, %c0_125] : memref<3x128x256xf32, #tpu.memory_space<vmem>>, vector<1x128x256xf32>
    %139 = vector.shape_cast %138 : vector<1x128x256xf32> to vector<128x256xf32>
    %cst_126 = arith.constant dense<0.000000e+00> : vector<32x256xf32>
    %140 = tpu.matmul %137, %139, %cst_126 {dimension_numbers = #tpu.dot_dimension_numbers<[1], [0], [0], [1], [0, 0, 1, 1], [], []>} : vector<32x128xf32>, vector<128x256xf32>, vector<32x256xf32> -> vector<32x256xf32>
    %141 = vector.extract_strided_slice %140 {offsets = [0, 0], sizes = [32, 128], strides = [1, 1]} : vector<32x256xf32> to vector<32x128xf32>
    %142 = arith.addf %133, %141 : vector<32x128xf32>
    %143 = vector.extract_strided_slice %140 {offsets = [0, 128], sizes = [32, 128], strides = [1, 1]} : vector<32x256xf32> to vector<32x128xf32>
    %144 = arith.addf %135, %143 : vector<32x128xf32>
    %145 = vector.broadcast %1 : vector<1x128xf32> to vector<32x128xf32>
    %146 = arith.addf %142, %145 : vector<32x128xf32>
    %147 = vector.broadcast %1 : vector<1x128xf32> to vector<32x128xf32>
    %148 = arith.addf %144, %147 : vector<32x128xf32>
    %149 = vector.shape_cast %146 : vector<32x128xf32> to vector<2x16x128xf32>
    %c0_127 = arith.constant 0 : index
    %c0_128 = arith.constant 0 : index
    %c0_129 = arith.constant 0 : index
    %c0_130 = arith.constant 0 : index
    %c0_131 = arith.constant 0 : index
    %150 = vector.load %arg13[%c0_127, %c0_128, %c0_129, %c0_130, %c0_131] : memref<1x2x2x16x128xf32, #tpu.memory_space<vmem>>, vector<1x2x1x16x128xf32>
    %151 = vector.shape_cast %150 : vector<1x2x1x16x128xf32> to vector<2x16x128xf32>
    %152 = vector.shape_cast %149 : vector<2x16x128xf32> to vector<1x2x1x16x128xf32>
    tpu.vector_store %arg13[%c0_127, %c0_128, %c0_129, %c0_130, %c0_131], %152 {strides = array<i32>} : memref<1x2x2x16x128xf32, #tpu.memory_space<vmem>>, vector<1x2x1x16x128xf32>,
    %153 = vector.shape_cast %148 : vector<32x128xf32> to vector<2x16x128xf32>
    %c0_132 = arith.constant 0 : index
    %c0_133 = arith.constant 0 : index
    %c1_134 = arith.constant 1 : index
    %c0_135 = arith.constant 0 : index
    %c0_136 = arith.constant 0 : index
    %154 = vector.load %arg13[%c0_132, %c0_133, %c1_134, %c0_135, %c0_136] : memref<1x2x2x16x128xf32, #tpu.memory_space<vmem>>, vector<1x2x1x16x128xf32>
    %155 = vector.shape_cast %154 : vector<1x2x1x16x128xf32> to vector<2x16x128xf32>
    %156 = vector.shape_cast %153 : vector<2x16x128xf32> to vector<1x2x1x16x128xf32>
    tpu.vector_store %arg13[%c0_132, %c0_133, %c1_134, %c0_135, %c0_136], %156 {strides = array<i32>} : memref<1x2x2x16x128xf32, #tpu.memory_space<vmem>>, vector<1x2x1x16x128xf32>,
    %cst_137 = arith.constant dense<0.000000e+00> : vector<128xf32>
    %157 = vector.multi_reduction <add>, %146, %cst_137 [0] : vector<32x128xf32> to vector<128xf32>
    %158 = vector.shape_cast %157 : vector<128xf32> to vector<1x128xf32>
    %cst_138 = arith.constant dense<0.000000e+00> : vector<128xf32>
    %159 = vector.multi_reduction <add>, %148, %cst_138 [0] : vector<32x128xf32> to vector<128xf32>
    %160 = vector.shape_cast %159 : vector<128xf32> to vector<1x128xf32>
    %161 = arith.addf %158, %160 : vector<1x128xf32>
    %cst_139 = arith.constant 6.400000e+01 : f32
    %162 = vector.broadcast %cst_139 : f32 to vector<1x128xf32>
    %163 = arith.divf %161, %162 : vector<1x128xf32>
    %164 = vector.broadcast %163 : vector<1x128xf32> to vector<32x128xf32>
    %165 = arith.subf %146, %164 : vector<32x128xf32>
    %166 = arith.mulf %165, %165 : vector<32x128xf32>
    %cst_140 = arith.constant dense<0.000000e+00> : vector<128xf32>
    %167 = vector.multi_reduction <add>, %166, %cst_140 [0] : vector<32x128xf32> to vector<128xf32>
    %168 = vector.shape_cast %167 : vector<128xf32> to vector<1x128xf32>
    %169 = vector.broadcast %163 : vector<1x128xf32> to vector<32x128xf32>
    %170 = arith.subf %148, %169 : vector<32x128xf32>
    %171 = arith.mulf %170, %170 : vector<32x128xf32>
    %cst_141 = arith.constant dense<0.000000e+00> : vector<128xf32>
    %172 = vector.multi_reduction <add>, %171, %cst_141 [0] : vector<32x128xf32> to vector<128xf32>
    %173 = vector.shape_cast %172 : vector<128xf32> to vector<1x128xf32>
    %174 = arith.addf %168, %173 : vector<1x128xf32>
    %c0_142 = arith.constant 0 : index
    %c0_143 = arith.constant 0 : index
    %c0_144 = arith.constant 0 : index
    %c0_145 = arith.constant 0 : index
    %175 = vector.load %arg14[%c0_142, %c0_143, %c0_144, %c0_145] : memref<1x1x2x128xf32, #tpu.memory_space<vmem>>, vector<1x1x1x128xf32>
    %176 = vector.shape_cast %175 : vector<1x1x1x128xf32> to vector<1x128xf32>
    %177 = vector.shape_cast %161 : vector<1x128xf32> to vector<1x1x1x128xf32>
    tpu.vector_store %arg14[%c0_142, %c0_143, %c0_144, %c0_145], %177 {strides = array<i32>} : memref<1x1x2x128xf32, #tpu.memory_space<vmem>>, vector<1x1x1x128xf32>,
    %c0_146 = arith.constant 0 : index
    %c0_147 = arith.constant 0 : index
    %c1_148 = arith.constant 1 : index
    %c0_149 = arith.constant 0 : index
    %178 = vector.load %arg14[%c0_146, %c0_147, %c1_148, %c0_149] : memref<1x1x2x128xf32, #tpu.memory_space<vmem>>, vector<1x1x1x128xf32>
    %179 = vector.shape_cast %178 : vector<1x1x1x128xf32> to vector<1x128xf32>
    %180 = vector.shape_cast %174 : vector<1x128xf32> to vector<1x1x1x128xf32>
    tpu.vector_store %arg14[%c0_146, %c0_147, %c1_148, %c0_149], %180 {strides = array<i32>} : memref<1x1x2x128xf32, #tpu.memory_space<vmem>>, vector<1x1x1x128xf32>,
    return
  }
  func.func @transform_0(%arg0: i32, %arg1: i32) -> (i32, i32, i32, i32) {
    %c2_i32 = arith.constant 2 : i32
    %0 = arith.muli %arg1, %c2_i32 : i32
    %c0_i32 = arith.constant 0 : i32
    %c0_i32_0 = arith.constant 0 : i32
    %c0_i32_1 = arith.constant 0 : i32
    return %arg0, %0, %c0_i32, %c0_i32_0 : i32, i32, i32, i32
  }
  func.func @transform_1(%arg0: i32, %arg1: i32) -> (i32, i32, i32, i32) {
    %c0_i32 = arith.constant 0 : i32
    %c0_i32_0 = arith.constant 0 : i32
    %c0_i32_1 = arith.constant 0 : i32
    return %arg0, %arg1, %c0_i32, %c0_i32_0 : i32, i32, i32, i32
  }
  func.func @transform_2(%arg0: i32, %arg1: i32) -> (i32, i32, i32, i32) {
    %c1_i32 = arith.constant 1 : i32
    %0 = arith.addi %arg1, %c1_i32 : i32
    %c2_i32 = arith.constant 2 : i32
    %1 = arith.muli %0, %c2_i32 : i32
    %c1_i32_0 = arith.constant 1 : i32
    %2 = arith.addi %1, %c1_i32_0 : i32
    %c0_i32 = arith.constant 0 : i32
    %c0_i32_1 = arith.constant 0 : i32
    %c0_i32_2 = arith.constant 0 : i32
    return %arg0, %2, %c0_i32, %c0_i32_1 : i32, i32, i32, i32
  }
  func.func @transform_3(%arg0: i32, %arg1: i32) -> (i32, i32) {
    %c0_i32 = arith.constant 0 : i32
    %c0_i32_0 = arith.constant 0 : i32
    %c0_i32_1 = arith.constant 0 : i32
    return %c0_i32, %c0_i32_0 : i32, i32
  }
  func.func @transform_4(%arg0: i32, %arg1: i32) -> (i32, i32) {
    %c0_i32 = arith.constant 0 : i32
    %c0_i32_0 = arith.constant 0 : i32
    %c0_i32_1 = arith.constant 0 : i32
    return %c0_i32, %c0_i32_0 : i32, i32
  }
  func.func @transform_5(%arg0: i32, %arg1: i32) -> (i32, i32) {
    %c0_i32 = arith.constant 0 : i32
    %c0_i32_0 = arith.constant 0 : i32
    %c0_i32_1 = arith.constant 0 : i32
    return %c0_i32, %c0_i32_0 : i32, i32
  }
  func.func @transform_6(%arg0: i32, %arg1: i32) -> (i32, i32, i32) {
    %c0_i32 = arith.constant 0 : i32
    %c0_i32_0 = arith.constant 0 : i32
    %c0_i32_1 = arith.constant 0 : i32
    %c0_i32_2 = arith.constant 0 : i32
    return %c0_i32, %c0_i32_0, %c0_i32_1 : i32, i32, i32
  }
  func.func @transform_7(%arg0: i32, %arg1: i32) -> (i32, i32, i32) {
    %c0_i32 = arith.constant 0 : i32
    %c0_i32_0 = arith.constant 0 : i32
    %c0_i32_1 = arith.constant 0 : i32
    %c0_i32_2 = arith.constant 0 : i32
    return %c0_i32, %c0_i32_0, %c0_i32_1 : i32, i32, i32
  }
  func.func @transform_8(%arg0: i32, %arg1: i32) -> (i32, i32, i32) {
    %c0_i32 = arith.constant 0 : i32
    %c0_i32_0 = arith.constant 0 : i32
    %c0_i32_1 = arith.constant 0 : i32
    %c0_i32_2 = arith.constant 0 : i32
    return %c0_i32, %c0_i32_0, %c0_i32_1 : i32, i32, i32
  }
  func.func @transform_9(%arg0: i32, %arg1: i32) -> (i32, i32, i32) {
    %c0_i32 = arith.constant 0 : i32
    %c0_i32_0 = arith.constant 0 : i32
    %c0_i32_1 = arith.constant 0 : i32
    %c0_i32_2 = arith.constant 0 : i32
    return %c0_i32, %c0_i32_0, %c0_i32_1 : i32, i32, i32
  }
  func.func @transform_10(%arg0: i32, %arg1: i32) -> (i32, i32) {
    %c0_i32 = arith.constant 0 : i32
    %c0_i32_0 = arith.constant 0 : i32
    %c0_i32_1 = arith.constant 0 : i32
    return %c0_i32, %c0_i32_0 : i32, i32
  }
  func.func @transform_11(%arg0: i32, %arg1: i32) -> (i32, i32, i32, i32, i32) {
    %c0_i32 = arith.constant 0 : i32
    %c0_i32_0 = arith.constant 0 : i32
    %c0_i32_1 = arith.constant 0 : i32
    %c0_i32_2 = arith.constant 0 : i32
    return %arg0, %arg1, %c0_i32, %c0_i32_0, %c0_i32_1 : i32, i32, i32, i32, i32
  }
  func.func @transform_12(%arg0: i32, %arg1: i32) -> (i32, i32, i32, i32) {
    %c0_i32 = arith.constant 0 : i32
    %c0_i32_0 = arith.constant 0 : i32
    %c0_i32_1 = arith.constant 0 : i32
    return %arg0, %arg1, %c0_i32, %c0_i32_0 : i32, i32, i32, i32
  }
}

</mosaic_0001>

<llo_original>
// kernel: tile.8
$region0: #{tile.8}
  #allocation0 [shape = 's32[1]{0}', space=sflag, size = 0x4, scoped, tag = 'scoped memory for tile.8']
  %s0 = inlined_call_operand.vmem [shape: f32[128], index: 0, kind: input, shape index: {}]
  %s1 = inlined_call_operand.vmem [shape: f32[2,128], index: 1, kind: output, shape index: {}]
  // Predicated region
  $region2: #{tile.8} parent=0 // pred_check
    _
  $region3: #{tile.8} parent=0 // pred_check_branch
    %3 = sbr.rel (0) target = $region5
  $region4: #{tile.8} parent=0 // pred_region
    _
  $region5: #{tile.8} parent=0 // pred_fallthru
    _
  %v4 = vld [vmem:[%s0] ss:$0 sm:$0xff]
  %5 = vst [vmem:[%s1] sm:$0x3] %v4

// kernel: deconv2d_block_forward.3
$region0: #{deconv2d_block_forward.3}
  #allocation0 [shape = 'u32[]', space=smem, size = 0x4, offset = 0x4, fixed_abs, tag = 'smem constant byte address 0x4 - core index']
  #allocation1 [shape = 'u32[144,128]{1,0:T(1,128)}', space=vmem, size = 0x12000, scoped, tag = 'internal scratch']
  %s0 = inlined_call_operand.vmem [shape: f32[2,8,2,16,128], index: 0, kind: input, shape index: {}]
  %s1 = inlined_call_operand.vmem [shape: f32[1,128], index: 1, kind: input, shape index: {}]
  %s2 = inlined_call_operand.vmem [shape: f32[1,128], index: 2, kind: input, shape index: {}]
  %s3 = inlined_call_operand.vmem [shape: f32[2,8,2,16,128], index: 3, kind: output, shape index: {}]
  %s4 = sld [smem:[#allocation0]]
  $region45: #{deconv2d_block_forward.3} parent=0
    _
  %s6 = ssub.s32 1, %s4
  %s7 = scalar_select 0, %s6, %s4
  loop: start=0, step=1, limit=10
  $region2: #{deconv2d_block_forward.3} parent=0 // loop_pre_header
    _
  $region3: #{deconv2d_block_forward.3} parent=0 // loop_header
    %s9 = sphi 0, %s13
    %p10 = scmp.ge.s32.totalorder %s9, 10
    %s16 = sphi 0, %s28
    %s17 = sphi 0, %s24
    %s18 = sphi 0, %s16
    %s19 = sphi 0, %s17
    %s20 = sphi 0, %s18
    %s21 = sphi 0, %s19
    %s33 = sphi 0, %s35
    %s36 = sphi 0, %s33
    %s37 = sphi 0, %s36
    %s53 = sphi 0, %s37
    %s57 = sphi 0, %s57
    %s59 = sphi 0, %s57
    %s60 = sphi 0, %s59
    %s74 = sphi 0, %s60
    %s78 = sphi 0, %s78
    %s80 = sphi 0, %s78
    %s81 = sphi 0, %s80
    %s95 = sphi 0, %s81
    %s103 = sphi 0, %s105
    %s106 = sphi 0, %s103
    %s107 = sphi 0, %s106
    %s123 = sphi 0, %s107
  $region4: #{deconv2d_block_forward.3} parent=0 // loop_header_branch
    %12 = sbr.rel (%p10) target = $region8
  $region5: #{deconv2d_block_forward.3} parent=0 // loop_body
    %s14 = ssub.s32 %s9, 1
    %s15 = ssub.s32 %s9, 2
    %s22 = sadd.s32 1, %s17
    %p23 = scmp.ge.s32.totalorder %s22, 4
    %s24 = scalar_select %p23, 0, %s22
    %s25 = sadd.s32 1, %s16
    %s26 = scalar_select %p23, %s25, %s16
    %p27 = scmp.ge.s32.totalorder %s26, 2
    %s28 = scalar_select %p27, 0, %s26
    %s29 = ssub.s32 %s16, %s28
    %s30 = ssub.s32 %s17, %s24
    %s31 = sor.u32 %s29, %s30
    %p32 = scmp.eq.s32.totalorder %s31, 0
    %s34 = sadd.s32 %s33, 1
    %s35 = scalar_select %p32, %s33, %s34
    %p38 = pneg %p32
    %p39 = scmp.eq.s32.totalorder %s9, 7
    %p40 = por %p38, %p39
    %p41 = scmp.ne.s32.totalorder %s33, %s36
    %p42 = scmp.eq.s32.totalorder %s9, 0
    %p43 = por %p41, %p42
    %p44 = scmp.ne.s32.totalorder %s33, %s36
    %p45 = scmp.eq.s32.totalorder %s14, 7
    %p46 = por %p44, %p45
    %p47 = scmp.ne.s32.totalorder %s36, %s37
    %p48 = scmp.eq.s32.totalorder %s14, 0
    %p49 = por %p47, %p48
    %p50 = scmp.ne.s32.totalorder %s36, %s37
    %p51 = scmp.eq.s32.totalorder %s15, 7
    %p52 = por %p50, %p51
    %p54 = scmp.ne.s32.totalorder %s37, %s53
    %p55 = scmp.eq.s32.totalorder %s15, 0
    %p56 = por %p54, %p55
    %s58 = sadd.s32 %s57, 1
    %p61 = scmp.eq.s32.totalorder %s9, 7
    %p62 = scmp.ne.s32.totalorder %s57, %s59
    %p63 = scmp.eq.s32.totalorder %s9, 0
    %p64 = por %p62, %p63
    %p65 = scmp.ne.s32.totalorder %s57, %s59
    %p66 = scmp.eq.s32.totalorder %s14, 7
    %p67 = por %p65, %p66
    %p68 = scmp.ne.s32.totalorder %s59, %s60
    %p69 = scmp.eq.s32.totalorder %s14, 0
    %p70 = por %p68, %p69
    %p71 = scmp.ne.s32.totalorder %s59, %s60
    %p72 = scmp.eq.s32.totalorder %s15, 7
    %p73 = por %p71, %p72
    %p75 = scmp.ne.s32.totalorder %s60, %s74
    %p76 = scmp.eq.s32.totalorder %s15, 0
    %p77 = por %p75, %p76
    %s79 = sadd.s32 %s78, 1
    %p82 = scmp.eq.s32.totalorder %s9, 7
    %p83 = scmp.ne.s32.totalorder %s78, %s80
    %p84 = scmp.eq.s32.totalorder %s9, 0
    %p85 = por %p83, %p84
    %p86 = scmp.ne.s32.totalorder %s78, %s80
    %p87 = scmp.eq.s32.totalorder %s14, 7
    %p88 = por %p86, %p87
    %p89 = scmp.ne.s32.totalorder %s80, %s81
    %p90 = scmp.eq.s32.totalorder %s14, 0
    %p91 = por %p89, %p90
    %p92 = scmp.ne.s32.totalorder %s80, %s81
    %p93 = scmp.eq.s32.totalorder %s15, 7
    %p94 = por %p92, %p93
    %p96 = scmp.ne.s32.totalorder %s81, %s95
    %p97 = scmp.eq.s32.totalorder %s15, 0
    %p98 = por %p96, %p97
    %s99 = ssub.s32 %s16, %s28
    %s100 = ssub.s32 %s17, %s24
    %s101 = sor.u32 %s99, %s100
    %p102 = scmp.eq.s32.totalorder %s101, 0
    %s104 = sadd.s32 %s103, 1
    %s105 = scalar_select %p102, %s103, %s104
    %p108 = pneg %p102
    %p109 = scmp.eq.s32.totalorder %s9, 7
    %p110 = por %p108, %p109
    %p111 = scmp.ne.s32.totalorder %s103, %s106
    %p112 = scmp.eq.s32.totalorder %s9, 0
    %p113 = por %p111, %p112
    %p114 = scmp.ne.s32.totalorder %s103, %s106
    %p115 = scmp.eq.s32.totalorder %s14, 7
    %p116 = por %p114, %p115
    %p117 = scmp.ne.s32.totalorder %s106, %s107
    %p118 = scmp.eq.s32.totalorder %s14, 0
    %p119 = por %p117, %p118
    %p120 = scmp.ne.s32.totalorder %s106, %s107
    %p121 = scmp.eq.s32.totalorder %s15, 7
    %p122 = por %p120, %p121
    %p124 = scmp.ne.s32.totalorder %s107, %s123
    %p125 = scmp.eq.s32.totalorder %s15, 0
    %p126 = por %p124, %p125
    %p127 = scmp.le.s32.totalorder 1, %s9
    %p128 = scmp.lt.s32.totalorder %s9, 9
    %p129 = pnand %p127, %p128
    %p130 = pneg %p129
    // Predicated region
    $region9: #{deconv2d_block_forward.3} parent=5 // pred_check
      _
    $region10: #{deconv2d_block_forward.3} parent=5 // pred_check_branch
      %132 = sbr.rel (%p129) target = $region12
    $region11: #{deconv2d_block_forward.3} parent=5 // pred_region
      %s133 = ssub.s32 %s9, 1
      // Predicated region
      $region13: #{deconv2d_block_forward.3} parent=11 // pred_check
        %p134 = pneg %p70
      $region14: #{deconv2d_block_forward.3} parent=11 // pred_check_branch
        %136 = sbr.rel (%p134) target = $region16
      $region15: #{deconv2d_block_forward.3} parent=11 // pred_region
        _
      $region16: #{deconv2d_block_forward.3} parent=11 // pred_fallthru
        _
      // Predicated region
      $region17: #{deconv2d_block_forward.3} parent=11 // pred_check
        %p137 = pneg %p91
      $region18: #{deconv2d_block_forward.3} parent=11 // pred_check_branch
        %139 = sbr.rel (%p137) target = $region20
      $region19: #{deconv2d_block_forward.3} parent=11 // pred_region
        _
      $region20: #{deconv2d_block_forward.3} parent=11 // pred_fallthru
        _
    $region12: #{deconv2d_block_forward.3} parent=5 // pred_fallthru
      _
    %p140 = scmp.lt.s32.totalorder %s9, 8
    // Predicated region
    $region21: #{deconv2d_block_forward.3} parent=5 // pred_check
      %p141 = pneg %p140
    $region22: #{deconv2d_block_forward.3} parent=5 // pred_check_branch
      %143 = sbr.rel (%p141) target = $region24
    $region23: #{deconv2d_block_forward.3} parent=5 // pred_region
      // Predicated region
      $region25: #{deconv2d_block_forward.3} parent=23 // pred_check
        %p144 = pneg %p43
      $region26: #{deconv2d_block_forward.3} parent=23 // pred_check_branch
        %146 = sbr.rel (%p144) target = $region28
      $region27: #{deconv2d_block_forward.3} parent=23 // pred_region
        %s147 = smul.u32 2, %s17
        %p148 = scmp.lt.s32.totalorder %s16, 1
        %s149 = scalar_select %p148, %s16, 1
        %p150 = scmp.lt.s32.totalorder %s147, 7
        %s151 = scalar_select %p150, %s147, 7
        %s152 = smul.addr %s151, 4
        %s153 = smul.addr %s149, 32
        %s154 = sadd.s32 %s152, %s153
        %s155 = smul.addr %s154, 8
        %s156 = scalar_lea.vmem %s0, %s155
        %s157 = smul.u32 2, %s17
      $region28: #{deconv2d_block_forward.3} parent=23 // pred_fallthru
        _
    $region24: #{deconv2d_block_forward.3} parent=5 // pred_fallthru
      _
    %p158 = scmp.le.s32.totalorder 1, %s9
    %p159 = scmp.lt.s32.totalorder %s9, 9
    %p160 = pnand %p158, %p159
    %p161 = pneg %p160
    // Predicated region
    $region29: #{deconv2d_block_forward.3} parent=5 // pred_check
      _
    $region30: #{deconv2d_block_forward.3} parent=5 // pred_check_branch
      %163 = sbr.rel (%p160) target = $region32
    $region31: #{deconv2d_block_forward.3} parent=5 // pred_region
      %s164 = ssub.s32 %s9, 1
      %s165 = smul.u32 2, %s19
      %p166 = scmp.lt.s32.totalorder %s18, 1
      %s167 = scalar_select %p166, %s18, 1
      %p168 = scmp.lt.s32.totalorder %s165, 7
      %s169 = scalar_select %p168, %s165, 7
      %s170 = smul.addr %s169, 4
      %s171 = smul.addr %s167, 32
      %s172 = sadd.s32 %s170, %s171
      %s173 = smul.addr %s172, 8
      %s174 = scalar_lea.vmem %s0, %s173
      %p175 = pneg %p49
      %p176 = pneg %p46
      %p177 = pneg %p70
      %p178 = pneg %p67
      %p179 = pneg %p91
      %p180 = pneg %p88
      %p181 = pneg %p119
      %p182 = pneg %p116
      %s183 = smul.u32 2, %s19
      %p184 = scmp.lt.s32.totalorder %s18, 1
      %s185 = scalar_select %p184, %s18, 1
      %p186 = scmp.lt.s32.totalorder %s183, 7
      %s187 = scalar_select %p186, %s183, 7
      %s188 = smul.addr %s187, 4
      %s189 = smul.addr %s185, 32
      %s190 = sadd.s32 %s188, %s189
      %s191 = smul.addr %s190, 8
      %s192 = scalar_lea.vmem %s3, %s191
      %s193 = smul.u32 2, %s19
      %p194 = scmp.lt.s32.totalorder %s18, 1
      %s195 = scalar_select %p194, %s18, 1
      %p196 = scmp.lt.s32.totalorder %s193, 7
      %s197 = scalar_select %p196, %s193, 7
      %s198 = smul.addr %s197, 4
      %s199 = smul.addr %s195, 32
      %s200 = sadd.s32 %s198, %s199
      %s201 = smul.addr %s200, 8
      %s202 = scalar_lea.vmem %s0, %s201
      %s203 = smul.u32 2, %s19
      %s204 = smul.u32 2, %s19
      %p205 = scmp.lt.s32.totalorder %s18, 1
      %s206 = scalar_select %p205, %s18, 1
      %p207 = scmp.lt.s32.totalorder %s204, 7
      %s208 = scalar_select %p207, %s204, 7
      %s209 = smul.addr %s208, 4
      %s210 = smul.addr %s206, 32
      %s211 = sadd.s32 %s209, %s210
      %s212 = smul.addr %s211, 8
      %s213 = scalar_lea.vmem %s3, %s212
      %s214 = smul.u32 2, %s19
      %v215 = vld [vmem:[%s202] sm:$0xff]
      %v216 = vld [vmem:[%s202 + $0x8] sm:$0xff]
      %v217 = vld [vmem:[%s202 + $0x10] sm:$0xff]
      %v218 = vld [vmem:[%s202 + $0x18] sm:$0xff]
      %v219 = vld [vmem:[%s202 + $0x20] sm:$0xff]
      %v220 = vld [vmem:[%s202 + $0x28] sm:$0xff]
      %v221 = vld [vmem:[%s202 + $0x30] sm:$0xff]
      %v222 = vld [vmem:[%s202 + $0x38] sm:$0xff]
      %v223 = vld [vmem:[%s1] sm:$0x1]
      %v224 = vld [vmem:[%s2] sm:$0x1]
      %v226 = vlaneseq
      %v227 = vshrl.u32 %v226, 7
      %v228 = vsub.s32 0, %v227
      %v229 = vrot.slane %v223, %v228
      %v231 = vmul.f32 %v215, %v229
      %v232 = vmul.f32 %v216, %v229
      %v233 = vmul.f32 %v217, %v229
      %v234 = vmul.f32 %v218, %v229
      %v235 = vmul.f32 %v219, %v229
      %v236 = vmul.f32 %v220, %v229
      %v237 = vmul.f32 %v221, %v229
      %v238 = vmul.f32 %v222, %v229
      %v240 = vlaneseq
      %v241 = vshrl.u32 %v240, 7
      %v242 = vsub.s32 0, %v241
      %v243 = vrot.slane %v224, %v242
      %v245 = vadd.f32 %v231, %v243
      %v246 = vadd.f32 %v232, %v243
      %v247 = vadd.f32 %v233, %v243
      %v248 = vadd.f32 %v234, %v243
      %v249 = vadd.f32 %v235, %v243
      %v250 = vadd.f32 %v236, %v243
      %v251 = vadd.f32 %v237, %v243
      %v252 = vadd.f32 %v238, %v243
      %v253 = vmax.f32 %v245, 0.0
      %v254 = vmax.f32 %v246, 0.0
      %v255 = vmax.f32 %v247, 0.0
      %v256 = vmax.f32 %v248, 0.0
      %v257 = vmax.f32 %v249, 0.0
      %v258 = vmax.f32 %v250, 0.0
      %v259 = vmax.f32 %v251, 0.0
      %v260 = vmax.f32 %v252, 0.0
      %261 = vst [vmem:[%s213] sm:$0xff] %v253
      %262 = vst [vmem:[%s213 + $0x8] sm:$0xff] %v254
      %263 = vst [vmem:[%s213 + $0x10] sm:$0xff] %v255
      %264 = vst [vmem:[%s213 + $0x18] sm:$0xff] %v256
      %265 = vst [vmem:[%s213 + $0x20] sm:$0xff] %v257
      %266 = vst [vmem:[%s213 + $0x28] sm:$0xff] %v258
      %267 = vst [vmem:[%s213 + $0x30] sm:$0xff] %v259
      %268 = vst [vmem:[%s213 + $0x38] sm:$0xff] %v260
      %s269 = smul.u32 2, %s19
      %p270 = scmp.lt.s32.totalorder %s18, 1
      %s271 = scalar_select %p270, %s18, 1
      %p272 = scmp.lt.s32.totalorder %s269, 7
      %s273 = scalar_select %p272, %s269, 7
      %s274 = smul.addr %s273, 4
      %s275 = smul.addr %s271, 32
      %s276 = sadd.s32 %s274, %s275
      %s277 = smul.addr %s276, 8
      %s278 = scalar_lea.vmem %s3, %s277
      // Predicated region
      $region33: #{deconv2d_block_forward.3} parent=31 // pred_check
        %p279 = pneg %p116
      $region34: #{deconv2d_block_forward.3} parent=31 // pred_check_branch
        %281 = sbr.rel (%p279) target = $region36
      $region35: #{deconv2d_block_forward.3} parent=31 // pred_region
        %s282 = smul.u32 2, %s19
      $region36: #{deconv2d_block_forward.3} parent=31 // pred_fallthru
        _
    $region32: #{deconv2d_block_forward.3} parent=5 // pred_fallthru
      _
    %p283 = scmp.le.s32.totalorder 2, %s9
    // Predicated region
    $region37: #{deconv2d_block_forward.3} parent=5 // pred_check
      %p284 = pneg %p283
    $region38: #{deconv2d_block_forward.3} parent=5 // pred_check_branch
      %286 = sbr.rel (%p284) target = $region40
    $region39: #{deconv2d_block_forward.3} parent=5 // pred_region
      %s287 = ssub.s32 %s9, 2
      // Predicated region
      $region41: #{deconv2d_block_forward.3} parent=39 // pred_check
        %p288 = pneg %p122
      $region42: #{deconv2d_block_forward.3} parent=39 // pred_check_branch
        %290 = sbr.rel (%p288) target = $region44
      $region43: #{deconv2d_block_forward.3} parent=39 // pred_region
        %s291 = smul.u32 2, %s21
        %p292 = scmp.lt.s32.totalorder %s20, 1
        %s293 = scalar_select %p292, %s20, 1
        %p294 = scmp.lt.s32.totalorder %s291, 7
        %s295 = scalar_select %p294, %s291, 7
        %s296 = smul.addr %s295, 4
        %s297 = smul.addr %s293, 32
        %s298 = sadd.s32 %s296, %s297
        %s299 = smul.addr %s298, 8
        %s300 = scalar_lea.vmem %s3, %s299
      $region44: #{deconv2d_block_forward.3} parent=39 // pred_fallthru
        _
    $region40: #{deconv2d_block_forward.3} parent=5 // pred_fallthru
      _
  $region6: #{deconv2d_block_forward.3} parent=0 // loop_footer
    %s13 = sadd.s32 1, %s9
  $region7: #{deconv2d_block_forward.3} parent=0 // loop_footer_branch
    %8 = sbr.rel target = $region3
  $region8: #{deconv2d_block_forward.3} parent=0 // loop_exit
    _

// kernel: deconv2d_block_forward.2
$region0: #{deconv2d_block_forward.2}
  #allocation0 [shape = 'u32[]', space=smem, size = 0x4, offset = 0x4, fixed_abs, tag = 'smem constant byte address 0x4 - core index']
  #allocation1 [shape = 'u32[144,128]{1,0:T(1,128)}', space=vmem, size = 0x12000, scoped, tag = 'internal scratch']
  #allocation2 [shape = 'f32[3,32,128]{2,1,0:T(8,128)}', space=vmem, size = 0xc000, scoped, tag = 'scratch operand']
  #allocation3 [shape = 'f32[3,32,128]{2,1,0:T(8,128)}', space=vmem, size = 0xc000, scoped, tag = 'scratch operand']
  %s0 = inlined_call_operand.vmem [shape: f32[2,10,8,4], index: 0, kind: input, shape index: {}, may-alias: {0,2}]
  %s1 = inlined_call_operand.vmem [shape: f32[2,8,8,4], index: 1, kind: input, shape index: {}]
  %s2 = inlined_call_operand.vmem [shape: f32[2,10,8,4], index: 2, kind: input, shape index: {}, may-alias: {0,2}]
  %s3 = inlined_call_operand.vmem [shape: f32[4,256], index: 3, kind: input, shape index: {}]
  %s4 = inlined_call_operand.vmem [shape: f32[4,256], index: 4, kind: input, shape index: {}]
  %s5 = inlined_call_operand.vmem [shape: f32[1,256], index: 5, kind: input, shape index: {}]
  %s6 = inlined_call_operand.vmem [shape: f32[3,128,128], index: 6, kind: input, shape index: {}]
  %s7 = inlined_call_operand.vmem [shape: f32[3,128,256], index: 7, kind: input, shape index: {}]
  %s8 = inlined_call_operand.vmem [shape: f32[3,128,256], index: 8, kind: input, shape index: {}]
  %s9 = inlined_call_operand.vmem [shape: f32[3,128,128], index: 9, kind: input, shape index: {}]
  %s10 = inlined_call_operand.vmem [shape: f32[1,128], index: 10, kind: input, shape index: {}]
  %s11 = inlined_call_operand.vmem [shape: f32[2,8,2,16,128], index: 11, kind: output, shape index: {0}]
  %s12 = inlined_call_operand.vmem [shape: f32[2,4,2,128], index: 12, kind: output, shape index: {1}]
  %13 = xla_tuple %s11, %s12
  %s14 = sld [smem:[#allocation0]]
  $region85: #{deconv2d_block_forward.2} parent=0
    _
  %s16 = ssub.s32 1, %s14
  %s17 = scalar_select 0, %s16, %s14
  loop: start=0, step=1, limit=10
  $region2: #{deconv2d_block_forward.2} parent=0 // loop_pre_header
    _
  $region3: #{deconv2d_block_forward.2} parent=0 // loop_header
    %s19 = sphi 0, %s23
    %p20 = scmp.ge.s32.totalorder %s19, 10
    %s26 = sphi 0, %s38
    %s27 = sphi 0, %s34
    %s28 = sphi 0, %s26
    %s29 = sphi 0, %s27
    %s30 = sphi 0, %s28
    %s31 = sphi 0, %s29
    %s45 = sphi 0, %s47
    %s48 = sphi 0, %s45
    %s49 = sphi 0, %s48
    %s65 = sphi 0, %s49
    %s73 = sphi 0, %s75
    %s76 = sphi 0, %s73
    %s77 = sphi 0, %s76
    %s93 = sphi 0, %s77
    %s107 = sphi 0, %s109
    %s110 = sphi 0, %s107
    %s111 = sphi 0, %s110
    %s127 = sphi 0, %s111
    %s131 = sphi 0, %s131
    %s133 = sphi 0, %s131
    %s134 = sphi 0, %s133
    %s148 = sphi 0, %s134
    %s152 = sphi 0, %s152
    %s154 = sphi 0, %s152
    %s155 = sphi 0, %s154
    %s169 = sphi 0, %s155
    %s173 = sphi 0, %s173
    %s175 = sphi 0, %s173
    %s176 = sphi 0, %s175
    %s190 = sphi 0, %s176
    %s194 = sphi 0, %s194
    %s196 = sphi 0, %s194
    %s197 = sphi 0, %s196
    %s211 = sphi 0, %s197
    %s215 = sphi 0, %s215
    %s217 = sphi 0, %s215
    %s218 = sphi 0, %s217
    %s232 = sphi 0, %s218
    %s236 = sphi 0, %s236
    %s238 = sphi 0, %s236
    %s239 = sphi 0, %s238
    %s253 = sphi 0, %s239
    %s257 = sphi 0, %s257
    %s259 = sphi 0, %s257
    %s260 = sphi 0, %s259
    %s274 = sphi 0, %s260
    %s278 = sphi 0, %s278
    %s280 = sphi 0, %s278
    %s281 = sphi 0, %s280
    %s295 = sphi 0, %s281
    %s303 = sphi 0, %s305
    %s306 = sphi 0, %s303
    %s307 = sphi 0, %s306
    %s323 = sphi 0, %s307
    %s331 = sphi 0, %s333
    %s334 = sphi 0, %s331
    %s335 = sphi 0, %s334
    %s351 = sphi 0, %s335
  $region4: #{deconv2d_block_forward.2} parent=0 // loop_header_branch
    %22 = sbr.rel (%p20) target = $region8
  $region5: #{deconv2d_block_forward.2} parent=0 // loop_body
    %s24 = ssub.s32 %s19, 1
    %s25 = ssub.s32 %s19, 2
    %s32 = sadd.s32 1, %s27
    %p33 = scmp.ge.s32.totalorder %s32, 4
    %s34 = scalar_select %p33, 0, %s32
    %s35 = sadd.s32 1, %s26
    %s36 = scalar_select %p33, %s35, %s26
    %p37 = scmp.ge.s32.totalorder %s36, 2
    %s38 = scalar_select %p37, 0, %s36
    %s39 = smul.u32 %s27, 2
    %s40 = smul.u32 %s34, 2
    %s41 = ssub.s32 %s26, %s38
    %s42 = ssub.s32 %s39, %s40
    %s43 = sor.u32 %s41, %s42
    %p44 = scmp.eq.s32.totalorder %s43, 0
    %s46 = sadd.s32 %s45, 1
    %s47 = scalar_select %p44, %s45, %s46
    %p50 = pneg %p44
    %p51 = scmp.eq.s32.totalorder %s19, 7
    %p52 = por %p50, %p51
    %p53 = scmp.ne.s32.totalorder %s45, %s48
    %p54 = scmp.eq.s32.totalorder %s19, 0
    %p55 = por %p53, %p54
    %p56 = scmp.ne.s32.totalorder %s45, %s48
    %p57 = scmp.eq.s32.totalorder %s24, 7
    %p58 = por %p56, %p57
    %p59 = scmp.ne.s32.totalorder %s48, %s49
    %p60 = scmp.eq.s32.totalorder %s24, 0
    %p61 = por %p59, %p60
    %p62 = scmp.ne.s32.totalorder %s48, %s49
    %p63 = scmp.eq.s32.totalorder %s25, 7
    %p64 = por %p62, %p63
    %p66 = scmp.ne.s32.totalorder %s49, %s65
    %p67 = scmp.eq.s32.totalorder %s25, 0
    %p68 = por %p66, %p67
    %s69 = ssub.s32 %s26, %s38
    %s70 = ssub.s32 %s27, %s34
    %s71 = sor.u32 %s69, %s70
    %p72 = scmp.eq.s32.totalorder %s71, 0
    %s74 = sadd.s32 %s73, 1
    %s75 = scalar_select %p72, %s73, %s74
    %p78 = pneg %p72
    %p79 = scmp.eq.s32.totalorder %s19, 7
    %p80 = por %p78, %p79
    %p81 = scmp.ne.s32.totalorder %s73, %s76
    %p82 = scmp.eq.s32.totalorder %s19, 0
    %p83 = por %p81, %p82
    %p84 = scmp.ne.s32.totalorder %s73, %s76
    %p85 = scmp.eq.s32.totalorder %s24, 7
    %p86 = por %p84, %p85
    %p87 = scmp.ne.s32.totalorder %s76, %s77
    %p88 = scmp.eq.s32.totalorder %s24, 0
    %p89 = por %p87, %p88
    %p90 = scmp.ne.s32.totalorder %s76, %s77
    %p91 = scmp.eq.s32.totalorder %s25, 7
    %p92 = por %p90, %p91
    %p94 = scmp.ne.s32.totalorder %s77, %s93
    %p95 = scmp.eq.s32.totalorder %s25, 0
    %p96 = por %p94, %p95
    %s97 = sadd.s32 %s27, 1
    %s98 = smul.u32 %s97, 2
    %s99 = sadd.s32 %s98, 1
    %s100 = sadd.s32 %s34, 1
    %s101 = smul.u32 %s100, 2
    %s102 = sadd.s32 %s101, 1
    %s103 = ssub.s32 %s26, %s38
    %s104 = ssub.s32 %s99, %s102
    %s105 = sor.u32 %s103, %s104
    %p106 = scmp.eq.s32.totalorder %s105, 0
    %s108 = sadd.s32 %s107, 1
    %s109 = scalar_select %p106, %s107, %s108
    %p112 = pneg %p106
    %p113 = scmp.eq.s32.totalorder %s19, 7
    %p114 = por %p112, %p113
    %p115 = scmp.ne.s32.totalorder %s107, %s110
    %p116 = scmp.eq.s32.totalorder %s19, 0
    %p117 = por %p115, %p116
    %p118 = scmp.ne.s32.totalorder %s107, %s110
    %p119 = scmp.eq.s32.totalorder %s24, 7
    %p120 = por %p118, %p119
    %p121 = scmp.ne.s32.totalorder %s110, %s111
    %p122 = scmp.eq.s32.totalorder %s24, 0
    %p123 = por %p121, %p122
    %p124 = scmp.ne.s32.totalorder %s110, %s111
    %p125 = scmp.eq.s32.totalorder %s25, 7
    %p126 = por %p124, %p125
    %p128 = scmp.ne.s32.totalorder %s111, %s127
    %p129 = scmp.eq.s32.totalorder %s25, 0
    %p130 = por %p128, %p129
    %s132 = sadd.s32 %s131, 1
    %p135 = scmp.eq.s32.totalorder %s19, 7
    %p136 = scmp.ne.s32.totalorder %s131, %s133
    %p137 = scmp.eq.s32.totalorder %s19, 0
    %p138 = por %p136, %p137
    %p139 = scmp.ne.s32.totalorder %s131, %s133
    %p140 = scmp.eq.s32.totalorder %s24, 7
    %p141 = por %p139, %p140
    %p142 = scmp.ne.s32.totalorder %s133, %s134
    %p143 = scmp.eq.s32.totalorder %s24, 0
    %p144 = por %p142, %p143
    %p145 = scmp.ne.s32.totalorder %s133, %s134
    %p146 = scmp.eq.s32.totalorder %s25, 7
    %p147 = por %p145, %p146
    %p149 = scmp.ne.s32.totalorder %s134, %s148
    %p150 = scmp.eq.s32.totalorder %s25, 0
    %p151 = por %p149, %p150
    %s153 = sadd.s32 %s152, 1
    %p156 = scmp.eq.s32.totalorder %s19, 7
    %p157 = scmp.ne.s32.totalorder %s152, %s154
    %p158 = scmp.eq.s32.totalorder %s19, 0
    %p159 = por %p157, %p158
    %p160 = scmp.ne.s32.totalorder %s152, %s154
    %p161 = scmp.eq.s32.totalorder %s24, 7
    %p162 = por %p160, %p161
    %p163 = scmp.ne.s32.totalorder %s154, %s155
    %p164 = scmp.eq.s32.totalorder %s24, 0
    %p165 = por %p163, %p164
    %p166 = scmp.ne.s32.totalorder %s154, %s155
    %p167 = scmp.eq.s32.totalorder %s25, 7
    %p168 = por %p166, %p167
    %p170 = scmp.ne.s32.totalorder %s155, %s169
    %p171 = scmp.eq.s32.totalorder %s25, 0
    %p172 = por %p170, %p171
    %s174 = sadd.s32 %s173, 1
    %p177 = scmp.eq.s32.totalorder %s19, 7
    %p178 = scmp.ne.s32.totalorder %s173, %s175
    %p179 = scmp.eq.s32.totalorder %s19, 0
    %p180 = por %p178, %p179
    %p181 = scmp.ne.s32.totalorder %s173, %s175
    %p182 = scmp.eq.s32.totalorder %s24, 7
    %p183 = por %p181, %p182
    %p184 = scmp.ne.s32.totalorder %s175, %s176
    %p185 = scmp.eq.s32.totalorder %s24, 0
    %p186 = por %p184, %p185
    %p187 = scmp.ne.s32.totalorder %s175, %s176
    %p188 = scmp.eq.s32.totalorder %s25, 7
    %p189 = por %p187, %p188
    %p191 = scmp.ne.s32.totalorder %s176, %s190
    %p192 = scmp.eq.s32.totalorder %s25, 0
    %p193 = por %p191, %p192
    %s195 = sadd.s32 %s194, 1
    %p198 = scmp.eq.s32.totalorder %s19, 7
    %p199 = scmp.ne.s32.totalorder %s194, %s196
    %p200 = scmp.eq.s32.totalorder %s19, 0
    %p201 = por %p199, %p200
    %p202 = scmp.ne.s32.totalorder %s194, %s196
    %p203 = scmp.eq.s32.totalorder %s24, 7
    %p204 = por %p202, %p203
    %p205 = scmp.ne.s32.totalorder %s196, %s197
    %p206 = scmp.eq.s32.totalorder %s24, 0
    %p207 = por %p205, %p206
    %p208 = scmp.ne.s32.totalorder %s196, %s197
    %p209 = scmp.eq.s32.totalorder %s25, 7
    %p210 = por %p208, %p209
    %p212 = scmp.ne.s32.totalorder %s197, %s211
    %p213 = scmp.eq.s32.totalorder %s25, 0
    %p214 = por %p212, %p213
    %s216 = sadd.s32 %s215, 1
    %p219 = scmp.eq.s32.totalorder %s19, 7
    %p220 = scmp.ne.s32.totalorder %s215, %s217
    %p221 = scmp.eq.s32.totalorder %s19, 0
    %p222 = por %p220, %p221
    %p223 = scmp.ne.s32.totalorder %s215, %s217
    %p224 = scmp.eq.s32.totalorder %s24, 7
    %p225 = por %p223, %p224
    %p226 = scmp.ne.s32.totalorder %s217, %s218
    %p227 = scmp.eq.s32.totalorder %s24, 0
    %p228 = por %p226, %p227
    %p229 = scmp.ne.s32.totalorder %s217, %s218
    %p230 = scmp.eq.s32.totalorder %s25, 7
    %p231 = por %p229, %p230
    %p233 = scmp.ne.s32.totalorder %s218, %s232
    %p234 = scmp.eq.s32.totalorder %s25, 0
    %p235 = por %p233, %p234
    %s237 = sadd.s32 %s236, 1
    %p240 = scmp.eq.s32.totalorder %s19, 7
    %p241 = scmp.ne.s32.totalorder %s236, %s238
    %p242 = scmp.eq.s32.totalorder %s19, 0
    %p243 = por %p241, %p242
    %p244 = scmp.ne.s32.totalorder %s236, %s238
    %p245 = scmp.eq.s32.totalorder %s24, 7
    %p246 = por %p244, %p245
    %p247 = scmp.ne.s32.totalorder %s238, %s239
    %p248 = scmp.eq.s32.totalorder %s24, 0
    %p249 = por %p247, %p248
    %p250 = scmp.ne.s32.totalorder %s238, %s239
    %p251 = scmp.eq.s32.totalorder %s25, 7
    %p252 = por %p250, %p251
    %p254 = scmp.ne.s32.totalorder %s239, %s253
    %p255 = scmp.eq.s32.totalorder %s25, 0
    %p256 = por %p254, %p255
    %s258 = sadd.s32 %s257, 1
    %p261 = scmp.eq.s32.totalorder %s19, 7
    %p262 = scmp.ne.s32.totalorder %s257, %s259
    %p263 = scmp.eq.s32.totalorder %s19, 0
    %p264 = por %p262, %p263
    %p265 = scmp.ne.s32.totalorder %s257, %s259
    %p266 = scmp.eq.s32.totalorder %s24, 7
    %p267 = por %p265, %p266
    %p268 = scmp.ne.s32.totalorder %s259, %s260
    %p269 = scmp.eq.s32.totalorder %s24, 0
    %p270 = por %p268, %p269
    %p271 = scmp.ne.s32.totalorder %s259, %s260
    %p272 = scmp.eq.s32.totalorder %s25, 7
    %p273 = por %p271, %p272
    %p275 = scmp.ne.s32.totalorder %s260, %s274
    %p276 = scmp.eq.s32.totalorder %s25, 0
    %p277 = por %p275, %p276
    %s279 = sadd.s32 %s278, 1
    %p282 = scmp.eq.s32.totalorder %s19, 7
    %p283 = scmp.ne.s32.totalorder %s278, %s280
    %p284 = scmp.eq.s32.totalorder %s19, 0
    %p285 = por %p283, %p284
    %p286 = scmp.ne.s32.totalorder %s278, %s280
    %p287 = scmp.eq.s32.totalorder %s24, 7
    %p288 = por %p286, %p287
    %p289 = scmp.ne.s32.totalorder %s280, %s281
    %p290 = scmp.eq.s32.totalorder %s24, 0
    %p291 = por %p289, %p290
    %p292 = scmp.ne.s32.totalorder %s280, %s281
    %p293 = scmp.eq.s32.totalorder %s25, 7
    %p294 = por %p292, %p293
    %p296 = scmp.ne.s32.totalorder %s281, %s295
    %p297 = scmp.eq.s32.totalorder %s25, 0
    %p298 = por %p296, %p297
    %s299 = ssub.s32 %s26, %s38
    %s300 = ssub.s32 %s27, %s34
    %s301 = sor.u32 %s299, %s300
    %p302 = scmp.eq.s32.totalorder %s301, 0
    %s304 = sadd.s32 %s303, 1
    %s305 = scalar_select %p302, %s303, %s304
    %p308 = pneg %p302
    %p309 = scmp.eq.s32.totalorder %s19, 7
    %p310 = por %p308, %p309
    %p311 = scmp.ne.s32.totalorder %s303, %s306
    %p312 = scmp.eq.s32.totalorder %s19, 0
    %p313 = por %p311, %p312
    %p314 = scmp.ne.s32.totalorder %s303, %s306
    %p315 = scmp.eq.s32.totalorder %s24, 7
    %p316 = por %p314, %p315
    %p317 = scmp.ne.s32.totalorder %s306, %s307
    %p318 = scmp.eq.s32.totalorder %s24, 0
    %p319 = por %p317, %p318
    %p320 = scmp.ne.s32.totalorder %s306, %s307
    %p321 = scmp.eq.s32.totalorder %s25, 7
    %p322 = por %p320, %p321
    %p324 = scmp.ne.s32.totalorder %s307, %s323
    %p325 = scmp.eq.s32.totalorder %s25, 0
    %p326 = por %p324, %p325
    %s327 = ssub.s32 %s26, %s38
    %s328 = ssub.s32 %s27, %s34
    %s329 = sor.u32 %s327, %s328
    %p330 = scmp.eq.s32.totalorder %s329, 0
    %s332 = sadd.s32 %s331, 1
    %s333 = scalar_select %p330, %s331, %s332
    %p336 = pneg %p330
    %p337 = scmp.eq.s32.totalorder %s19, 7
    %p338 = por %p336, %p337
    %p339 = scmp.ne.s32.totalorder %s331, %s334
    %p340 = scmp.eq.s32.totalorder %s19, 0
    %p341 = por %p339, %p340
    %p342 = scmp.ne.s32.totalorder %s331, %s334
    %p343 = scmp.eq.s32.totalorder %s24, 7
    %p344 = por %p342, %p343
    %p345 = scmp.ne.s32.totalorder %s334, %s335
    %p346 = scmp.eq.s32.totalorder %s24, 0
    %p347 = por %p345, %p346
    %p348 = scmp.ne.s32.totalorder %s334, %s335
    %p349 = scmp.eq.s32.totalorder %s25, 7
    %p350 = por %p348, %p349
    %p352 = scmp.ne.s32.totalorder %s335, %s351
    %p353 = scmp.eq.s32.totalorder %s25, 0
    %p354 = por %p352, %p353
    %p355 = scmp.le.s32.totalorder 1, %s19
    %p356 = scmp.lt.s32.totalorder %s19, 9
    %p357 = pnand %p355, %p356
    %p358 = pneg %p357
    // Predicated region
    $region9: #{deconv2d_block_forward.2} parent=5 // pred_check
      _
    $region10: #{deconv2d_block_forward.2} parent=5 // pred_check_branch
      %360 = sbr.rel (%p357) target = $region12
    $region11: #{deconv2d_block_forward.2} parent=5 // pred_region
      %s361 = ssub.s32 %s19, 1
      // Predicated region
      $region13: #{deconv2d_block_forward.2} parent=11 // pred_check
        %p362 = pneg %p144
      $region14: #{deconv2d_block_forward.2} parent=11 // pred_check_branch
        %364 = sbr.rel (%p362) target = $region16
      $region15: #{deconv2d_block_forward.2} parent=11 // pred_region
        _
      $region16: #{deconv2d_block_forward.2} parent=11 // pred_fallthru
        _
      // Predicated region
      $region17: #{deconv2d_block_forward.2} parent=11 // pred_check
        %p365 = pneg %p165
      $region18: #{deconv2d_block_forward.2} parent=11 // pred_check_branch
        %367 = sbr.rel (%p365) target = $region20
      $region19: #{deconv2d_block_forward.2} parent=11 // pred_region
        _
      $region20: #{deconv2d_block_forward.2} parent=11 // pred_fallthru
        _
      // Predicated region
      $region21: #{deconv2d_block_forward.2} parent=11 // pred_check
        %p368 = pneg %p186
      $region22: #{deconv2d_block_forward.2} parent=11 // pred_check_branch
        %370 = sbr.rel (%p368) target = $region24
      $region23: #{deconv2d_block_forward.2} parent=11 // pred_region
        _
      $region24: #{deconv2d_block_forward.2} parent=11 // pred_fallthru
        _
      // Predicated region
      $region25: #{deconv2d_block_forward.2} parent=11 // pred_check
        %p371 = pneg %p207
      $region26: #{deconv2d_block_forward.2} parent=11 // pred_check_branch
        %373 = sbr.rel (%p371) target = $region28
      $region27: #{deconv2d_block_forward.2} parent=11 // pred_region
        _
      $region28: #{deconv2d_block_forward.2} parent=11 // pred_fallthru
        _
      // Predicated region
      $region29: #{deconv2d_block_forward.2} parent=11 // pred_check
        %p374 = pneg %p228
      $region30: #{deconv2d_block_forward.2} parent=11 // pred_check_branch
        %376 = sbr.rel (%p374) target = $region32
      $region31: #{deconv2d_block_forward.2} parent=11 // pred_region
        _
      $region32: #{deconv2d_block_forward.2} parent=11 // pred_fallthru
        _
      // Predicated region
      $region33: #{deconv2d_block_forward.2} parent=11 // pred_check
        %p377 = pneg %p249
      $region34: #{deconv2d_block_forward.2} parent=11 // pred_check_branch
        %379 = sbr.rel (%p377) target = $region36
      $region35: #{deconv2d_block_forward.2} parent=11 // pred_region
        _
      $region36: #{deconv2d_block_forward.2} parent=11 // pred_fallthru
        _
      // Predicated region
      $region37: #{deconv2d_block_forward.2} parent=11 // pred_check
        %p380 = pneg %p270
      $region38: #{deconv2d_block_forward.2} parent=11 // pred_check_branch
        %382 = sbr.rel (%p380) target = $region40
      $region39: #{deconv2d_block_forward.2} parent=11 // pred_region
        _
      $region40: #{deconv2d_block_forward.2} parent=11 // pred_fallthru
        _
      // Predicated region
      $region41: #{deconv2d_block_forward.2} parent=11 // pred_check
        %p383 = pneg %p291
      $region42: #{deconv2d_block_forward.2} parent=11 // pred_check_branch
        %385 = sbr.rel (%p383) target = $region44
      $region43: #{deconv2d_block_forward.2} parent=11 // pred_region
        _
      $region44: #{deconv2d_block_forward.2} parent=11 // pred_fallthru
        _
    $region12: #{deconv2d_block_forward.2} parent=5 // pred_fallthru
      _
    %p386 = scmp.lt.s32.totalorder %s19, 8
    // Predicated region
    $region45: #{deconv2d_block_forward.2} parent=5 // pred_check
      %p387 = pneg %p386
    $region46: #{deconv2d_block_forward.2} parent=5 // pred_check_branch
      %389 = sbr.rel (%p387) target = $region48
    $region47: #{deconv2d_block_forward.2} parent=5 // pred_region
      // Predicated region
      $region49: #{deconv2d_block_forward.2} parent=47 // pred_check
        %p390 = pneg %p55
      $region50: #{deconv2d_block_forward.2} parent=47 // pred_check_branch
        %392 = sbr.rel (%p390) target = $region52
      $region51: #{deconv2d_block_forward.2} parent=47 // pred_region
        %s393 = smul.u32 %s27, 2
        %p394 = scmp.lt.s32.totalorder %s26, 1
        %s395 = scalar_select %p394, %s26, 1
        %p396 = scmp.lt.s32.totalorder %s393, 9
        %s397 = scalar_select %p396, %s393, 9
        %s398 = smul.addr %s395, 10
        %s399 = sadd.s32 %s397, %s398
        %s400 = smul.addr %s399, 8
        %s401 = scalar_lea.vmem %s0, %s400
        %s402 = smul.u32 %s27, 2
      $region52: #{deconv2d_block_forward.2} parent=47 // pred_fallthru
        _
      // Predicated region
      $region53: #{deconv2d_block_forward.2} parent=47 // pred_check
        %p403 = pneg %p83
      $region54: #{deconv2d_block_forward.2} parent=47 // pred_check_branch
        %405 = sbr.rel (%p403) target = $region56
      $region55: #{deconv2d_block_forward.2} parent=47 // pred_region
        %s406 = smul.u32 2, %s27
        %p407 = scmp.lt.s32.totalorder %s26, 1
        %s408 = scalar_select %p407, %s26, 1
        %p409 = scmp.lt.s32.totalorder %s406, 7
        %s410 = scalar_select %p409, %s406, 7
        %s411 = smul.addr %s408, 8
        %s412 = sadd.s32 %s410, %s411
        %s413 = smul.addr %s412, 8
        %s414 = scalar_lea.vmem %s1, %s413
        %s415 = smul.u32 2, %s27
      $region56: #{deconv2d_block_forward.2} parent=47 // pred_fallthru
        _
      // Predicated region
      $region57: #{deconv2d_block_forward.2} parent=47 // pred_check
        %p416 = pneg %p117
      $region58: #{deconv2d_block_forward.2} parent=47 // pred_check_branch
        %418 = sbr.rel (%p416) target = $region60
      $region59: #{deconv2d_block_forward.2} parent=47 // pred_region
        %s419 = sadd.s32 %s27, 1
        %s420 = smul.u32 %s419, 2
        %s421 = sadd.s32 %s420, 1
        %p422 = scmp.lt.s32.totalorder %s26, 1
        %s423 = scalar_select %p422, %s26, 1
        %p424 = scmp.lt.s32.totalorder %s421, 9
        %s425 = scalar_select %p424, %s421, 9
        %s426 = smul.addr %s423, 10
        %s427 = sadd.s32 %s425, %s426
        %s428 = smul.addr %s427, 8
        %s429 = scalar_lea.vmem %s2, %s428
        %s430 = sadd.s32 %s27, 1
        %s431 = smul.u32 %s430, 2
        %s432 = sadd.s32 %s431, 1
      $region60: #{deconv2d_block_forward.2} parent=47 // pred_fallthru
        _
    $region48: #{deconv2d_block_forward.2} parent=5 // pred_fallthru
      _
    %p433 = scmp.le.s32.totalorder 1, %s19
    %p434 = scmp.lt.s32.totalorder %s19, 9
    %p435 = pnand %p433, %p434
    %p436 = pneg %p435
    // Predicated region
    $region61: #{deconv2d_block_forward.2} parent=5 // pred_check
      _
    $region62: #{deconv2d_block_forward.2} parent=5 // pred_check_branch
      %438 = sbr.rel (%p435) target = $region64
    $region63: #{deconv2d_block_forward.2} parent=5 // pred_region
      %s439 = ssub.s32 %s19, 1
      %s440 = smul.u32 %s29, 2
      %p441 = scmp.lt.s32.totalorder %s28, 1
      %s442 = scalar_select %p441, %s28, 1
      %p443 = scmp.lt.s32.totalorder %s440, 9
      %s444 = scalar_select %p443, %s440, 9
      %s445 = smul.addr %s442, 10
      %s446 = sadd.s32 %s444, %s445
      %s447 = smul.addr %s446, 8
      %s448 = scalar_lea.vmem %s0, %s447
      %p449 = pneg %p61
      %p450 = pneg %p58
      %s451 = smul.u32 2, %s29
      %p452 = scmp.lt.s32.totalorder %s28, 1
      %s453 = scalar_select %p452, %s28, 1
      %p454 = scmp.lt.s32.totalorder %s451, 7
      %s455 = scalar_select %p454, %s451, 7
      %s456 = smul.addr %s453, 8
      %s457 = sadd.s32 %s455, %s456
      %s458 = smul.addr %s457, 8
      %s459 = scalar_lea.vmem %s1, %s458
      %p460 = pneg %p89
      %p461 = pneg %p86
      %s462 = sadd.s32 %s29, 1
      %s463 = smul.u32 %s462, 2
      %s464 = sadd.s32 %s463, 1
      %p465 = scmp.lt.s32.totalorder %s28, 1
      %s466 = scalar_select %p465, %s28, 1
      %p467 = scmp.lt.s32.totalorder %s464, 9
      %s468 = scalar_select %p467, %s464, 9
      %s469 = smul.addr %s466, 10
      %s470 = sadd.s32 %s468, %s469
      %s471 = smul.addr %s470, 8
      %s472 = scalar_lea.vmem %s2, %s471
      %p473 = pneg %p123
      %p474 = pneg %p120
      %p475 = pneg %p144
      %p476 = pneg %p141
      %p477 = pneg %p165
      %p478 = pneg %p162
      %p479 = pneg %p186
      %p480 = pneg %p183
      %p481 = pneg %p207
      %p482 = pneg %p204
      %p483 = pneg %p228
      %p484 = pneg %p225
      %p485 = pneg %p249
      %p486 = pneg %p246
      %p487 = pneg %p270
      %p488 = pneg %p267
      %p489 = pneg %p291
      %p490 = pneg %p288
      %p491 = pneg %p319
      %p492 = pneg %p316
      %s493 = smul.u32 2, %s29
      %p494 = scmp.lt.s32.totalorder %s28, 1
      %s495 = scalar_select %p494, %s28, 1
      %p496 = scmp.lt.s32.totalorder %s493, 7
      %s497 = scalar_select %p496, %s493, 7
      %s498 = smul.addr %s497, 4
      %s499 = smul.addr %s495, 32
      %s500 = sadd.s32 %s498, %s499
      %s501 = smul.addr %s500, 8
      %s502 = scalar_lea.vmem %s11, %s501
      %p503 = pneg %p347
      %p504 = pneg %p344
      %p505 = scmp.lt.s32.totalorder %s28, 1
      %s506 = scalar_select %p505, %s28, 1
      %p507 = scmp.lt.s32.totalorder %s29, 3
      %s508 = scalar_select %p507, %s29, 3
      %s509 = smul.addr %s506, 4
      %s510 = sadd.s32 %s508, %s509
      %s511 = smul.addr %s510, 2
      %s512 = scalar_lea.vmem %s12, %s511
      %s513 = smul.u32 %s29, 2
      %p514 = scmp.lt.s32.totalorder %s28, 1
      %s515 = scalar_select %p514, %s28, 1
      %p516 = scmp.lt.s32.totalorder %s513, 9
      %s517 = scalar_select %p516, %s513, 9
      %s518 = smul.addr %s515, 10
      %s519 = sadd.s32 %s517, %s518
      %s520 = smul.addr %s519, 8
      %s521 = scalar_lea.vmem %s0, %s520
      %s522 = smul.u32 %s29, 2
      %s523 = smul.u32 2, %s29
      %p524 = scmp.lt.s32.totalorder %s28, 1
      %s525 = scalar_select %p524, %s28, 1
      %p526 = scmp.lt.s32.totalorder %s523, 7
      %s527 = scalar_select %p526, %s523, 7
      %s528 = smul.addr %s525, 8
      %s529 = sadd.s32 %s527, %s528
      %s530 = smul.addr %s529, 8
      %s531 = scalar_lea.vmem %s1, %s530
      %s532 = smul.u32 2, %s29
      %s533 = sadd.s32 %s29, 1
      %s534 = smul.u32 %s533, 2
      %s535 = sadd.s32 %s534, 1
      %p536 = scmp.lt.s32.totalorder %s28, 1
      %s537 = scalar_select %p536, %s28, 1
      %p538 = scmp.lt.s32.totalorder %s535, 9
      %s539 = scalar_select %p538, %s535, 9
      %s540 = smul.addr %s537, 10
      %s541 = sadd.s32 %s539, %s540
      %s542 = smul.addr %s541, 8
      %s543 = scalar_lea.vmem %s2, %s542
      %s544 = sadd.s32 %s29, 1
      %s545 = smul.u32 %s544, 2
      %s546 = sadd.s32 %s545, 1
      %s547 = smul.u32 2, %s29
      %p548 = scmp.lt.s32.totalorder %s28, 1
      %s549 = scalar_select %p548, %s28, 1
      %p550 = scmp.lt.s32.totalorder %s547, 7
      %s551 = scalar_select %p550, %s547, 7
      %s552 = smul.addr %s551, 4
      %s553 = smul.addr %s549, 32
      %s554 = sadd.s32 %s552, %s553
      %s555 = smul.addr %s554, 8
      %s556 = scalar_lea.vmem %s11, %s555
      %s557 = smul.u32 2, %s29
      %p558 = scmp.lt.s32.totalorder %s28, 1
      %s559 = scalar_select %p558, %s28, 1
      %p560 = scmp.lt.s32.totalorder %s29, 3
      %s561 = scalar_select %p560, %s29, 3
      %s562 = smul.addr %s559, 4
      %s563 = sadd.s32 %s561, %s562
      %s564 = smul.addr %s563, 2
      %s565 = scalar_lea.vmem %s12, %s564
      %v566 = vld [vmem:[%s5] sm:$0x3]
      %v567 = vld [vmem:[%s10] sm:$0x1]
      %v568 = vld [vmem:[%s531] sm:$0xff]
      %v569 = vld [vmem:[%s531 + $0x8] sm:$0xff]
      %v570 = vld [vmem:[%s521] sm:$0xff]
      %v571 = vld [vmem:[%s543] sm:$0xff]
      %v572 = vld [vmem:[%s3] sm:$0xff]
      %v574 = vlaneseq
      %v575 = vshrl.u32 %v574, 7
      %v576 = vsub.s32 0, %v575
      %v577 = vrot.slane %v566, %v576
      %v578 = vlaneseq
      %v579 = vshrl.u32 %v578, 7
      %v580 = vsub.s32 1, %v579
      %v581 = vrot.slane %v566, %v580
      %v585 = vcombine.high %v572, %v572
      %vm586 = vcmask 31744
      %v588 = vsel %vm586, %v568, 0
      %v591 = vsel %vm586, %v569, 0
      %vm593 = vcmask 1043456
      %v594 = vsel %vm593, %v572, 0
      %v596 = vsel %vm593, %v585, 0
      %598 = vmatprep.subr.mxu0 %v596
      %599 = vmatpush1.msra.mxu0 %v594
      %600 = vmatprep.subr.mxu0 0.0
      %601 = vmatpush1.msra.mxu0 0.0
      %602 = vmatprep.subr.mxu0 0.0
      %603 = vmatpush1.msra.mxu0 0.0
      %604 = vmatprep.subr.mxu0 0.0
      %605 = vmatpush1.msra.mxu0 0.0
      %606 = vmatprep.subr.mxu0 0.0
      %607 = vmatpush1.msra.mxu0 0.0
      %608 = vmatprep.subr.mxu0 0.0
      %609 = vmatpush1.msra.mxu0 0.0
      %610 = vmatprep.subr.mxu0 0.0
      %611 = vmatpush1.msra.mxu0 0.0
      %612 = vmatprep.subr.mxu0 0.0
      %613 = vmatpush1.msra.mxu0 0.0
      %614 = vmatprep.subr.mxu0 0.0
      %615 = vmatpush1.msra.mxu0 0.0
      %616 = vmatprep.subr.mxu0 0.0
      %617 = vmatpush1.msra.mxu0 0.0
      %618 = vmatprep.subr.mxu0 0.0
      %619 = vmatpush1.msra.mxu0 0.0
      %620 = vmatprep.subr.mxu0 0.0
      %621 = vmatpush1.msra.mxu0 0.0
      %622 = vmatprep.subr.mxu0 0.0
      %623 = vmatpush1.msra.mxu0 0.0
      %624 = vmatprep.subr.mxu0 0.0
      %625 = vmatpush1.msra.mxu0 0.0
      %626 = vmatprep.subr.mxu0 0.0
      %627 = vmatpush1.msra.mxu0 0.0
      %628 = vmatprep.subr.mxu0 0.0
      %629 = vmatpush1.msra.mxu0 0.0
      %630 = vmatprep.subr.mxu0 0.0
      %631 = vmatpush1.msra.mxu0 0.0
      %632 = vmatprep.subr.mxu0 0.0
      %633 = vmatpush1.msra.mxu0 0.0
      %634 = vmatprep.subr.mxu0 0.0
      %635 = vmatpush1.msra.mxu0 0.0
      %636 = vmatprep.subr.mxu0 0.0
      %637 = vmatpush1.msra.mxu0 0.0
      %638 = vmatprep.subr.mxu0 0.0
      %639 = vmatpush1.msra.mxu0 0.0
      %640 = vmatprep.subr.mxu0 0.0
      %641 = vmatpush1.msra.mxu0 0.0
      %642 = vmatprep.subr.mxu0 0.0
      %643 = vmatpush1.msra.mxu0 0.0
      %644 = vmatprep.subr.mxu0 0.0
      %645 = vmatpush1.msra.mxu0 0.0
      %646 = vmatprep.subr.mxu0 0.0
      %647 = vmatpush1.msra.mxu0 0.0
      %648 = vmatprep.subr.mxu0 0.0
      %649 = vmatpush1.msra.mxu0 0.0
      %650 = vmatprep.subr.mxu0 0.0
      %651 = vmatpush1.msra.mxu0 0.0
      %652 = vmatprep.subr.mxu0 0.0
      %653 = vmatpush1.msra.mxu0 0.0
      %654 = vmatprep.subr.mxu0 0.0
      %655 = vmatpush1.msra.mxu0 0.0
      %656 = vmatprep.subr.mxu0 0.0
      %657 = vmatpush1.msra.mxu0 0.0
      %658 = vmatprep.subr.mxu0 0.0
      %659 = vmatpush1.msra.mxu0 0.0
      %660 = vmatprep.subr.mxu0 0.0
      %661 = vmatpush1.msra.mxu0 0.0
      %662 = vmatprep.mubr.f32.mxu0 0.0
      %663 = vmatmul.mubr.f32.gmra.mrb[0].mxu0 %v588
      %v664 = vpop.f32.mrb[0].mxu0
      %v665 = vadd.f32 %v577, %v664
      %v666 = vpop.f32.mrb[0].mxu0
      %v667 = vadd.f32 %v581, %v666
      %668 = vmatprep.mubr.f32.mxu0 0.0
      %669 = vmatmul.mubr.f32.gmra.mrb[0].mxu0 %v591
      %v670 = vpop.f32.mrb[0].mxu0
      %v671 = vadd.f32 %v577, %v670
      %v672 = vpop.f32.mrb[0].mxu0
      %v673 = vadd.f32 %v581, %v672
      %674 = vdwg.mxu0
      %v675 = vld [vmem:[%s4] sm:$0xff]
      %v677 = vcombine.high %v675, %v675
      %v678 = vsel %vm593, %v675, 0
      %v680 = vsel %vm593, %v677, 0
      %682 = vmatprep.subr.mxu0 %v680
      %683 = vmatpush1.msra.mxu0 %v678
      %684 = vmatprep.subr.mxu0 0.0
      %685 = vmatpush1.msra.mxu0 0.0
      %686 = vmatprep.subr.mxu0 0.0
      %687 = vmatpush1.msra.mxu0 0.0
      %688 = vmatprep.subr.mxu0 0.0
      %689 = vmatpush1.msra.mxu0 0.0
      %690 = vmatprep.subr.mxu0 0.0
      %691 = vmatpush1.msra.mxu0 0.0
      %692 = vmatprep.subr.mxu0 0.0
      %693 = vmatpush1.msra.mxu0 0.0
      %694 = vmatprep.subr.mxu0 0.0
      %695 = vmatpush1.msra.mxu0 0.0
      %696 = vmatprep.subr.mxu0 0.0
      %697 = vmatpush1.msra.mxu0 0.0
      %698 = vmatprep.subr.mxu0 0.0
      %699 = vmatpush1.msra.mxu0 0.0
      %700 = vmatprep.subr.mxu0 0.0
      %701 = vmatpush1.msra.mxu0 0.0
      %702 = vmatprep.subr.mxu0 0.0
      %703 = vmatpush1.msra.mxu0 0.0
      %704 = vmatprep.subr.mxu0 0.0
      %705 = vmatpush1.msra.mxu0 0.0
      %706 = vmatprep.subr.mxu0 0.0
      %707 = vmatpush1.msra.mxu0 0.0
      %708 = vmatprep.subr.mxu0 0.0
      %709 = vmatpush1.msra.mxu0 0.0
      %710 = vmatprep.subr.mxu0 0.0
      %711 = vmatpush1.msra.mxu0 0.0
      %712 = vmatprep.subr.mxu0 0.0
      %713 = vmatpush1.msra.mxu0 0.0
      %714 = vmatprep.subr.mxu0 0.0
      %715 = vmatpush1.msra.mxu0 0.0
      %716 = vmatprep.subr.mxu0 0.0
      %717 = vmatpush1.msra.mxu0 0.0
      %718 = vmatprep.subr.mxu0 0.0
      %719 = vmatpush1.msra.mxu0 0.0
      %720 = vmatprep.subr.mxu0 0.0
      %721 = vmatpush1.msra.mxu0 0.0
      %722 = vmatprep.subr.mxu0 0.0
      %723 = vmatpush1.msra.mxu0 0.0
      %724 = vmatprep.subr.mxu0 0.0
      %725 = vmatpush1.msra.mxu0 0.0
      %726 = vmatprep.subr.mxu0 0.0
      %727 = vmatpush1.msra.mxu0 0.0
      %728 = vmatprep.subr.mxu0 0.0
      %729 = vmatpush1.msra.mxu0 0.0
      %730 = vmatprep.subr.mxu0 0.0
      %731 = vmatpush1.msra.mxu0 0.0
      %732 = vmatprep.subr.mxu0 0.0
      %733 = vmatpush1.msra.mxu0 0.0
      %734 = vmatprep.subr.mxu0 0.0
      %735 = vmatpush1.msra.mxu0 0.0
      %736 = vmatprep.subr.mxu0 0.0
      %737 = vmatpush1.msra.mxu0 0.0
      %738 = vmatprep.subr.mxu0 0.0
      %739 = vmatpush1.msra.mxu0 0.0
      %740 = vmatprep.subr.mxu0 0.0
      %741 = vmatpush1.msra.mxu0 0.0
      %742 = vmatprep.subr.mxu0 0.0
      %743 = vmatpush1.msra.mxu0 0.0
      %744 = vmatprep.subr.mxu0 0.0
      %745 = vmatpush1.msra.mxu0 0.0
      %746 = vmatprep.mubr.f32.mxu0 0.0
      %747 = vmatmul.mubr.f32.gmra.mrb[0].mxu0 %v588
      %v748 = vpop.f32.mrb[0].mxu0
      %v749 = vadd.f32 %v577, %v748
      %v750 = vpop.f32.mrb[0].mxu0
      %v751 = vadd.f32 %v581, %v750
      %752 = vmatprep.mubr.f32.mxu0 0.0
      %753 = vmatmul.mubr.f32.gmra.mrb[0].mxu0 %v591
      %v754 = vpop.f32.mrb[0].mxu0
      %v755 = vadd.f32 %v577, %v754
      %v756 = vpop.f32.mrb[0].mxu0
      %v757 = vadd.f32 %v581, %v756
      %758 = vdwg.mxu0
      %p759 = scmp.gt.s32.totalorder %s29, 0
      %s760 = scalar_select %p759, 1, 0
      %s761 = scvt.s32.f32 %s760
      %p762 = scmp.lt.s32.totalorder %s29, 3
      %s763 = scalar_select %p762, 1, 0
      %s764 = scvt.s32.f32 %s763
      %v766 = vsel %vm586, %v570, 0
      %768 = vmatprep.subr.mxu0 %v680
      %769 = vmatpush1.msra.mxu0 %v678
      %770 = vmatprep.subr.mxu0 0.0
      %771 = vmatpush1.msra.mxu0 0.0
      %772 = vmatprep.subr.mxu0 0.0
      %773 = vmatpush1.msra.mxu0 0.0
      %774 = vmatprep.subr.mxu0 0.0
      %775 = vmatpush1.msra.mxu0 0.0
      %776 = vmatprep.subr.mxu0 0.0
      %777 = vmatpush1.msra.mxu0 0.0
      %778 = vmatprep.subr.mxu0 0.0
      %779 = vmatpush1.msra.mxu0 0.0
      %780 = vmatprep.subr.mxu0 0.0
      %781 = vmatpush1.msra.mxu0 0.0
      %782 = vmatprep.subr.mxu0 0.0
      %783 = vmatpush1.msra.mxu0 0.0
      %784 = vmatprep.subr.mxu0 0.0
      %785 = vmatpush1.msra.mxu0 0.0
      %786 = vmatprep.subr.mxu0 0.0
      %787 = vmatpush1.msra.mxu0 0.0
      %788 = vmatprep.subr.mxu0 0.0
      %789 = vmatpush1.msra.mxu0 0.0
      %790 = vmatprep.subr.mxu0 0.0
      %791 = vmatpush1.msra.mxu0 0.0
      %792 = vmatprep.subr.mxu0 0.0
      %793 = vmatpush1.msra.mxu0 0.0
      %794 = vmatprep.subr.mxu0 0.0
      %795 = vmatpush1.msra.mxu0 0.0
      %796 = vmatprep.subr.mxu0 0.0
      %797 = vmatpush1.msra.mxu0 0.0
      %798 = vmatprep.subr.mxu0 0.0
      %799 = vmatpush1.msra.mxu0 0.0
      %800 = vmatprep.subr.mxu0 0.0
      %801 = vmatpush1.msra.mxu0 0.0
      %802 = vmatprep.subr.mxu0 0.0
      %803 = vmatpush1.msra.mxu0 0.0
      %804 = vmatprep.subr.mxu0 0.0
      %805 = vmatpush1.msra.mxu0 0.0
      %806 = vmatprep.subr.mxu0 0.0
      %807 = vmatpush1.msra.mxu0 0.0
      %808 = vmatprep.subr.mxu0 0.0
      %809 = vmatpush1.msra.mxu0 0.0
      %810 = vmatprep.subr.mxu0 0.0
      %811 = vmatpush1.msra.mxu0 0.0
      %812 = vmatprep.subr.mxu0 0.0
      %813 = vmatpush1.msra.mxu0 0.0
      %814 = vmatprep.subr.mxu0 0.0
      %815 = vmatpush1.msra.mxu0 0.0
      %816 = vmatprep.subr.mxu0 0.0
      %817 = vmatpush1.msra.mxu0 0.0
      %818 = vmatprep.subr.mxu0 0.0
      %819 = vmatpush1.msra.mxu0 0.0
      %820 = vmatprep.subr.mxu0 0.0
      %821 = vmatpush1.msra.mxu0 0.0
      %822 = vmatprep.subr.mxu0 0.0
      %823 = vmatpush1.msra.mxu0 0.0
      %824 = vmatprep.subr.mxu0 0.0
      %825 = vmatpush1.msra.mxu0 0.0
      %826 = vmatprep.subr.mxu0 0.0
      %827 = vmatpush1.msra.mxu0 0.0
      %828 = vmatprep.subr.mxu0 0.0
      %829 = vmatpush1.msra.mxu0 0.0
      %830 = vmatprep.subr.mxu0 0.0
      %831 = vmatpush1.msra.mxu0 0.0
      %832 = vmatprep.mubr.f32.mxu0 0.0
      %833 = vmatmul.mubr.f32.gmra.mrb[0].mxu0 %v766
      %v834 = vpop.f32.mrb[0].mxu0
      %v835 = vadd.f32 %v577, %v834
      %v836 = vpop.f32.mrb[0].mxu0
      %v837 = vadd.f32 %v581, %v836
      %838 = vdwg.mxu0
      %v839 = vstv %s761
      %v840 = vmul.f32 %v835, %v839
      %v841 = vmul.f32 %v837, %v839
      %v843 = vsel %vm586, %v571, 0
      %845 = vmatprep.subr.mxu0 %v596
      %846 = vmatpush1.msra.mxu0 %v594
      %847 = vmatprep.subr.mxu0 0.0
      %848 = vmatpush1.msra.mxu0 0.0
      %849 = vmatprep.subr.mxu0 0.0
      %850 = vmatpush1.msra.mxu0 0.0
      %851 = vmatprep.subr.mxu0 0.0
      %852 = vmatpush1.msra.mxu0 0.0
      %853 = vmatprep.subr.mxu0 0.0
      %854 = vmatpush1.msra.mxu0 0.0
      %855 = vmatprep.subr.mxu0 0.0
      %856 = vmatpush1.msra.mxu0 0.0
      %857 = vmatprep.subr.mxu0 0.0
      %858 = vmatpush1.msra.mxu0 0.0
      %859 = vmatprep.subr.mxu0 0.0
      %860 = vmatpush1.msra.mxu0 0.0
      %861 = vmatprep.subr.mxu0 0.0
      %862 = vmatpush1.msra.mxu0 0.0
      %863 = vmatprep.subr.mxu0 0.0
      %864 = vmatpush1.msra.mxu0 0.0
      %865 = vmatprep.subr.mxu0 0.0
      %866 = vmatpush1.msra.mxu0 0.0
      %867 = vmatprep.subr.mxu0 0.0
      %868 = vmatpush1.msra.mxu0 0.0
      %869 = vmatprep.subr.mxu0 0.0
      %870 = vmatpush1.msra.mxu0 0.0
      %871 = vmatprep.subr.mxu0 0.0
      %872 = vmatpush1.msra.mxu0 0.0
      %873 = vmatprep.subr.mxu0 0.0
      %874 = vmatpush1.msra.mxu0 0.0
      %875 = vmatprep.subr.mxu0 0.0
      %876 = vmatpush1.msra.mxu0 0.0
      %877 = vmatprep.subr.mxu0 0.0
      %878 = vmatpush1.msra.mxu0 0.0
      %879 = vmatprep.subr.mxu0 0.0
      %880 = vmatpush1.msra.mxu0 0.0
      %881 = vmatprep.subr.mxu0 0.0
      %882 = vmatpush1.msra.mxu0 0.0
      %883 = vmatprep.subr.mxu0 0.0
      %884 = vmatpush1.msra.mxu0 0.0
      %885 = vmatprep.subr.mxu0 0.0
      %886 = vmatpush1.msra.mxu0 0.0
      %887 = vmatprep.subr.mxu0 0.0
      %888 = vmatpush1.msra.mxu0 0.0
      %889 = vmatprep.subr.mxu0 0.0
      %890 = vmatpush1.msra.mxu0 0.0
      %891 = vmatprep.subr.mxu0 0.0
      %892 = vmatpush1.msra.mxu0 0.0
      %893 = vmatprep.subr.mxu0 0.0
      %894 = vmatpush1.msra.mxu0 0.0
      %895 = vmatprep.subr.mxu0 0.0
      %896 = vmatpush1.msra.mxu0 0.0
      %897 = vmatprep.subr.mxu0 0.0
      %898 = vmatpush1.msra.mxu0 0.0
      %899 = vmatprep.subr.mxu0 0.0
      %900 = vmatpush1.msra.mxu0 0.0
      %901 = vmatprep.subr.mxu0 0.0
      %902 = vmatpush1.msra.mxu0 0.0
      %903 = vmatprep.subr.mxu0 0.0
      %904 = vmatpush1.msra.mxu0 0.0
      %905 = vmatprep.subr.mxu0 0.0
      %906 = vmatpush1.msra.mxu0 0.0
      %907 = vmatprep.subr.mxu0 0.0
      %908 = vmatpush1.msra.mxu0 0.0
      %909 = vmatprep.mubr.f32.mxu0 0.0
      %910 = vmatmul.mubr.f32.gmra.mrb[0].mxu0 %v843
      %v911 = vpop.f32.mrb[0].mxu0
      %v912 = vadd.f32 %v577, %v911
      %v913 = vpop.f32.mrb[0].mxu0
      %v914 = vadd.f32 %v581, %v913
      %915 = vdwg.mxu0
      %v916 = vstv %s764
      %v917 = vmul.f32 %v912, %v916
      %v918 = vmul.f32 %v914, %v916
      %919 = vst [vmem:[#allocation2] sm:$0xff] 0.0
      %920 = vst [vmem:[#allocation2 + $0x8] sm:$0xff] 0.0
      %921 = vst [vmem:[#allocation2 + $0x10] sm:$0xff] 0.0
      %922 = vst [vmem:[#allocation2 + $0x18] sm:$0xff] 0.0
      %923 = vst [vmem:[#allocation2 + $0x20] sm:$0xff] 0.0
      %924 = vst [vmem:[#allocation2 + $0x28] sm:$0xff] 0.0
      %925 = vst [vmem:[#allocation2 + $0x30] sm:$0xff] 0.0
      %926 = vst [vmem:[#allocation2 + $0x38] sm:$0xff] 0.0
      %927 = vst [vmem:[#allocation2 + $0x40] sm:$0xff] 0.0
      %928 = vst [vmem:[#allocation2 + $0x48] sm:$0xff] 0.0
      %929 = vst [vmem:[#allocation2 + $0x50] sm:$0xff] 0.0
      %930 = vst [vmem:[#allocation2 + $0x58] sm:$0xff] 0.0
      %931 = vst [vmem:[#allocation3] sm:$0xff] 0.0
      %932 = vst [vmem:[#allocation3 + $0x8] sm:$0xff] 0.0
      %933 = vst [vmem:[#allocation3 + $0x10] sm:$0xff] 0.0
      %934 = vst [vmem:[#allocation3 + $0x18] sm:$0xff] 0.0
      %935 = vst [vmem:[#allocation3 + $0x20] sm:$0xff] 0.0
      %936 = vst [vmem:[#allocation3 + $0x28] sm:$0xff] 0.0
      %937 = vst [vmem:[#allocation3 + $0x30] sm:$0xff] 0.0
      %938 = vst [vmem:[#allocation3 + $0x38] sm:$0xff] 0.0
      %939 = vst [vmem:[#allocation3 + $0x40] sm:$0xff] 0.0
      %940 = vst [vmem:[#allocation3 + $0x48] sm:$0xff] 0.0
      %941 = vst [vmem:[#allocation3 + $0x50] sm:$0xff] 0.0
      %942 = vst [vmem:[#allocation3 + $0x58] sm:$0xff] 0.0
      %v947 = vcombine.low %v665, %v667
      %v948 = vcombine.high %v665, %v667
      %v949 = vcombine.low %v671, %v673
      %v950 = vcombine.high %v671, %v673
      %v956 = vunpack.c.l.s4 1935823168
      %v957 = vunpack.c.0.s8 %v956
      %v958 = vlaneseq
      %v959 = vshrl.u32 %v958, 7
      %v960 = vsub.s32 %v957, %v959
      %v961 = vrot.slane %v947, %v960
      %v963 = vunpack.c.l.s4 1935823168
      %v964 = vunpack.c.0.s8 %v963
      %v965 = vlaneseq
      %v966 = vshrl.u32 %v965, 7
      %v967 = vsub.s32 %v964, %v966
      %v968 = vrot.slane %v948, %v967
      %v970 = vunpack.c.l.s4 1935823168
      %v971 = vunpack.c.0.s8 %v970
      %v972 = vlaneseq
      %v973 = vshrl.u32 %v972, 7
      %v974 = vsub.s32 %v971, %v973
      %v975 = vrot.slane %v949, %v974
      %v977 = vunpack.c.l.s4 1935823168
      %v978 = vunpack.c.0.s8 %v977
      %v979 = vlaneseq
      %v980 = vshrl.u32 %v979, 7
      %v981 = vsub.s32 %v978, %v980
      %v982 = vrot.slane %v950, %v981
      %983 = vst [vmem:[#allocation2 + $0x8] sm:$0xff] %v961
      %984 = vst [vmem:[#allocation2 + $0x10] sm:$0xff] %v968
      %985 = vst [vmem:[#allocation2 + $0x28] sm:$0xff] %v975
      %986 = vst [vmem:[#allocation2 + $0x30] sm:$0xff] %v982
      %v989 = vcombine.low %v917, %v918
      %v990 = vcombine.high %v917, %v918
      %v994 = vunpack.c.l.s4 1935823168
      %v995 = vunpack.c.0.s8 %v994
      %v996 = vlaneseq
      %v997 = vshrl.u32 %v996, 7
      %v998 = vsub.s32 %v995, %v997
      %v999 = vrot.slane %v989, %v998
      %v1001 = vunpack.c.l.s4 1935823168
      %v1002 = vunpack.c.0.s8 %v1001
      %v1003 = vlaneseq
      %v1004 = vshrl.u32 %v1003, 7
      %v1005 = vsub.s32 %v1002, %v1004
      %v1006 = vrot.slane %v990, %v1005
      %s1007 = scalar_lea.vmem [#allocation2], 64
      %1008 = vst [vmem:[%s1007 + $0x8] sm:$0xff] %v999
      %1009 = vst [vmem:[%s1007 + $0x10] sm:$0xff] %v1006
      %v1012 = vcombine.low %v840, %v841
      %v1013 = vcombine.high %v840, %v841
      %v1017 = vunpack.c.l.s4 1935823168
      %v1018 = vunpack.c.0.s8 %v1017
      %v1019 = vlaneseq
      %v1020 = vshrl.u32 %v1019, 7
      %v1021 = vsub.s32 %v1018, %v1020
      %v1022 = vrot.slane %v1012, %v1021
      %v1024 = vunpack.c.l.s4 1935823168
      %v1025 = vunpack.c.0.s8 %v1024
      %v1026 = vlaneseq
      %v1027 = vshrl.u32 %v1026, 7
      %v1028 = vsub.s32 %v1025, %v1027
      %v1029 = vrot.slane %v1013, %v1028
      %1030 = vst [vmem:[#allocation3 + $0x8] sm:$0xff] %v1022
      %1031 = vst [vmem:[#allocation3 + $0x10] sm:$0xff] %v1029
      %v1036 = vcombine.low %v749, %v751
      %v1037 = vcombine.high %v749, %v751
      %v1038 = vcombine.low %v755, %v757
      %v1039 = vcombine.high %v755, %v757
      %v1045 = vunpack.c.l.s4 1935823168
      %v1046 = vunpack.c.0.s8 %v1045
      %v1047 = vlaneseq
      %v1048 = vshrl.u32 %v1047, 7
      %v1049 = vsub.s32 %v1046, %v1048
      %v1050 = vrot.slane %v1036, %v1049
      %v1052 = vunpack.c.l.s4 1935823168
      %v1053 = vunpack.c.0.s8 %v1052
      %v1054 = vlaneseq
      %v1055 = vshrl.u32 %v1054, 7
      %v1056 = vsub.s32 %v1053, %v1055
      %v1057 = vrot.slane %v1037, %v1056
      %v1059 = vunpack.c.l.s4 1935823168
      %v1060 = vunpack.c.0.s8 %v1059
      %v1061 = vlaneseq
      %v1062 = vshrl.u32 %v1061, 7
      %v1063 = vsub.s32 %v1060, %v1062
      %v1064 = vrot.slane %v1038, %v1063
      %v1066 = vunpack.c.l.s4 1935823168
      %v1067 = vunpack.c.0.s8 %v1066
      %v1068 = vlaneseq
      %v1069 = vshrl.u32 %v1068, 7
      %v1070 = vsub.s32 %v1067, %v1069
      %v1071 = vrot.slane %v1039, %v1070
      %s1072 = scalar_lea.vmem [#allocation3], 32
      %1073 = vst [vmem:[%s1072 + $0x8] sm:$0xff] %v1050
      %1074 = vst [vmem:[%s1072 + $0x10] sm:$0xff] %v1057
      %1075 = vst [vmem:[%s1072 + $0x28] sm:$0xff] %v1064
      %1076 = vst [vmem:[%s1072 + $0x30] sm:$0xff] %v1071
      %v1077 = vld [vmem:[#allocation3 + $0x7] sm:$0xff]
      %v1078 = vld [vmem:[#allocation3 + $0xf] sm:$0xff]
      %v1079 = vld [vmem:[#allocation3 + $0x27] sm:$0xff]
      %v1080 = vld [vmem:[#allocation3 + $0x2f] sm:$0xff]
      %v1081 = vld [vmem:[%s6] sm:$0xff]
      %v1082 = vld [vmem:[%s6 + $0x8] sm:$0xff]
      %v1083 = vld [vmem:[%s6 + $0x10] sm:$0xff]
      %v1084 = vld [vmem:[%s6 + $0x18] sm:$0xff]
      %v1085 = vld [vmem:[%s6 + $0x20] sm:$0xff]
      %v1086 = vld [vmem:[%s6 + $0x28] sm:$0xff]
      %v1087 = vld [vmem:[%s6 + $0x30] sm:$0xff]
      %v1088 = vld [vmem:[%s6 + $0x38] sm:$0xff]
      %v1089 = vld [vmem:[%s6 + $0x40] sm:$0xff]
      %v1090 = vld [vmem:[%s6 + $0x48] sm:$0xff]
      %v1091 = vld [vmem:[%s6 + $0x50] sm:$0xff]
      %v1092 = vld [vmem:[%s6 + $0x58] sm:$0xff]
      %v1093 = vld [vmem:[%s6 + $0x60] sm:$0xff]
      %v1094 = vld [vmem:[%s6 + $0x68] sm:$0xff]
      %v1095 = vld [vmem:[%s6 + $0x70] sm:$0xff]
      %v1096 = vld [vmem:[%s6 + $0x78] sm:$0xff]
      %s1097 = scalar_lea.vmem [#allocation2], 32
      %v1098 = vld [vmem:[%s1097 + $0x7] sm:$0xff]
      %v1099 = vld [vmem:[%s1097 + $0xf] sm:$0xff]
      %v1100 = vld [vmem:[%s1097 + $0x27] sm:$0xff]
      %v1101 = vld [vmem:[%s1097 + $0x2f] sm:$0xff]
      %v1102 = vld [vmem:[%s9] sm:$0xff]
      %v1103 = vld [vmem:[%s9 + $0x8] sm:$0xff]
      %v1104 = vld [vmem:[%s9 + $0x10] sm:$0xff]
      %v1105 = vld [vmem:[%s9 + $0x18] sm:$0xff]
      %v1106 = vld [vmem:[%s9 + $0x20] sm:$0xff]
      %v1107 = vld [vmem:[%s9 + $0x28] sm:$0xff]
      %v1108 = vld [vmem:[%s9 + $0x30] sm:$0xff]
      %v1109 = vld [vmem:[%s9 + $0x38] sm:$0xff]
      %v1110 = vld [vmem:[%s9 + $0x40] sm:$0xff]
      %v1111 = vld [vmem:[%s9 + $0x48] sm:$0xff]
      %v1112 = vld [vmem:[%s9 + $0x50] sm:$0xff]
      %v1113 = vld [vmem:[%s9 + $0x58] sm:$0xff]
      %v1114 = vld [vmem:[%s9 + $0x60] sm:$0xff]
      %v1115 = vld [vmem:[%s9 + $0x68] sm:$0xff]
      %v1116 = vld [vmem:[%s9 + $0x70] sm:$0xff]
      %v1117 = vld [vmem:[%s9 + $0x78] sm:$0xff]
      %v1118 = vld [vmem:[#allocation2 + $0x7] sm:$0xff]
      %v1119 = vld [vmem:[#allocation2 + $0xf] sm:$0xff]
      %v1120 = vld [vmem:[#allocation2 + $0x27] sm:$0xff]
      %v1121 = vld [vmem:[#allocation2 + $0x2f] sm:$0xff]
      %v1122 = vld [vmem:[%s7] sm:$0xff]
      %v1123 = vld [vmem:[%s7 + $0x8] sm:$0xff]
      %v1124 = vld [vmem:[%s7 + $0x10] sm:$0xff]
      %v1125 = vld [vmem:[%s7 + $0x18] sm:$0xff]
      %v1126 = vld [vmem:[%s7 + $0x20] sm:$0xff]
      %v1127 = vld [vmem:[%s7 + $0x28] sm:$0xff]
      %v1128 = vld [vmem:[%s7 + $0x30] sm:$0xff]
      %v1129 = vld [vmem:[%s7 + $0x38] sm:$0xff]
      %v1130 = vld [vmem:[%s7 + $0x40] sm:$0xff]
      %v1131 = vld [vmem:[%s7 + $0x48] sm:$0xff]
      %v1132 = vld [vmem:[%s7 + $0x50] sm:$0xff]
      %v1133 = vld [vmem:[%s7 + $0x58] sm:$0xff]
      %v1134 = vld [vmem:[%s7 + $0x60] sm:$0xff]
      %v1135 = vld [vmem:[%s7 + $0x68] sm:$0xff]
      %v1136 = vld [vmem:[%s7 + $0x70] sm:$0xff]
      %v1137 = vld [vmem:[%s7 + $0x78] sm:$0xff]
      %v1138 = vld [vmem:[%s7 + $0x80] sm:$0xff]
      %v1139 = vld [vmem:[%s7 + $0x88] sm:$0xff]
      %v1140 = vld [vmem:[%s7 + $0x90] sm:$0xff]
      %v1141 = vld [vmem:[%s7 + $0x98] sm:$0xff]
      %v1142 = vld [vmem:[%s7 + $0xa0] sm:$0xff]
      %v1143 = vld [vmem:[%s7 + $0xa8] sm:$0xff]
      %v1144 = vld [vmem:[%s7 + $0xb0] sm:$0xff]
      %v1145 = vld [vmem:[%s7 + $0xb8] sm:$0xff]
      %v1146 = vld [vmem:[%s7 + $0xc0] sm:$0xff]
      %v1147 = vld [vmem:[%s7 + $0xc8] sm:$0xff]
      %v1148 = vld [vmem:[%s7 + $0xd0] sm:$0xff]
      %v1149 = vld [vmem:[%s7 + $0xd8] sm:$0xff]
      %v1150 = vld [vmem:[%s7 + $0xe0] sm:$0xff]
      %v1151 = vld [vmem:[%s7 + $0xe8] sm:$0xff]
      %v1152 = vld [vmem:[%s7 + $0xf0] sm:$0xff]
      %v1153 = vld [vmem:[%s7 + $0xf8] sm:$0xff]
      %1154 = vmatprep.subr.mxu0 %v1123
      %1155 = vmatpush1.msra.mxu0 %v1122
      %1156 = vmatprep.subr.mxu0 %v1125
      %1157 = vmatpush1.msra.mxu0 %v1124
      %1158 = vmatprep.subr.mxu0 %v1127
      %1159 = vmatpush1.msra.mxu0 %v1126
      %1160 = vmatprep.subr.mxu0 %v1129
      %1161 = vmatpush1.msra.mxu0 %v1128
      %1162 = vmatprep.subr.mxu0 %v1131
      %1163 = vmatpush1.msra.mxu0 %v1130
      %1164 = vmatprep.subr.mxu0 %v1133
      %1165 = vmatpush1.msra.mxu0 %v1132
      %1166 = vmatprep.subr.mxu0 %v1135
      %1167 = vmatpush1.msra.mxu0 %v1134
      %1168 = vmatprep.subr.mxu0 %v1137
      %1169 = vmatpush1.msra.mxu0 %v1136
      %1170 = vmatprep.subr.mxu0 %v1139
      %1171 = vmatpush1.msra.mxu0 %v1138
      %1172 = vmatprep.subr.mxu0 %v1141
      %1173 = vmatpush1.msra.mxu0 %v1140
      %1174 = vmatprep.subr.mxu0 %v1143
      %1175 = vmatpush1.msra.mxu0 %v1142
      %1176 = vmatprep.subr.mxu0 %v1145
      %1177 = vmatpush1.msra.mxu0 %v1144
      %1178 = vmatprep.subr.mxu0 %v1147
      %1179 = vmatpush1.msra.mxu0 %v1146
      %1180 = vmatprep.subr.mxu0 %v1149
      %1181 = vmatpush1.msra.mxu0 %v1148
      %1182 = vmatprep.subr.mxu0 %v1151
      %1183 = vmatpush1.msra.mxu0 %v1150
      %1184 = vmatprep.subr.mxu0 %v1153
      %1185 = vmatpush1.msra.mxu0 %v1152
      %1186 = vmatprep.subr.mxu0 0.0
      %1187 = vmatpush1.msra.mxu0 0.0
      %1188 = vmatprep.subr.mxu0 0.0
      %1189 = vmatpush1.msra.mxu0 0.0
      %1190 = vmatprep.subr.mxu0 0.0
      %1191 = vmatpush1.msra.mxu0 0.0
      %1192 = vmatprep.subr.mxu0 0.0
      %1193 = vmatpush1.msra.mxu0 0.0
      %1194 = vmatprep.subr.mxu0 0.0
      %1195 = vmatpush1.msra.mxu0 0.0
      %1196 = vmatprep.subr.mxu0 0.0
      %1197 = vmatpush1.msra.mxu0 0.0
      %1198 = vmatprep.subr.mxu0 0.0
      %1199 = vmatpush1.msra.mxu0 0.0
      %1200 = vmatprep.subr.mxu0 0.0
      %1201 = vmatpush1.msra.mxu0 0.0
      %1202 = vmatprep.subr.mxu0 0.0
      %1203 = vmatpush1.msra.mxu0 0.0
      %1204 = vmatprep.subr.mxu0 0.0
      %1205 = vmatpush1.msra.mxu0 0.0
      %1206 = vmatprep.subr.mxu0 0.0
      %1207 = vmatpush1.msra.mxu0 0.0
      %1208 = vmatprep.subr.mxu0 0.0
      %1209 = vmatpush1.msra.mxu0 0.0
      %1210 = vmatprep.subr.mxu0 0.0
      %1211 = vmatpush1.msra.mxu0 0.0
      %1212 = vmatprep.subr.mxu0 0.0
      %1213 = vmatpush1.msra.mxu0 0.0
      %1214 = vmatprep.subr.mxu0 0.0
      %1215 = vmatpush1.msra.mxu0 0.0
      %1216 = vmatprep.subr.mxu0 0.0
      %1217 = vmatpush1.msra.mxu0 0.0
      %1218 = vmatprep.mubr.f32.mxu0 0.0
      %1219 = vmatmul.mubr.f32.gmra.mrb[0].mxu0 %v1118
      %v1220 = vpop.f32.mrb[0].mxu0
      %v1221 = vadd.f32 0.0, %v1220
      %v1222 = vpop.f32.mrb[0].mxu0
      %v1223 = vadd.f32 0.0, %v1222
      %1224 = vmatprep.mubr.f32.mxu0 0.0
      %1225 = vmatmul.mubr.f32.gmra.mrb[0].mxu0 %v1119
      %v1226 = vpop.f32.mrb[0].mxu0
      %v1227 = vadd.f32 0.0, %v1226
      %v1228 = vpop.f32.mrb[0].mxu0
      %v1229 = vadd.f32 0.0, %v1228
      %1230 = vmatprep.mubr.f32.mxu0 0.0
      %1231 = vmatmul.mubr.f32.gmra.mrb[0].mxu0 %v1120
      %v1232 = vpop.f32.mrb[0].mxu0
      %v1233 = vadd.f32 0.0, %v1232
      %v1234 = vpop.f32.mrb[0].mxu0
      %v1235 = vadd.f32 0.0, %v1234
      %1236 = vmatprep.mubr.f32.mxu0 0.0
      %1237 = vmatmul.mubr.f32.gmra.mrb[0].mxu0 %v1121
      %v1238 = vpop.f32.mrb[0].mxu0
      %v1239 = vadd.f32 0.0, %v1238
      %v1240 = vpop.f32.mrb[0].mxu0
      %v1241 = vadd.f32 0.0, %v1240
      %1242 = vdwg.mxu0
      %1243 = vmatprep.subr.mxu0 0.0
      %1244 = vmatpush1.msra.mxu0 %v1081
      %1245 = vmatprep.subr.mxu0 0.0
      %1246 = vmatpush1.msra.mxu0 %v1082
      %1247 = vmatprep.subr.mxu0 0.0
      %1248 = vmatpush1.msra.mxu0 %v1083
      %1249 = vmatprep.subr.mxu0 0.0
      %1250 = vmatpush1.msra.mxu0 %v1084
      %1251 = vmatprep.subr.mxu0 0.0
      %1252 = vmatpush1.msra.mxu0 %v1085
      %1253 = vmatprep.subr.mxu0 0.0
      %1254 = vmatpush1.msra.mxu0 %v1086
      %1255 = vmatprep.subr.mxu0 0.0
      %1256 = vmatpush1.msra.mxu0 %v1087
      %1257 = vmatprep.subr.mxu0 0.0
      %1258 = vmatpush1.msra.mxu0 %v1088
      %1259 = vmatprep.subr.mxu0 0.0
      %1260 = vmatpush1.msra.mxu0 %v1089
      %1261 = vmatprep.subr.mxu0 0.0
      %1262 = vmatpush1.msra.mxu0 %v1090
      %1263 = vmatprep.subr.mxu0 0.0
      %1264 = vmatpush1.msra.mxu0 %v1091
      %1265 = vmatprep.subr.mxu0 0.0
      %1266 = vmatpush1.msra.mxu0 %v1092
      %1267 = vmatprep.subr.mxu0 0.0
      %1268 = vmatpush1.msra.mxu0 %v1093
      %1269 = vmatprep.subr.mxu0 0.0
      %1270 = vmatpush1.msra.mxu0 %v1094
      %1271 = vmatprep.subr.mxu0 0.0
      %1272 = vmatpush1.msra.mxu0 %v1095
      %1273 = vmatprep.subr.mxu0 0.0
      %1274 = vmatpush1.msra.mxu0 %v1096
      %1275 = vmatprep.subr.mxu0 0.0
      %1276 = vmatpush1.msra.mxu0 0.0
      %1277 = vmatprep.subr.mxu0 0.0
      %1278 = vmatpush1.msra.mxu0 0.0
      %1279 = vmatprep.subr.mxu0 0.0
      %1280 = vmatpush1.msra.mxu0 0.0
      %1281 = vmatprep.subr.mxu0 0.0
      %1282 = vmatpush1.msra.mxu0 0.0
      %1283 = vmatprep.subr.mxu0 0.0
      %1284 = vmatpush1.msra.mxu0 0.0
      %1285 = vmatprep.subr.mxu0 0.0
      %1286 = vmatpush1.msra.mxu0 0.0
      %1287 = vmatprep.subr.mxu0 0.0
      %1288 = vmatpush1.msra.mxu0 0.0
      %1289 = vmatprep.subr.mxu0 0.0
      %1290 = vmatpush1.msra.mxu0 0.0
      %1291 = vmatprep.subr.mxu0 0.0
      %1292 = vmatpush1.msra.mxu0 0.0
      %1293 = vmatprep.subr.mxu0 0.0
      %1294 = vmatpush1.msra.mxu0 0.0
      %1295 = vmatprep.subr.mxu0 0.0
      %1296 = vmatpush1.msra.mxu0 0.0
      %1297 = vmatprep.subr.mxu0 0.0
      %1298 = vmatpush1.msra.mxu0 0.0
      %1299 = vmatprep.subr.mxu0 0.0
      %1300 = vmatpush1.msra.mxu0 0.0
      %1301 = vmatprep.subr.mxu0 0.0
      %1302 = vmatpush1.msra.mxu0 0.0
      %1303 = vmatprep.subr.mxu0 0.0
      %1304 = vmatpush1.msra.mxu0 0.0
      %1305 = vmatprep.subr.mxu0 0.0
      %1306 = vmatpush1.msra.mxu0 0.0
      %1307 = vmatprep.mubr.f32.mxu0 0.0
      %1308 = vmatmul.mubr.f32.gmra.mrb[0].mxu0 %v1077
      %v1309 = vpop.f32.mrb[0].mxu0
      %v1310 = vadd.f32 %v1221, %v1309
      %v1311 = vpop.f32.mrb[0].mxu0
      %1312 = vmatprep.mubr.f32.mxu0 0.0
      %1313 = vmatmul.mubr.f32.gmra.mrb[0].mxu0 %v1078
      %v1314 = vpop.f32.mrb[0].mxu0
      %v1315 = vadd.f32 %v1227, %v1314
      %v1316 = vpop.f32.mrb[0].mxu0
      %1317 = vmatprep.mubr.f32.mxu0 0.0
      %1318 = vmatmul.mubr.f32.gmra.mrb[0].mxu0 %v1079
      %v1319 = vpop.f32.mrb[0].mxu0
      %v1320 = vadd.f32 %v1233, %v1319
      %v1321 = vpop.f32.mrb[0].mxu0
      %1322 = vmatprep.mubr.f32.mxu0 0.0
      %1323 = vmatmul.mubr.f32.gmra.mrb[0].mxu0 %v1080
      %v1324 = vpop.f32.mrb[0].mxu0
      %v1325 = vadd.f32 %v1239, %v1324
      %v1326 = vpop.f32.mrb[0].mxu0
      %1327 = vdwg.mxu0
      %1328 = vmatprep.subr.mxu0 0.0
      %1329 = vmatpush1.msra.mxu0 %v1102
      %1330 = vmatprep.subr.mxu0 0.0
      %1331 = vmatpush1.msra.mxu0 %v1103
      %1332 = vmatprep.subr.mxu0 0.0
      %1333 = vmatpush1.msra.mxu0 %v1104
      %1334 = vmatprep.subr.mxu0 0.0
      %1335 = vmatpush1.msra.mxu0 %v1105
      %1336 = vmatprep.subr.mxu0 0.0
      %1337 = vmatpush1.msra.mxu0 %v1106
      %1338 = vmatprep.subr.mxu0 0.0
      %1339 = vmatpush1.msra.mxu0 %v1107
      %1340 = vmatprep.subr.mxu0 0.0
      %1341 = vmatpush1.msra.mxu0 %v1108
      %1342 = vmatprep.subr.mxu0 0.0
      %1343 = vmatpush1.msra.mxu0 %v1109
      %1344 = vmatprep.subr.mxu0 0.0
      %1345 = vmatpush1.msra.mxu0 %v1110
      %1346 = vmatprep.subr.mxu0 0.0
      %1347 = vmatpush1.msra.mxu0 %v1111
      %1348 = vmatprep.subr.mxu0 0.0
      %1349 = vmatpush1.msra.mxu0 %v1112
      %1350 = vmatprep.subr.mxu0 0.0
      %1351 = vmatpush1.msra.mxu0 %v1113
      %1352 = vmatprep.subr.mxu0 0.0
      %1353 = vmatpush1.msra.mxu0 %v1114
      %1354 = vmatprep.subr.mxu0 0.0
      %1355 = vmatpush1.msra.mxu0 %v1115
      %1356 = vmatprep.subr.mxu0 0.0
      %1357 = vmatpush1.msra.mxu0 %v1116
      %1358 = vmatprep.subr.mxu0 0.0
      %1359 = vmatpush1.msra.mxu0 %v1117
      %1360 = vmatprep.subr.mxu0 0.0
      %1361 = vmatpush1.msra.mxu0 0.0
      %1362 = vmatprep.subr.mxu0 0.0
      %1363 = vmatpush1.msra.mxu0 0.0
      %1364 = vmatprep.subr.mxu0 0.0
      %1365 = vmatpush1.msra.mxu0 0.0
      %1366 = vmatprep.subr.mxu0 0.0
      %1367 = vmatpush1.msra.mxu0 0.0
      %1368 = vmatprep.subr.mxu0 0.0
      %1369 = vmatpush1.msra.mxu0 0.0
      %1370 = vmatprep.subr.mxu0 0.0
      %1371 = vmatpush1.msra.mxu0 0.0
      %1372 = vmatprep.subr.mxu0 0.0
      %1373 = vmatpush1.msra.mxu0 0.0
      %1374 = vmatprep.subr.mxu0 0.0
      %1375 = vmatpush1.msra.mxu0 0.0
      %1376 = vmatprep.subr.mxu0 0.0
      %1377 = vmatpush1.msra.mxu0 0.0
      %1378 = vmatprep.subr.mxu0 0.0
      %1379 = vmatpush1.msra.mxu0 0.0
      %1380 = vmatprep.subr.mxu0 0.0
      %1381 = vmatpush1.msra.mxu0 0.0
      %1382 = vmatprep.subr.mxu0 0.0
      %1383 = vmatpush1.msra.mxu0 0.0
      %1384 = vmatprep.subr.mxu0 0.0
      %1385 = vmatpush1.msra.mxu0 0.0
      %1386 = vmatprep.subr.mxu0 0.0
      %1387 = vmatpush1.msra.mxu0 0.0
      %1388 = vmatprep.subr.mxu0 0.0
      %1389 = vmatpush1.msra.mxu0 0.0
      %1390 = vmatprep.subr.mxu0 0.0
      %1391 = vmatpush1.msra.mxu0 0.0
      %1392 = vmatprep.mubr.f32.mxu0 0.0
      %1393 = vmatmul.mubr.f32.gmra.mrb[0].mxu0 %v1098
      %v1394 = vpop.f32.mrb[0].mxu0
      %v1395 = vadd.f32 %v1223, %v1394
      %v1396 = vpop.f32.mrb[0].mxu0
      %1397 = vmatprep.mubr.f32.mxu0 0.0
      %1398 = vmatmul.mubr.f32.gmra.mrb[0].mxu0 %v1099
      %v1399 = vpop.f32.mrb[0].mxu0
      %v1400 = vadd.f32 %v1229, %v1399
      %v1401 = vpop.f32.mrb[0].mxu0
      %1402 = vmatprep.mubr.f32.mxu0 0.0
      %1403 = vmatmul.mubr.f32.gmra.mrb[0].mxu0 %v1100
      %v1404 = vpop.f32.mrb[0].mxu0
      %v1405 = vadd.f32 %v1235, %v1404
      %v1406 = vpop.f32.mrb[0].mxu0
      %1407 = vmatprep.mubr.f32.mxu0 0.0
      %1408 = vmatmul.mubr.f32.gmra.mrb[0].mxu0 %v1101
      %v1409 = vpop.f32.mrb[0].mxu0
      %v1410 = vadd.f32 %v1241, %v1409
      %v1411 = vpop.f32.mrb[0].mxu0
      %1412 = vdwg.mxu0
      %v1413 = vld [vmem:[%s1072 + $0x7] sm:$0xff]
      %v1414 = vld [vmem:[%s1072 + $0xf] sm:$0xff]
      %v1415 = vld [vmem:[%s1072 + $0x27] sm:$0xff]
      %v1416 = vld [vmem:[%s1072 + $0x2f] sm:$0xff]
      %v1417 = vld [vmem:[%s8] sm:$0xff]
      %v1418 = vld [vmem:[%s8 + $0x8] sm:$0xff]
      %v1419 = vld [vmem:[%s8 + $0x10] sm:$0xff]
      %v1420 = vld [vmem:[%s8 + $0x18] sm:$0xff]
      %v1421 = vld [vmem:[%s8 + $0x20] sm:$0xff]
      %v1422 = vld [vmem:[%s8 + $0x28] sm:$0xff]
      %v1423 = vld [vmem:[%s8 + $0x30] sm:$0xff]
      %v1424 = vld [vmem:[%s8 + $0x38] sm:$0xff]
      %v1425 = vld [vmem:[%s8 + $0x40] sm:$0xff]
      %v1426 = vld [vmem:[%s8 + $0x48] sm:$0xff]
      %v1427 = vld [vmem:[%s8 + $0x50] sm:$0xff]
      %v1428 = vld [vmem:[%s8 + $0x58] sm:$0xff]
      %v1429 = vld [vmem:[%s8 + $0x60] sm:$0xff]
      %v1430 = vld [vmem:[%s8 + $0x68] sm:$0xff]
      %v1431 = vld [vmem:[%s8 + $0x70] sm:$0xff]
      %v1432 = vld [vmem:[%s8 + $0x78] sm:$0xff]
      %v1433 = vld [vmem:[%s8 + $0x80] sm:$0xff]
      %v1434 = vld [vmem:[%s8 + $0x88] sm:$0xff]
      %v1435 = vld [vmem:[%s8 + $0x90] sm:$0xff]
      %v1436 = vld [vmem:[%s8 + $0x98] sm:$0xff]
      %v1437 = vld [vmem:[%s8 + $0xa0] sm:$0xff]
      %v1438 = vld [vmem:[%s8 + $0xa8] sm:$0xff]
      %v1439 = vld [vmem:[%s8 + $0xb0] sm:$0xff]
      %v1440 = vld [vmem:[%s8 + $0xb8] sm:$0xff]
      %v1441 = vld [vmem:[%s8 + $0xc0] sm:$0xff]
      %v1442 = vld [vmem:[%s8 + $0xc8] sm:$0xff]
      %v1443 = vld [vmem:[%s8 + $0xd0] sm:$0xff]
      %v1444 = vld [vmem:[%s8 + $0xd8] sm:$0xff]
      %v1445 = vld [vmem:[%s8 + $0xe0] sm:$0xff]
      %v1446 = vld [vmem:[%s8 + $0xe8] sm:$0xff]
      %v1447 = vld [vmem:[%s8 + $0xf0] sm:$0xff]
      %v1448 = vld [vmem:[%s8 + $0xf8] sm:$0xff]
      %1449 = vmatprep.subr.mxu0 %v1418
      %1450 = vmatpush1.msra.mxu0 %v1417
      %1451 = vmatprep.subr.mxu0 %v1420
      %1452 = vmatpush1.msra.mxu0 %v1419
      %1453 = vmatprep.subr.mxu0 %v1422
      %1454 = vmatpush1.msra.mxu0 %v1421
      %1455 = vmatprep.subr.mxu0 %v1424
      %1456 = vmatpush1.msra.mxu0 %v1423
      %1457 = vmatprep.subr.mxu0 %v1426
      %1458 = vmatpush1.msra.mxu0 %v1425
      %1459 = vmatprep.subr.mxu0 %v1428
      %1460 = vmatpush1.msra.mxu0 %v1427
      %1461 = vmatprep.subr.mxu0 %v1430
      %1462 = vmatpush1.msra.mxu0 %v1429
      %1463 = vmatprep.subr.mxu0 %v1432
      %1464 = vmatpush1.msra.mxu0 %v1431
      %1465 = vmatprep.subr.mxu0 %v1434
      %1466 = vmatpush1.msra.mxu0 %v1433
      %1467 = vmatprep.subr.mxu0 %v1436
      %1468 = vmatpush1.msra.mxu0 %v1435
      %1469 = vmatprep.subr.mxu0 %v1438
      %1470 = vmatpush1.msra.mxu0 %v1437
      %1471 = vmatprep.subr.mxu0 %v1440
      %1472 = vmatpush1.msra.mxu0 %v1439
      %1473 = vmatprep.subr.mxu0 %v1442
      %1474 = vmatpush1.msra.mxu0 %v1441
      %1475 = vmatprep.subr.mxu0 %v1444
      %1476 = vmatpush1.msra.mxu0 %v1443
      %1477 = vmatprep.subr.mxu0 %v1446
      %1478 = vmatpush1.msra.mxu0 %v1445
      %1479 = vmatprep.subr.mxu0 %v1448
      %1480 = vmatpush1.msra.mxu0 %v1447
      %1481 = vmatprep.subr.mxu0 0.0
      %1482 = vmatpush1.msra.mxu0 0.0
      %1483 = vmatprep.subr.mxu0 0.0
      %1484 = vmatpush1.msra.mxu0 0.0
      %1485 = vmatprep.subr.mxu0 0.0
      %1486 = vmatpush1.msra.mxu0 0.0
      %1487 = vmatprep.subr.mxu0 0.0
      %1488 = vmatpush1.msra.mxu0 0.0
      %1489 = vmatprep.subr.mxu0 0.0
      %1490 = vmatpush1.msra.mxu0 0.0
      %1491 = vmatprep.subr.mxu0 0.0
      %1492 = vmatpush1.msra.mxu0 0.0
      %1493 = vmatprep.subr.mxu0 0.0
      %1494 = vmatpush1.msra.mxu0 0.0
      %1495 = vmatprep.subr.mxu0 0.0
      %1496 = vmatpush1.msra.mxu0 0.0
      %1497 = vmatprep.subr.mxu0 0.0
      %1498 = vmatpush1.msra.mxu0 0.0
      %1499 = vmatprep.subr.mxu0 0.0
      %1500 = vmatpush1.msra.mxu0 0.0
      %1501 = vmatprep.subr.mxu0 0.0
      %1502 = vmatpush1.msra.mxu0 0.0
      %1503 = vmatprep.subr.mxu0 0.0
      %1504 = vmatpush1.msra.mxu0 0.0
      %1505 = vmatprep.subr.mxu0 0.0
      %1506 = vmatpush1.msra.mxu0 0.0
      %1507 = vmatprep.subr.mxu0 0.0
      %1508 = vmatpush1.msra.mxu0 0.0
      %1509 = vmatprep.subr.mxu0 0.0
      %1510 = vmatpush1.msra.mxu0 0.0
      %1511 = vmatprep.subr.mxu0 0.0
      %1512 = vmatpush1.msra.mxu0 0.0
      %1513 = vmatprep.mubr.f32.mxu0 0.0
      %1514 = vmatmul.mubr.f32.gmra.mrb[0].mxu0 %v1413
      %v1515 = vpop.f32.mrb[0].mxu0
      %v1516 = vadd.f32 0.0, %v1515
      %v1517 = vpop.f32.mrb[0].mxu0
      %v1518 = vadd.f32 0.0, %v1517
      %1519 = vmatprep.mubr.f32.mxu0 0.0
      %1520 = vmatmul.mubr.f32.gmra.mrb[0].mxu0 %v1414
      %v1521 = vpop.f32.mrb[0].mxu0
      %v1522 = vadd.f32 0.0, %v1521
      %v1523 = vpop.f32.mrb[0].mxu0
      %v1524 = vadd.f32 0.0, %v1523
      %1525 = vmatprep.mubr.f32.mxu0 0.0
      %1526 = vmatmul.mubr.f32.gmra.mrb[0].mxu0 %v1415
      %v1527 = vpop.f32.mrb[0].mxu0
      %v1528 = vadd.f32 0.0, %v1527
      %v1529 = vpop.f32.mrb[0].mxu0
      %v1530 = vadd.f32 0.0, %v1529
      %1531 = vmatprep.mubr.f32.mxu0 0.0
      %1532 = vmatmul.mubr.f32.gmra.mrb[0].mxu0 %v1416
      %v1533 = vpop.f32.mrb[0].mxu0
      %v1534 = vadd.f32 0.0, %v1533
      %v1535 = vpop.f32.mrb[0].mxu0
      %v1536 = vadd.f32 0.0, %v1535
      %1537 = vdwg.mxu0
      %v1538 = vadd.f32 %v1310, %v1516
      %v1539 = vadd.f32 %v1315, %v1522
      %v1540 = vadd.f32 %v1320, %v1528
      %v1541 = vadd.f32 %v1325, %v1534
      %v1542 = vadd.f32 %v1395, %v1518
      %v1543 = vadd.f32 %v1400, %v1524
      %v1544 = vadd.f32 %v1405, %v1530
      %v1545 = vadd.f32 %v1410, %v1536
      %v1546 = vld [vmem:[#allocation3 + $0x8] sm:$0xff]
      %v1547 = vld [vmem:[#allocation3 + $0x10] sm:$0xff]
      %v1548 = vld [vmem:[#allocation3 + $0x28] sm:$0xff]
      %v1549 = vld [vmem:[#allocation3 + $0x30] sm:$0xff]
      %s1550 = scalar_lea.vmem %s6, 128
      %v1551 = vld [vmem:[%s1550] sm:$0xff]
      %v1552 = vld [vmem:[%s1550 + $0x8] sm:$0xff]
      %v1553 = vld [vmem:[%s1550 + $0x10] sm:$0xff]
      %v1554 = vld [vmem:[%s1550 + $0x18] sm:$0xff]
      %v1555 = vld [vmem:[%s1550 + $0x20] sm:$0xff]
      %v1556 = vld [vmem:[%s1550 + $0x28] sm:$0xff]
      %v1557 = vld [vmem:[%s1550 + $0x30] sm:$0xff]
      %v1558 = vld [vmem:[%s1550 + $0x38] sm:$0xff]
      %v1559 = vld [vmem:[%s1550 + $0x40] sm:$0xff]
      %v1560 = vld [vmem:[%s1550 + $0x48] sm:$0xff]
      %v1561 = vld [vmem:[%s1550 + $0x50] sm:$0xff]
      %v1562 = vld [vmem:[%s1550 + $0x58] sm:$0xff]
      %v1563 = vld [vmem:[%s1550 + $0x60] sm:$0xff]
      %v1564 = vld [vmem:[%s1550 + $0x68] sm:$0xff]
      %v1565 = vld [vmem:[%s1550 + $0x70] sm:$0xff]
      %v1566 = vld [vmem:[%s1550 + $0x78] sm:$0xff]
      %1567 = vmatprep.subr.mxu0 0.0
      %1568 = vmatpush1.msra.mxu0 %v1551
      %1569 = vmatprep.subr.mxu0 0.0
      %1570 = vmatpush1.msra.mxu0 %v1552
      %1571 = vmatprep.subr.mxu0 0.0
      %1572 = vmatpush1.msra.mxu0 %v1553
      %1573 = vmatprep.subr.mxu0 0.0
      %1574 = vmatpush1.msra.mxu0 %v1554
      %1575 = vmatprep.subr.mxu0 0.0
      %1576 = vmatpush1.msra.mxu0 %v1555
      %1577 = vmatprep.subr.mxu0 0.0
      %1578 = vmatpush1.msra.mxu0 %v1556
      %1579 = vmatprep.subr.mxu0 0.0
      %1580 = vmatpush1.msra.mxu0 %v1557
      %1581 = vmatprep.subr.mxu0 0.0
      %1582 = vmatpush1.msra.mxu0 %v1558
      %1583 = vmatprep.subr.mxu0 0.0
      %1584 = vmatpush1.msra.mxu0 %v1559
      %1585 = vmatprep.subr.mxu0 0.0
      %1586 = vmatpush1.msra.mxu0 %v1560
      %1587 = vmatprep.subr.mxu0 0.0
      %1588 = vmatpush1.msra.mxu0 %v1561
      %1589 = vmatprep.subr.mxu0 0.0
      %1590 = vmatpush1.msra.mxu0 %v1562
      %1591 = vmatprep.subr.mxu0 0.0
      %1592 = vmatpush1.msra.mxu0 %v1563
      %1593 = vmatprep.subr.mxu0 0.0
      %1594 = vmatpush1.msra.mxu0 %v1564
      %1595 = vmatprep.subr.mxu0 0.0
      %1596 = vmatpush1.msra.mxu0 %v1565
      %1597 = vmatprep.subr.mxu0 0.0
      %1598 = vmatpush1.msra.mxu0 %v1566
      %1599 = vmatprep.subr.mxu0 0.0
      %1600 = vmatpush1.msra.mxu0 0.0
      %1601 = vmatprep.subr.mxu0 0.0
      %1602 = vmatpush1.msra.mxu0 0.0
      %1603 = vmatprep.subr.mxu0 0.0
      %1604 = vmatpush1.msra.mxu0 0.0
      %1605 = vmatprep.subr.mxu0 0.0
      %1606 = vmatpush1.msra.mxu0 0.0
      %1607 = vmatprep.subr.mxu0 0.0
      %1608 = vmatpush1.msra.mxu0 0.0
      %1609 = vmatprep.subr.mxu0 0.0
      %1610 = vmatpush1.msra.mxu0 0.0
      %1611 = vmatprep.subr.mxu0 0.0
      %1612 = vmatpush1.msra.mxu0 0.0
      %1613 = vmatprep.subr.mxu0 0.0
      %1614 = vmatpush1.msra.mxu0 0.0
      %1615 = vmatprep.subr.mxu0 0.0
      %1616 = vmatpush1.msra.mxu0 0.0
      %1617 = vmatprep.subr.mxu0 0.0
      %1618 = vmatpush1.msra.mxu0 0.0
      %1619 = vmatprep.subr.mxu0 0.0
      %1620 = vmatpush1.msra.mxu0 0.0
      %1621 = vmatprep.subr.mxu0 0.0
      %1622 = vmatpush1.msra.mxu0 0.0
      %1623 = vmatprep.subr.mxu0 0.0
      %1624 = vmatpush1.msra.mxu0 0.0
      %1625 = vmatprep.subr.mxu0 0.0
      %1626 = vmatpush1.msra.mxu0 0.0
      %1627 = vmatprep.subr.mxu0 0.0
      %1628 = vmatpush1.msra.mxu0 0.0
      %1629 = vmatprep.subr.mxu0 0.0
      %1630 = vmatpush1.msra.mxu0 0.0
      %1631 = vmatprep.mubr.f32.mxu0 0.0
      %1632 = vmatmul.mubr.f32.gmra.mrb[0].mxu0 %v1546
      %v1633 = vpop.f32.mrb[0].mxu0
      %v1634 = vadd.f32 0.0, %v1633
      %v1635 = vpop.f32.mrb[0].mxu0
      %1636 = vmatprep.mubr.f32.mxu0 0.0
      %1637 = vmatmul.mubr.f32.gmra.mrb[0].mxu0 %v1547
      %v1638 = vpop.f32.mrb[0].mxu0
      %v1639 = vadd.f32 0.0, %v1638
      %v1640 = vpop.f32.mrb[0].mxu0
      %1641 = vmatprep.mubr.f32.mxu0 0.0
      %1642 = vmatmul.mubr.f32.gmra.mrb[0].mxu0 %v1548
      %v1643 = vpop.f32.mrb[0].mxu0
      %v1644 = vadd.f32 0.0, %v1643
      %v1645 = vpop.f32.mrb[0].mxu0
      %1646 = vmatprep.mubr.f32.mxu0 0.0
      %1647 = vmatmul.mubr.f32.gmra.mrb[0].mxu0 %v1549
      %v1648 = vpop.f32.mrb[0].mxu0
      %v1649 = vadd.f32 0.0, %v1648
      %v1650 = vpop.f32.mrb[0].mxu0
      %1651 = vdwg.mxu0
      %v1652 = vadd.f32 %v1538, %v1634
      %v1653 = vadd.f32 %v1539, %v1639
      %v1654 = vadd.f32 %v1540, %v1644
      %v1655 = vadd.f32 %v1541, %v1649
      %v1656 = vld [vmem:[%s1097 + $0x8] sm:$0xff]
      %v1657 = vld [vmem:[%s1097 + $0x10] sm:$0xff]
      %v1658 = vld [vmem:[%s1097 + $0x28] sm:$0xff]
      %v1659 = vld [vmem:[%s1097 + $0x30] sm:$0xff]
      %s1660 = scalar_lea.vmem %s9, 128
      %v1661 = vld [vmem:[%s1660] sm:$0xff]
      %v1662 = vld [vmem:[%s1660 + $0x8] sm:$0xff]
      %v1663 = vld [vmem:[%s1660 + $0x10] sm:$0xff]
      %v1664 = vld [vmem:[%s1660 + $0x18] sm:$0xff]
      %v1665 = vld [vmem:[%s1660 + $0x20] sm:$0xff]
      %v1666 = vld [vmem:[%s1660 + $0x28] sm:$0xff]
      %v1667 = vld [vmem:[%s1660 + $0x30] sm:$0xff]
      %v1668 = vld [vmem:[%s1660 + $0x38] sm:$0xff]
      %v1669 = vld [vmem:[%s1660 + $0x40] sm:$0xff]
      %v1670 = vld [vmem:[%s1660 + $0x48] sm:$0xff]
      %v1671 = vld [vmem:[%s1660 + $0x50] sm:$0xff]
      %v1672 = vld [vmem:[%s1660 + $0x58] sm:$0xff]
      %v1673 = vld [vmem:[%s1660 + $0x60] sm:$0xff]
      %v1674 = vld [vmem:[%s1660 + $0x68] sm:$0xff]
      %v1675 = vld [vmem:[%s1660 + $0x70] sm:$0xff]
      %v1676 = vld [vmem:[%s1660 + $0x78] sm:$0xff]
      %1677 = vmatprep.subr.mxu0 0.0
      %1678 = vmatpush1.msra.mxu0 %v1661
      %1679 = vmatprep.subr.mxu0 0.0
      %1680 = vmatpush1.msra.mxu0 %v1662
      %1681 = vmatprep.subr.mxu0 0.0
      %1682 = vmatpush1.msra.mxu0 %v1663
      %1683 = vmatprep.subr.mxu0 0.0
      %1684 = vmatpush1.msra.mxu0 %v1664
      %1685 = vmatprep.subr.mxu0 0.0
      %1686 = vmatpush1.msra.mxu0 %v1665
      %1687 = vmatprep.subr.mxu0 0.0
      %1688 = vmatpush1.msra.mxu0 %v1666
      %1689 = vmatprep.subr.mxu0 0.0
      %1690 = vmatpush1.msra.mxu0 %v1667
      %1691 = vmatprep.subr.mxu0 0.0
      %1692 = vmatpush1.msra.mxu0 %v1668
      %1693 = vmatprep.subr.mxu0 0.0
      %1694 = vmatpush1.msra.mxu0 %v1669
      %1695 = vmatprep.subr.mxu0 0.0
      %1696 = vmatpush1.msra.mxu0 %v1670
      %1697 = vmatprep.subr.mxu0 0.0
      %1698 = vmatpush1.msra.mxu0 %v1671
      %1699 = vmatprep.subr.mxu0 0.0
      %1700 = vmatpush1.msra.mxu0 %v1672
      %1701 = vmatprep.subr.mxu0 0.0
      %1702 = vmatpush1.msra.mxu0 %v1673
      %1703 = vmatprep.subr.mxu0 0.0
      %1704 = vmatpush1.msra.mxu0 %v1674
      %1705 = vmatprep.subr.mxu0 0.0
      %1706 = vmatpush1.msra.mxu0 %v1675
      %1707 = vmatprep.subr.mxu0 0.0
      %1708 = vmatpush1.msra.mxu0 %v1676
      %1709 = vmatprep.subr.mxu0 0.0
      %1710 = vmatpush1.msra.mxu0 0.0
      %1711 = vmatprep.subr.mxu0 0.0
      %1712 = vmatpush1.msra.mxu0 0.0
      %1713 = vmatprep.subr.mxu0 0.0
      %1714 = vmatpush1.msra.mxu0 0.0
      %1715 = vmatprep.subr.mxu0 0.0
      %1716 = vmatpush1.msra.mxu0 0.0
      %1717 = vmatprep.subr.mxu0 0.0
      %1718 = vmatpush1.msra.mxu0 0.0
      %1719 = vmatprep.subr.mxu0 0.0
      %1720 = vmatpush1.msra.mxu0 0.0
      %1721 = vmatprep.subr.mxu0 0.0
      %1722 = vmatpush1.msra.mxu0 0.0
      %1723 = vmatprep.subr.mxu0 0.0
      %1724 = vmatpush1.msra.mxu0 0.0
      %1725 = vmatprep.subr.mxu0 0.0
      %1726 = vmatpush1.msra.mxu0 0.0
      %1727 = vmatprep.subr.mxu0 0.0
      %1728 = vmatpush1.msra.mxu0 0.0
      %1729 = vmatprep.subr.mxu0 0.0
      %1730 = vmatpush1.msra.mxu0 0.0
      %1731 = vmatprep.subr.mxu0 0.0
      %1732 = vmatpush1.msra.mxu0 0.0
      %1733 = vmatprep.subr.mxu0 0.0
      %1734 = vmatpush1.msra.mxu0 0.0
      %1735 = vmatprep.subr.mxu0 0.0
      %1736 = vmatpush1.msra.mxu0 0.0
      %1737 = vmatprep.subr.mxu0 0.0
      %1738 = vmatpush1.msra.mxu0 0.0
      %1739 = vmatprep.subr.mxu0 0.0
      %1740 = vmatpush1.msra.mxu0 0.0
      %1741 = vmatprep.mubr.f32.mxu0 0.0
      %1742 = vmatmul.mubr.f32.gmra.mrb[0].mxu0 %v1656
      %v1743 = vpop.f32.mrb[0].mxu0
      %v1744 = vadd.f32 0.0, %v1743
      %v1745 = vpop.f32.mrb[0].mxu0
      %1746 = vmatprep.mubr.f32.mxu0 0.0
      %1747 = vmatmul.mubr.f32.gmra.mrb[0].mxu0 %v1657
      %v1748 = vpop.f32.mrb[0].mxu0
      %v1749 = vadd.f32 0.0, %v1748
      %v1750 = vpop.f32.mrb[0].mxu0
      %1751 = vmatprep.mubr.f32.mxu0 0.0
      %1752 = vmatmul.mubr.f32.gmra.mrb[0].mxu0 %v1658
      %v1753 = vpop.f32.mrb[0].mxu0
      %v1754 = vadd.f32 0.0, %v1753
      %v1755 = vpop.f32.mrb[0].mxu0
      %1756 = vmatprep.mubr.f32.mxu0 0.0
      %1757 = vmatmul.mubr.f32.gmra.mrb[0].mxu0 %v1659
      %v1758 = vpop.f32.mrb[0].mxu0
      %v1759 = vadd.f32 0.0, %v1758
      %v1760 = vpop.f32.mrb[0].mxu0
      %1761 = vdwg.mxu0
      %v1762 = vadd.f32 %v1542, %v1744
      %v1763 = vadd.f32 %v1543, %v1749
      %v1764 = vadd.f32 %v1544, %v1754
      %v1765 = vadd.f32 %v1545, %v1759
      %v1766 = vld [vmem:[#allocation2 + $0x8] sm:$0xff]
      %v1767 = vld [vmem:[#allocation2 + $0x10] sm:$0xff]
      %v1768 = vld [vmem:[#allocation2 + $0x28] sm:$0xff]
      %v1769 = vld [vmem:[#allocation2 + $0x30] sm:$0xff]
      %s1770 = scalar_lea.vmem %s7, 256
      %v1771 = vld [vmem:[%s1770] sm:$0xff]
      %v1772 = vld [vmem:[%s1770 + $0x8] sm:$0xff]
      %v1773 = vld [vmem:[%s1770 + $0x10] sm:$0xff]
      %v1774 = vld [vmem:[%s1770 + $0x18] sm:$0xff]
      %v1775 = vld [vmem:[%s1770 + $0x20] sm:$0xff]
      %v1776 = vld [vmem:[%s1770 + $0x28] sm:$0xff]
      %v1777 = vld [vmem:[%s1770 + $0x30] sm:$0xff]
      %v1778 = vld [vmem:[%s1770 + $0x38] sm:$0xff]
      %v1779 = vld [vmem:[%s1770 + $0x40] sm:$0xff]
      %v1780 = vld [vmem:[%s1770 + $0x48] sm:$0xff]
      %v1781 = vld [vmem:[%s1770 + $0x50] sm:$0xff]
      %v1782 = vld [vmem:[%s1770 + $0x58] sm:$0xff]
      %v1783 = vld [vmem:[%s1770 + $0x60] sm:$0xff]
      %v1784 = vld [vmem:[%s1770 + $0x68] sm:$0xff]
      %v1785 = vld [vmem:[%s1770 + $0x70] sm:$0xff]
      %v1786 = vld [vmem:[%s1770 + $0x78] sm:$0xff]
      %v1787 = vld [vmem:[%s1770 + $0x80] sm:$0xff]
      %v1788 = vld [vmem:[%s1770 + $0x88] sm:$0xff]
      %v1789 = vld [vmem:[%s1770 + $0x90] sm:$0xff]
      %v1790 = vld [vmem:[%s1770 + $0x98] sm:$0xff]
      %v1791 = vld [vmem:[%s1770 + $0xa0] sm:$0xff]
      %v1792 = vld [vmem:[%s1770 + $0xa8] sm:$0xff]
      %v1793 = vld [vmem:[%s1770 + $0xb0] sm:$0xff]
      %v1794 = vld [vmem:[%s1770 + $0xb8] sm:$0xff]
      %v1795 = vld [vmem:[%s1770 + $0xc0] sm:$0xff]
      %v1796 = vld [vmem:[%s1770 + $0xc8] sm:$0xff]
      %v1797 = vld [vmem:[%s1770 + $0xd0] sm:$0xff]
      %v1798 = vld [vmem:[%s1770 + $0xd8] sm:$0xff]
      %v1799 = vld [vmem:[%s1770 + $0xe0] sm:$0xff]
      %v1800 = vld [vmem:[%s1770 + $0xe8] sm:$0xff]
      %v1801 = vld [vmem:[%s1770 + $0xf0] sm:$0xff]
      %v1802 = vld [vmem:[%s1770 + $0xf8] sm:$0xff]
      %1803 = vmatprep.subr.mxu0 %v1772
      %1804 = vmatpush1.msra.mxu0 %v1771
      %1805 = vmatprep.subr.mxu0 %v1774
      %1806 = vmatpush1.msra.mxu0 %v1773
      %1807 = vmatprep.subr.mxu0 %v1776
      %1808 = vmatpush1.msra.mxu0 %v1775
      %1809 = vmatprep.subr.mxu0 %v1778
      %1810 = vmatpush1.msra.mxu0 %v1777
      %1811 = vmatprep.subr.mxu0 %v1780
      %1812 = vmatpush1.msra.mxu0 %v1779
      %1813 = vmatprep.subr.mxu0 %v1782
      %1814 = vmatpush1.msra.mxu0 %v1781
      %1815 = vmatprep.subr.mxu0 %v1784
      %1816 = vmatpush1.msra.mxu0 %v1783
      %1817 = vmatprep.subr.mxu0 %v1786
      %1818 = vmatpush1.msra.mxu0 %v1785
      %1819 = vmatprep.subr.mxu0 %v1788
      %1820 = vmatpush1.msra.mxu0 %v1787
      %1821 = vmatprep.subr.mxu0 %v1790
      %1822 = vmatpush1.msra.mxu0 %v1789
      %1823 = vmatprep.subr.mxu0 %v1792
      %1824 = vmatpush1.msra.mxu0 %v1791
      %1825 = vmatprep.subr.mxu0 %v1794
      %1826 = vmatpush1.msra.mxu0 %v1793
      %1827 = vmatprep.subr.mxu0 %v1796
      %1828 = vmatpush1.msra.mxu0 %v1795
      %1829 = vmatprep.subr.mxu0 %v1798
      %1830 = vmatpush1.msra.mxu0 %v1797
      %1831 = vmatprep.subr.mxu0 %v1800
      %1832 = vmatpush1.msra.mxu0 %v1799
      %1833 = vmatprep.subr.mxu0 %v1802
      %1834 = vmatpush1.msra.mxu0 %v1801
      %1835 = vmatprep.subr.mxu0 0.0
      %1836 = vmatpush1.msra.mxu0 0.0
      %1837 = vmatprep.subr.mxu0 0.0
      %1838 = vmatpush1.msra.mxu0 0.0
      %1839 = vmatprep.subr.mxu0 0.0
      %1840 = vmatpush1.msra.mxu0 0.0
      %1841 = vmatprep.subr.mxu0 0.0
      %1842 = vmatpush1.msra.mxu0 0.0
      %1843 = vmatprep.subr.mxu0 0.0
      %1844 = vmatpush1.msra.mxu0 0.0
      %1845 = vmatprep.subr.mxu0 0.0
      %1846 = vmatpush1.msra.mxu0 0.0
      %1847 = vmatprep.subr.mxu0 0.0
      %1848 = vmatpush1.msra.mxu0 0.0
      %1849 = vmatprep.subr.mxu0 0.0
      %1850 = vmatpush1.msra.mxu0 0.0
      %1851 = vmatprep.subr.mxu0 0.0
      %1852 = vmatpush1.msra.mxu0 0.0
      %1853 = vmatprep.subr.mxu0 0.0
      %1854 = vmatpush1.msra.mxu0 0.0
      %1855 = vmatprep.subr.mxu0 0.0
      %1856 = vmatpush1.msra.mxu0 0.0
      %1857 = vmatprep.subr.mxu0 0.0
      %1858 = vmatpush1.msra.mxu0 0.0
      %1859 = vmatprep.subr.mxu0 0.0
      %1860 = vmatpush1.msra.mxu0 0.0
      %1861 = vmatprep.subr.mxu0 0.0
      %1862 = vmatpush1.msra.mxu0 0.0
      %1863 = vmatprep.subr.mxu0 0.0
      %1864 = vmatpush1.msra.mxu0 0.0
      %1865 = vmatprep.subr.mxu0 0.0
      %1866 = vmatpush1.msra.mxu0 0.0
      %1867 = vmatprep.mubr.f32.mxu0 0.0
      %1868 = vmatmul.mubr.f32.gmra.mrb[0].mxu0 %v1766
      %v1869 = vpop.f32.mrb[0].mxu0
      %v1870 = vadd.f32 0.0, %v1869
      %v1871 = vpop.f32.mrb[0].mxu0
      %v1872 = vadd.f32 0.0, %v1871
      %1873 = vmatprep.mubr.f32.mxu0 0.0
      %1874 = vmatmul.mubr.f32.gmra.mrb[0].mxu0 %v1767
      %v1875 = vpop.f32.mrb[0].mxu0
      %v1876 = vadd.f32 0.0, %v1875
      %v1877 = vpop.f32.mrb[0].mxu0
      %v1878 = vadd.f32 0.0, %v1877
      %1879 = vmatprep.mubr.f32.mxu0 0.0
      %1880 = vmatmul.mubr.f32.gmra.mrb[0].mxu0 %v1768
      %v1881 = vpop.f32.mrb[0].mxu0
      %v1882 = vadd.f32 0.0, %v1881
      %v1883 = vpop.f32.mrb[0].mxu0
      %v1884 = vadd.f32 0.0, %v1883
      %1885 = vmatprep.mubr.f32.mxu0 0.0
      %1886 = vmatmul.mubr.f32.gmra.mrb[0].mxu0 %v1769
      %v1887 = vpop.f32.mrb[0].mxu0
      %v1888 = vadd.f32 0.0, %v1887
      %v1889 = vpop.f32.mrb[0].mxu0
      %v1890 = vadd.f32 0.0, %v1889
      %1891 = vdwg.mxu0
      %v1892 = vadd.f32 %v1652, %v1870
      %v1893 = vadd.f32 %v1653, %v1876
      %v1894 = vadd.f32 %v1654, %v1882
      %v1895 = vadd.f32 %v1655, %v1888
      %v1896 = vadd.f32 %v1762, %v1872
      %v1897 = vadd.f32 %v1763, %v1878
      %v1898 = vadd.f32 %v1764, %v1884
      %v1899 = vadd.f32 %v1765, %v1890
      %v1900 = vld [vmem:[%s1072 + $0x8] sm:$0xff]
      %v1901 = vld [vmem:[%s1072 + $0x10] sm:$0xff]
      %v1902 = vld [vmem:[%s1072 + $0x28] sm:$0xff]
      %v1903 = vld [vmem:[%s1072 + $0x30] sm:$0xff]
      %s1904 = scalar_lea.vmem %s8, 256
      %v1905 = vld [vmem:[%s1904] sm:$0xff]
      %v1906 = vld [vmem:[%s1904 + $0x8] sm:$0xff]
      %v1907 = vld [vmem:[%s1904 + $0x10] sm:$0xff]
      %v1908 = vld [vmem:[%s1904 + $0x18] sm:$0xff]
      %v1909 = vld [vmem:[%s1904 + $0x20] sm:$0xff]
      %v1910 = vld [vmem:[%s1904 + $0x28] sm:$0xff]
      %v1911 = vld [vmem:[%s1904 + $0x30] sm:$0xff]
      %v1912 = vld [vmem:[%s1904 + $0x38] sm:$0xff]
      %v1913 = vld [vmem:[%s1904 + $0x40] sm:$0xff]
      %v1914 = vld [vmem:[%s1904 + $0x48] sm:$0xff]
      %v1915 = vld [vmem:[%s1904 + $0x50] sm:$0xff]
      %v1916 = vld [vmem:[%s1904 + $0x58] sm:$0xff]
      %v1917 = vld [vmem:[%s1904 + $0x60] sm:$0xff]
      %v1918 = vld [vmem:[%s1904 + $0x68] sm:$0xff]
      %v1919 = vld [vmem:[%s1904 + $0x70] sm:$0xff]
      %v1920 = vld [vmem:[%s1904 + $0x78] sm:$0xff]
      %v1921 = vld [vmem:[%s1904 + $0x80] sm:$0xff]
      %v1922 = vld [vmem:[%s1904 + $0x88] sm:$0xff]
      %v1923 = vld [vmem:[%s1904 + $0x90] sm:$0xff]
      %v1924 = vld [vmem:[%s1904 + $0x98] sm:$0xff]
      %v1925 = vld [vmem:[%s1904 + $0xa0] sm:$0xff]
      %v1926 = vld [vmem:[%s1904 + $0xa8] sm:$0xff]
      %v1927 = vld [vmem:[%s1904 + $0xb0] sm:$0xff]
      %v1928 = vld [vmem:[%s1904 + $0xb8] sm:$0xff]
      %v1929 = vld [vmem:[%s1904 + $0xc0] sm:$0xff]
      %v1930 = vld [vmem:[%s1904 + $0xc8] sm:$0xff]
      %v1931 = vld [vmem:[%s1904 + $0xd0] sm:$0xff]
      %v1932 = vld [vmem:[%s1904 + $0xd8] sm:$0xff]
      %v1933 = vld [vmem:[%s1904 + $0xe0] sm:$0xff]
      %v1934 = vld [vmem:[%s1904 + $0xe8] sm:$0xff]
      %v1935 = vld [vmem:[%s1904 + $0xf0] sm:$0xff]
      %v1936 = vld [vmem:[%s1904 + $0xf8] sm:$0xff]
      %1937 = vmatprep.subr.mxu0 %v1906
      %1938 = vmatpush1.msra.mxu0 %v1905
      %1939 = vmatprep.subr.mxu0 %v1908
      %1940 = vmatpush1.msra.mxu0 %v1907
      %1941 = vmatprep.subr.mxu0 %v1910
      %1942 = vmatpush1.msra.mxu0 %v1909
      %1943 = vmatprep.subr.mxu0 %v1912
      %1944 = vmatpush1.msra.mxu0 %v1911
      %1945 = vmatprep.subr.mxu0 %v1914
      %1946 = vmatpush1.msra.mxu0 %v1913
      %1947 = vmatprep.subr.mxu0 %v1916
      %1948 = vmatpush1.msra.mxu0 %v1915
      %1949 = vmatprep.subr.mxu0 %v1918
      %1950 = vmatpush1.msra.mxu0 %v1917
      %1951 = vmatprep.subr.mxu0 %v1920
      %1952 = vmatpush1.msra.mxu0 %v1919
      %1953 = vmatprep.subr.mxu0 %v1922
      %1954 = vmatpush1.msra.mxu0 %v1921
      %1955 = vmatprep.subr.mxu0 %v1924
      %1956 = vmatpush1.msra.mxu0 %v1923
      %1957 = vmatprep.subr.mxu0 %v1926
      %1958 = vmatpush1.msra.mxu0 %v1925
      %1959 = vmatprep.subr.mxu0 %v1928
      %1960 = vmatpush1.msra.mxu0 %v1927
      %1961 = vmatprep.subr.mxu0 %v1930
      %1962 = vmatpush1.msra.mxu0 %v1929
      %1963 = vmatprep.subr.mxu0 %v1932
      %1964 = vmatpush1.msra.mxu0 %v1931
      %1965 = vmatprep.subr.mxu0 %v1934
      %1966 = vmatpush1.msra.mxu0 %v1933
      %1967 = vmatprep.subr.mxu0 %v1936
      %1968 = vmatpush1.msra.mxu0 %v1935
      %1969 = vmatprep.subr.mxu0 0.0
      %1970 = vmatpush1.msra.mxu0 0.0
      %1971 = vmatprep.subr.mxu0 0.0
      %1972 = vmatpush1.msra.mxu0 0.0
      %1973 = vmatprep.subr.mxu0 0.0
      %1974 = vmatpush1.msra.mxu0 0.0
      %1975 = vmatprep.subr.mxu0 0.0
      %1976 = vmatpush1.msra.mxu0 0.0
      %1977 = vmatprep.subr.mxu0 0.0
      %1978 = vmatpush1.msra.mxu0 0.0
      %1979 = vmatprep.subr.mxu0 0.0
      %1980 = vmatpush1.msra.mxu0 0.0
      %1981 = vmatprep.subr.mxu0 0.0
      %1982 = vmatpush1.msra.mxu0 0.0
      %1983 = vmatprep.subr.mxu0 0.0
      %1984 = vmatpush1.msra.mxu0 0.0
      %1985 = vmatprep.subr.mxu0 0.0
      %1986 = vmatpush1.msra.mxu0 0.0
      %1987 = vmatprep.subr.mxu0 0.0
      %1988 = vmatpush1.msra.mxu0 0.0
      %1989 = vmatprep.subr.mxu0 0.0
      %1990 = vmatpush1.msra.mxu0 0.0
      %1991 = vmatprep.subr.mxu0 0.0
      %1992 = vmatpush1.msra.mxu0 0.0
      %1993 = vmatprep.subr.mxu0 0.0
      %1994 = vmatpush1.msra.mxu0 0.0
      %1995 = vmatprep.subr.mxu0 0.0
      %1996 = vmatpush1.msra.mxu0 0.0
      %1997 = vmatprep.subr.mxu0 0.0
      %1998 = vmatpush1.msra.mxu0 0.0
      %1999 = vmatprep.subr.mxu0 0.0
      %2000 = vmatpush1.msra.mxu0 0.0
      %2001 = vmatprep.mubr.f32.mxu0 0.0
      %2002 = vmatmul.mubr.f32.gmra.mrb[0].mxu0 %v1900
      %v2003 = vpop.f32.mrb[0].mxu0
      %v2004 = vadd.f32 0.0, %v2003
      %v2005 = vpop.f32.mrb[0].mxu0
      %v2006 = vadd.f32 0.0, %v2005
      %2007 = vmatprep.mubr.f32.mxu0 0.0
      %2008 = vmatmul.mubr.f32.gmra.mrb[0].mxu0 %v1901
      %v2009 = vpop.f32.mrb[0].mxu0
      %v2010 = vadd.f32 0.0, %v2009
      %v2011 = vpop.f32.mrb[0].mxu0
      %v2012 = vadd.f32 0.0, %v2011
      %2013 = vmatprep.mubr.f32.mxu0 0.0
      %2014 = vmatmul.mubr.f32.gmra.mrb[0].mxu0 %v1902
      %v2015 = vpop.f32.mrb[0].mxu0
      %v2016 = vadd.f32 0.0, %v2015
      %v2017 = vpop.f32.mrb[0].mxu0
      %v2018 = vadd.f32 0.0, %v2017
      %2019 = vmatprep.mubr.f32.mxu0 0.0
      %2020 = vmatmul.mubr.f32.gmra.mrb[0].mxu0 %v1903
      %v2021 = vpop.f32.mrb[0].mxu0
      %v2022 = vadd.f32 0.0, %v2021
      %v2023 = vpop.f32.mrb[0].mxu0
      %v2024 = vadd.f32 0.0, %v2023
      %2025 = vdwg.mxu0
      %v2026 = vadd.f32 %v1892, %v2004
      %v2027 = vadd.f32 %v1893, %v2010
      %v2028 = vadd.f32 %v1894, %v2016
      %v2029 = vadd.f32 %v1895, %v2022
      %v2030 = vadd.f32 %v1896, %v2006
      %v2031 = vadd.f32 %v1897, %v2012
      %v2032 = vadd.f32 %v1898, %v2018
      %v2033 = vadd.f32 %v1899, %v2024
      %v2034 = vld [vmem:[#allocation3 + $0x9] sm:$0xff]
      %v2035 = vld [vmem:[#allocation3 + $0x11] sm:$0xff]
      %v2036 = vld [vmem:[#allocation3 + $0x29] sm:$0xff]
      %v2037 = vld [vmem:[#allocation3 + $0x31] sm:$0xff]
      %s2038 = scalar_lea.vmem %s6, 256
      %v2039 = vld [vmem:[%s2038] sm:$0xff]
      %v2040 = vld [vmem:[%s2038 + $0x8] sm:$0xff]
      %v2041 = vld [vmem:[%s2038 + $0x10] sm:$0xff]
      %v2042 = vld [vmem:[%s2038 + $0x18] sm:$0xff]
      %v2043 = vld [vmem:[%s2038 + $0x20] sm:$0xff]
      %v2044 = vld [vmem:[%s2038 + $0x28] sm:$0xff]
      %v2045 = vld [vmem:[%s2038 + $0x30] sm:$0xff]
      %v2046 = vld [vmem:[%s2038 + $0x38] sm:$0xff]
      %v2047 = vld [vmem:[%s2038 + $0x40] sm:$0xff]
      %v2048 = vld [vmem:[%s2038 + $0x48] sm:$0xff]
      %v2049 = vld [vmem:[%s2038 + $0x50] sm:$0xff]
      %v2050 = vld [vmem:[%s2038 + $0x58] sm:$0xff]
      %v2051 = vld [vmem:[%s2038 + $0x60] sm:$0xff]
      %v2052 = vld [vmem:[%s2038 + $0x68] sm:$0xff]
      %v2053 = vld [vmem:[%s2038 + $0x70] sm:$0xff]
      %v2054 = vld [vmem:[%s2038 + $0x78] sm:$0xff]
      %2055 = vmatprep.subr.mxu0 0.0
      %2056 = vmatpush1.msra.mxu0 %v2039
      %2057 = vmatprep.subr.mxu0 0.0
      %2058 = vmatpush1.msra.mxu0 %v2040
      %2059 = vmatprep.subr.mxu0 0.0
      %2060 = vmatpush1.msra.mxu0 %v2041
      %2061 = vmatprep.subr.mxu0 0.0
      %2062 = vmatpush1.msra.mxu0 %v2042
      %2063 = vmatprep.subr.mxu0 0.0
      %2064 = vmatpush1.msra.mxu0 %v2043
      %2065 = vmatprep.subr.mxu0 0.0
      %2066 = vmatpush1.msra.mxu0 %v2044
      %2067 = vmatprep.subr.mxu0 0.0
      %2068 = vmatpush1.msra.mxu0 %v2045
      %2069 = vmatprep.subr.mxu0 0.0
      %2070 = vmatpush1.msra.mxu0 %v2046
      %2071 = vmatprep.subr.mxu0 0.0
      %2072 = vmatpush1.msra.mxu0 %v2047
      %2073 = vmatprep.subr.mxu0 0.0
      %2074 = vmatpush1.msra.mxu0 %v2048
      %2075 = vmatprep.subr.mxu0 0.0
      %2076 = vmatpush1.msra.mxu0 %v2049
      %2077 = vmatprep.subr.mxu0 0.0
      %2078 = vmatpush1.msra.mxu0 %v2050
      %2079 = vmatprep.subr.mxu0 0.0
      %2080 = vmatpush1.msra.mxu0 %v2051
      %2081 = vmatprep.subr.mxu0 0.0
      %2082 = vmatpush1.msra.mxu0 %v2052
      %2083 = vmatprep.subr.mxu0 0.0
      %2084 = vmatpush1.msra.mxu0 %v2053
      %2085 = vmatprep.subr.mxu0 0.0
      %2086 = vmatpush1.msra.mxu0 %v2054
      %2087 = vmatprep.subr.mxu0 0.0
      %2088 = vmatpush1.msra.mxu0 0.0
      %2089 = vmatprep.subr.mxu0 0.0
      %2090 = vmatpush1.msra.mxu0 0.0
      %2091 = vmatprep.subr.mxu0 0.0
      %2092 = vmatpush1.msra.mxu0 0.0
      %2093 = vmatprep.subr.mxu0 0.0
      %2094 = vmatpush1.msra.mxu0 0.0
      %2095 = vmatprep.subr.mxu0 0.0
      %2096 = vmatpush1.msra.mxu0 0.0
      %2097 = vmatprep.subr.mxu0 0.0
      %2098 = vmatpush1.msra.mxu0 0.0
      %2099 = vmatprep.subr.mxu0 0.0
      %2100 = vmatpush1.msra.mxu0 0.0
      %2101 = vmatprep.subr.mxu0 0.0
      %2102 = vmatpush1.msra.mxu0 0.0
      %2103 = vmatprep.subr.mxu0 0.0
      %2104 = vmatpush1.msra.mxu0 0.0
      %2105 = vmatprep.subr.mxu0 0.0
      %2106 = vmatpush1.msra.mxu0 0.0
      %2107 = vmatprep.subr.mxu0 0.0
      %2108 = vmatpush1.msra.mxu0 0.0
      %2109 = vmatprep.subr.mxu0 0.0
      %2110 = vmatpush1.msra.mxu0 0.0
      %2111 = vmatprep.subr.mxu0 0.0
      %2112 = vmatpush1.msra.mxu0 0.0
      %2113 = vmatprep.subr.mxu0 0.0
      %2114 = vmatpush1.msra.mxu0 0.0
      %2115 = vmatprep.subr.mxu0 0.0
      %2116 = vmatpush1.msra.mxu0 0.0
      %2117 = vmatprep.subr.mxu0 0.0
      %2118 = vmatpush1.msra.mxu0 0.0
      %2119 = vmatprep.mubr.f32.mxu0 0.0
      %2120 = vmatmul.mubr.f32.gmra.mrb[0].mxu0 %v2034
      %v2121 = vpop.f32.mrb[0].mxu0
      %v2122 = vadd.f32 0.0, %v2121
      %v2123 = vpop.f32.mrb[0].mxu0
      %2124 = vmatprep.mubr.f32.mxu0 0.0
      %2125 = vmatmul.mubr.f32.gmra.mrb[0].mxu0 %v2035
      %v2126 = vpop.f32.mrb[0].mxu0
      %v2127 = vadd.f32 0.0, %v2126
      %v2128 = vpop.f32.mrb[0].mxu0
      %2129 = vmatprep.mubr.f32.mxu0 0.0
      %2130 = vmatmul.mubr.f32.gmra.mrb[0].mxu0 %v2036
      %v2131 = vpop.f32.mrb[0].mxu0
      %v2132 = vadd.f32 0.0, %v2131
      %v2133 = vpop.f32.mrb[0].mxu0
      %2134 = vmatprep.mubr.f32.mxu0 0.0
      %2135 = vmatmul.mubr.f32.gmra.mrb[0].mxu0 %v2037
      %v2136 = vpop.f32.mrb[0].mxu0
      %v2137 = vadd.f32 0.0, %v2136
      %v2138 = vpop.f32.mrb[0].mxu0
      %2139 = vdwg.mxu0
      %v2140 = vadd.f32 %v2026, %v2122
      %v2141 = vadd.f32 %v2027, %v2127
      %v2142 = vadd.f32 %v2028, %v2132
      %v2143 = vadd.f32 %v2029, %v2137
      %v2144 = vld [vmem:[%s1097 + $0x9] sm:$0xff]
      %v2145 = vld [vmem:[%s1097 + $0x11] sm:$0xff]
      %v2146 = vld [vmem:[%s1097 + $0x29] sm:$0xff]
      %v2147 = vld [vmem:[%s1097 + $0x31] sm:$0xff]
      %s2148 = scalar_lea.vmem %s9, 256
      %v2149 = vld [vmem:[%s2148] sm:$0xff]
      %v2150 = vld [vmem:[%s2148 + $0x8] sm:$0xff]
      %v2151 = vld [vmem:[%s2148 + $0x10] sm:$0xff]
      %v2152 = vld [vmem:[%s2148 + $0x18] sm:$0xff]
      %v2153 = vld [vmem:[%s2148 + $0x20] sm:$0xff]
      %v2154 = vld [vmem:[%s2148 + $0x28] sm:$0xff]
      %v2155 = vld [vmem:[%s2148 + $0x30] sm:$0xff]
      %v2156 = vld [vmem:[%s2148 + $0x38] sm:$0xff]
      %v2157 = vld [vmem:[%s2148 + $0x40] sm:$0xff]
      %v2158 = vld [vmem:[%s2148 + $0x48] sm:$0xff]
      %v2159 = vld [vmem:[%s2148 + $0x50] sm:$0xff]
      %v2160 = vld [vmem:[%s2148 + $0x58] sm:$0xff]
      %v2161 = vld [vmem:[%s2148 + $0x60] sm:$0xff]
      %v2162 = vld [vmem:[%s2148 + $0x68] sm:$0xff]
      %v2163 = vld [vmem:[%s2148 + $0x70] sm:$0xff]
      %v2164 = vld [vmem:[%s2148 + $0x78] sm:$0xff]
      %2165 = vmatprep.subr.mxu0 0.0
      %2166 = vmatpush1.msra.mxu0 %v2149
      %2167 = vmatprep.subr.mxu0 0.0
      %2168 = vmatpush1.msra.mxu0 %v2150
      %2169 = vmatprep.subr.mxu0 0.0
      %2170 = vmatpush1.msra.mxu0 %v2151
      %2171 = vmatprep.subr.mxu0 0.0
      %2172 = vmatpush1.msra.mxu0 %v2152
      %2173 = vmatprep.subr.mxu0 0.0
      %2174 = vmatpush1.msra.mxu0 %v2153
      %2175 = vmatprep.subr.mxu0 0.0
      %2176 = vmatpush1.msra.mxu0 %v2154
      %2177 = vmatprep.subr.mxu0 0.0
      %2178 = vmatpush1.msra.mxu0 %v2155
      %2179 = vmatprep.subr.mxu0 0.0
      %2180 = vmatpush1.msra.mxu0 %v2156
      %2181 = vmatprep.subr.mxu0 0.0
      %2182 = vmatpush1.msra.mxu0 %v2157
      %2183 = vmatprep.subr.mxu0 0.0
      %2184 = vmatpush1.msra.mxu0 %v2158
      %2185 = vmatprep.subr.mxu0 0.0
      %2186 = vmatpush1.msra.mxu0 %v2159
      %2187 = vmatprep.subr.mxu0 0.0
      %2188 = vmatpush1.msra.mxu0 %v2160
      %2189 = vmatprep.subr.mxu0 0.0
      %2190 = vmatpush1.msra.mxu0 %v2161
      %2191 = vmatprep.subr.mxu0 0.0
      %2192 = vmatpush1.msra.mxu0 %v2162
      %2193 = vmatprep.subr.mxu0 0.0
      %2194 = vmatpush1.msra.mxu0 %v2163
      %2195 = vmatprep.subr.mxu0 0.0
      %2196 = vmatpush1.msra.mxu0 %v2164
      %2197 = vmatprep.subr.mxu0 0.0
      %2198 = vmatpush1.msra.mxu0 0.0
      %2199 = vmatprep.subr.mxu0 0.0
      %2200 = vmatpush1.msra.mxu0 0.0
      %2201 = vmatprep.subr.mxu0 0.0
      %2202 = vmatpush1.msra.mxu0 0.0
      %2203 = vmatprep.subr.mxu0 0.0
      %2204 = vmatpush1.msra.mxu0 0.0
      %2205 = vmatprep.subr.mxu0 0.0
      %2206 = vmatpush1.msra.mxu0 0.0
      %2207 = vmatprep.subr.mxu0 0.0
      %2208 = vmatpush1.msra.mxu0 0.0
      %2209 = vmatprep.subr.mxu0 0.0
      %2210 = vmatpush1.msra.mxu0 0.0
      %2211 = vmatprep.subr.mxu0 0.0
      %2212 = vmatpush1.msra.mxu0 0.0
      %2213 = vmatprep.subr.mxu0 0.0
      %2214 = vmatpush1.msra.mxu0 0.0
      %2215 = vmatprep.subr.mxu0 0.0
      %2216 = vmatpush1.msra.mxu0 0.0
      %2217 = vmatprep.subr.mxu0 0.0
      %2218 = vmatpush1.msra.mxu0 0.0
      %2219 = vmatprep.subr.mxu0 0.0
      %2220 = vmatpush1.msra.mxu0 0.0
      %2221 = vmatprep.subr.mxu0 0.0
      %2222 = vmatpush1.msra.mxu0 0.0
      %2223 = vmatprep.subr.mxu0 0.0
      %2224 = vmatpush1.msra.mxu0 0.0
      %2225 = vmatprep.subr.mxu0 0.0
      %2226 = vmatpush1.msra.mxu0 0.0
      %2227 = vmatprep.subr.mxu0 0.0
      %2228 = vmatpush1.msra.mxu0 0.0
      %2229 = vmatprep.mubr.f32.mxu0 0.0
      %2230 = vmatmul.mubr.f32.gmra.mrb[0].mxu0 %v2144
      %v2231 = vpop.f32.mrb[0].mxu0
      %v2232 = vadd.f32 0.0, %v2231
      %v2233 = vpop.f32.mrb[0].mxu0
      %2234 = vmatprep.mubr.f32.mxu0 0.0
      %2235 = vmatmul.mubr.f32.gmra.mrb[0].mxu0 %v2145
      %v2236 = vpop.f32.mrb[0].mxu0
      %v2237 = vadd.f32 0.0, %v2236
      %v2238 = vpop.f32.mrb[0].mxu0
      %2239 = vmatprep.mubr.f32.mxu0 0.0
      %2240 = vmatmul.mubr.f32.gmra.mrb[0].mxu0 %v2146
      %v2241 = vpop.f32.mrb[0].mxu0
      %v2242 = vadd.f32 0.0, %v2241
      %v2243 = vpop.f32.mrb[0].mxu0
      %2244 = vmatprep.mubr.f32.mxu0 0.0
      %2245 = vmatmul.mubr.f32.gmra.mrb[0].mxu0 %v2147
      %v2246 = vpop.f32.mrb[0].mxu0
      %v2247 = vadd.f32 0.0, %v2246
      %v2248 = vpop.f32.mrb[0].mxu0
      %2249 = vdwg.mxu0
      %v2250 = vadd.f32 %v2030, %v2232
      %v2251 = vadd.f32 %v2031, %v2237
      %v2252 = vadd.f32 %v2032, %v2242
      %v2253 = vadd.f32 %v2033, %v2247
      %v2254 = vld [vmem:[#allocation2 + $0x9] sm:$0xff]
      %v2255 = vld [vmem:[#allocation2 + $0x11] sm:$0xff]
      %v2256 = vld [vmem:[#allocation2 + $0x29] sm:$0xff]
      %v2257 = vld [vmem:[#allocation2 + $0x31] sm:$0xff]
      %s2258 = scalar_lea.vmem %s7, 512
      %v2259 = vld [vmem:[%s2258] sm:$0xff]
      %v2260 = vld [vmem:[%s2258 + $0x8] sm:$0xff]
      %v2261 = vld [vmem:[%s2258 + $0x10] sm:$0xff]
      %v2262 = vld [vmem:[%s2258 + $0x18] sm:$0xff]
      %v2263 = vld [vmem:[%s2258 + $0x20] sm:$0xff]
      %v2264 = vld [vmem:[%s2258 + $0x28] sm:$0xff]
      %v2265 = vld [vmem:[%s2258 + $0x30] sm:$0xff]
      %v2266 = vld [vmem:[%s2258 + $0x38] sm:$0xff]
      %v2267 = vld [vmem:[%s2258 + $0x40] sm:$0xff]
      %v2268 = vld [vmem:[%s2258 + $0x48] sm:$0xff]
      %v2269 = vld [vmem:[%s2258 + $0x50] sm:$0xff]
      %v2270 = vld [vmem:[%s2258 + $0x58] sm:$0xff]
      %v2271 = vld [vmem:[%s2258 + $0x60] sm:$0xff]
      %v2272 = vld [vmem:[%s2258 + $0x68] sm:$0xff]
      %v2273 = vld [vmem:[%s2258 + $0x70] sm:$0xff]
      %v2274 = vld [vmem:[%s2258 + $0x78] sm:$0xff]
      %v2275 = vld [vmem:[%s2258 + $0x80] sm:$0xff]
      %v2276 = vld [vmem:[%s2258 + $0x88] sm:$0xff]
      %v2277 = vld [vmem:[%s2258 + $0x90] sm:$0xff]
      %v2278 = vld [vmem:[%s2258 + $0x98] sm:$0xff]
      %v2279 = vld [vmem:[%s2258 + $0xa0] sm:$0xff]
      %v2280 = vld [vmem:[%s2258 + $0xa8] sm:$0xff]
      %v2281 = vld [vmem:[%s2258 + $0xb0] sm:$0xff]
      %v2282 = vld [vmem:[%s2258 + $0xb8] sm:$0xff]
      %v2283 = vld [vmem:[%s2258 + $0xc0] sm:$0xff]
      %v2284 = vld [vmem:[%s2258 + $0xc8] sm:$0xff]
      %v2285 = vld [vmem:[%s2258 + $0xd0] sm:$0xff]
      %v2286 = vld [vmem:[%s2258 + $0xd8] sm:$0xff]
      %v2287 = vld [vmem:[%s2258 + $0xe0] sm:$0xff]
      %v2288 = vld [vmem:[%s2258 + $0xe8] sm:$0xff]
      %v2289 = vld [vmem:[%s2258 + $0xf0] sm:$0xff]
      %v2290 = vld [vmem:[%s2258 + $0xf8] sm:$0xff]
      %2291 = vmatprep.subr.mxu0 %v2260
      %2292 = vmatpush1.msra.mxu0 %v2259
      %2293 = vmatprep.subr.mxu0 %v2262
      %2294 = vmatpush1.msra.mxu0 %v2261
      %2295 = vmatprep.subr.mxu0 %v2264
      %2296 = vmatpush1.msra.mxu0 %v2263
      %2297 = vmatprep.subr.mxu0 %v2266
      %2298 = vmatpush1.msra.mxu0 %v2265
      %2299 = vmatprep.subr.mxu0 %v2268
      %2300 = vmatpush1.msra.mxu0 %v2267
      %2301 = vmatprep.subr.mxu0 %v2270
      %2302 = vmatpush1.msra.mxu0 %v2269
      %2303 = vmatprep.subr.mxu0 %v2272
      %2304 = vmatpush1.msra.mxu0 %v2271
      %2305 = vmatprep.subr.mxu0 %v2274
      %2306 = vmatpush1.msra.mxu0 %v2273
      %2307 = vmatprep.subr.mxu0 %v2276
      %2308 = vmatpush1.msra.mxu0 %v2275
      %2309 = vmatprep.subr.mxu0 %v2278
      %2310 = vmatpush1.msra.mxu0 %v2277
      %2311 = vmatprep.subr.mxu0 %v2280
      %2312 = vmatpush1.msra.mxu0 %v2279
      %2313 = vmatprep.subr.mxu0 %v2282
      %2314 = vmatpush1.msra.mxu0 %v2281
      %2315 = vmatprep.subr.mxu0 %v2284
      %2316 = vmatpush1.msra.mxu0 %v2283
      %2317 = vmatprep.subr.mxu0 %v2286
      %2318 = vmatpush1.msra.mxu0 %v2285
      %2319 = vmatprep.subr.mxu0 %v2288
      %2320 = vmatpush1.msra.mxu0 %v2287
      %2321 = vmatprep.subr.mxu0 %v2290
      %2322 = vmatpush1.msra.mxu0 %v2289
      %2323 = vmatprep.subr.mxu0 0.0
      %2324 = vmatpush1.msra.mxu0 0.0
      %2325 = vmatprep.subr.mxu0 0.0
      %2326 = vmatpush1.msra.mxu0 0.0
      %2327 = vmatprep.subr.mxu0 0.0
      %2328 = vmatpush1.msra.mxu0 0.0
      %2329 = vmatprep.subr.mxu0 0.0
      %2330 = vmatpush1.msra.mxu0 0.0
      %2331 = vmatprep.subr.mxu0 0.0
      %2332 = vmatpush1.msra.mxu0 0.0
      %2333 = vmatprep.subr.mxu0 0.0
      %2334 = vmatpush1.msra.mxu0 0.0
      %2335 = vmatprep.subr.mxu0 0.0
      %2336 = vmatpush1.msra.mxu0 0.0
      %2337 = vmatprep.subr.mxu0 0.0
      %2338 = vmatpush1.msra.mxu0 0.0
      %2339 = vmatprep.subr.mxu0 0.0
      %2340 = vmatpush1.msra.mxu0 0.0
      %2341 = vmatprep.subr.mxu0 0.0
      %2342 = vmatpush1.msra.mxu0 0.0
      %2343 = vmatprep.subr.mxu0 0.0
      %2344 = vmatpush1.msra.mxu0 0.0
      %2345 = vmatprep.subr.mxu0 0.0
      %2346 = vmatpush1.msra.mxu0 0.0
      %2347 = vmatprep.subr.mxu0 0.0
      %2348 = vmatpush1.msra.mxu0 0.0
      %2349 = vmatprep.subr.mxu0 0.0
      %2350 = vmatpush1.msra.mxu0 0.0
      %2351 = vmatprep.subr.mxu0 0.0
      %2352 = vmatpush1.msra.mxu0 0.0
      %2353 = vmatprep.subr.mxu0 0.0
      %2354 = vmatpush1.msra.mxu0 0.0
      %2355 = vmatprep.mubr.f32.mxu0 0.0
      %2356 = vmatmul.mubr.f32.gmra.mrb[0].mxu0 %v2254
      %v2357 = vpop.f32.mrb[0].mxu0
      %v2358 = vadd.f32 0.0, %v2357
      %v2359 = vpop.f32.mrb[0].mxu0
      %v2360 = vadd.f32 0.0, %v2359
      %2361 = vmatprep.mubr.f32.mxu0 0.0
      %2362 = vmatmul.mubr.f32.gmra.mrb[0].mxu0 %v2255
      %v2363 = vpop.f32.mrb[0].mxu0
      %v2364 = vadd.f32 0.0, %v2363
      %v2365 = vpop.f32.mrb[0].mxu0
      %v2366 = vadd.f32 0.0, %v2365
      %2367 = vmatprep.mubr.f32.mxu0 0.0
      %2368 = vmatmul.mubr.f32.gmra.mrb[0].mxu0 %v2256
      %v2369 = vpop.f32.mrb[0].mxu0
      %v2370 = vadd.f32 0.0, %v2369
      %v2371 = vpop.f32.mrb[0].mxu0
      %v2372 = vadd.f32 0.0, %v2371
      %2373 = vmatprep.mubr.f32.mxu0 0.0
      %2374 = vmatmul.mubr.f32.gmra.mrb[0].mxu0 %v2257
      %v2375 = vpop.f32.mrb[0].mxu0
      %v2376 = vadd.f32 0.0, %v2375
      %v2377 = vpop.f32.mrb[0].mxu0
      %v2378 = vadd.f32 0.0, %v2377
      %2379 = vdwg.mxu0
      %v2380 = vadd.f32 %v2140, %v2358
      %v2381 = vadd.f32 %v2141, %v2364
      %v2382 = vadd.f32 %v2142, %v2370
      %v2383 = vadd.f32 %v2143, %v2376
      %v2384 = vadd.f32 %v2250, %v2360
      %v2385 = vadd.f32 %v2251, %v2366
      %v2386 = vadd.f32 %v2252, %v2372
      %v2387 = vadd.f32 %v2253, %v2378
      %v2388 = vld [vmem:[%s1072 + $0x9] sm:$0xff]
      %v2389 = vld [vmem:[%s1072 + $0x11] sm:$0xff]
      %v2390 = vld [vmem:[%s1072 + $0x29] sm:$0xff]
      %v2391 = vld [vmem:[%s1072 + $0x31] sm:$0xff]
      %s2392 = scalar_lea.vmem %s8, 512
      %v2393 = vld [vmem:[%s2392] sm:$0xff]
      %v2394 = vld [vmem:[%s2392 + $0x8] sm:$0xff]
      %v2395 = vld [vmem:[%s2392 + $0x10] sm:$0xff]
      %v2396 = vld [vmem:[%s2392 + $0x18] sm:$0xff]
      %v2397 = vld [vmem:[%s2392 + $0x20] sm:$0xff]
      %v2398 = vld [vmem:[%s2392 + $0x28] sm:$0xff]
      %v2399 = vld [vmem:[%s2392 + $0x30] sm:$0xff]
      %v2400 = vld [vmem:[%s2392 + $0x38] sm:$0xff]
      %v2401 = vld [vmem:[%s2392 + $0x40] sm:$0xff]
      %v2402 = vld [vmem:[%s2392 + $0x48] sm:$0xff]
      %v2403 = vld [vmem:[%s2392 + $0x50] sm:$0xff]
      %v2404 = vld [vmem:[%s2392 + $0x58] sm:$0xff]
      %v2405 = vld [vmem:[%s2392 + $0x60] sm:$0xff]
      %v2406 = vld [vmem:[%s2392 + $0x68] sm:$0xff]
      %v2407 = vld [vmem:[%s2392 + $0x70] sm:$0xff]
      %v2408 = vld [vmem:[%s2392 + $0x78] sm:$0xff]
      %v2409 = vld [vmem:[%s2392 + $0x80] sm:$0xff]
      %v2410 = vld [vmem:[%s2392 + $0x88] sm:$0xff]
      %v2411 = vld [vmem:[%s2392 + $0x90] sm:$0xff]
      %v2412 = vld [vmem:[%s2392 + $0x98] sm:$0xff]
      %v2413 = vld [vmem:[%s2392 + $0xa0] sm:$0xff]
      %v2414 = vld [vmem:[%s2392 + $0xa8] sm:$0xff]
      %v2415 = vld [vmem:[%s2392 + $0xb0] sm:$0xff]
      %v2416 = vld [vmem:[%s2392 + $0xb8] sm:$0xff]
      %v2417 = vld [vmem:[%s2392 + $0xc0] sm:$0xff]
      %v2418 = vld [vmem:[%s2392 + $0xc8] sm:$0xff]
      %v2419 = vld [vmem:[%s2392 + $0xd0] sm:$0xff]
      %v2420 = vld [vmem:[%s2392 + $0xd8] sm:$0xff]
      %v2421 = vld [vmem:[%s2392 + $0xe0] sm:$0xff]
      %v2422 = vld [vmem:[%s2392 + $0xe8] sm:$0xff]
      %v2423 = vld [vmem:[%s2392 + $0xf0] sm:$0xff]
      %v2424 = vld [vmem:[%s2392 + $0xf8] sm:$0xff]
      %2425 = vmatprep.subr.mxu0 %v2394
      %2426 = vmatpush1.msra.mxu0 %v2393
      %2427 = vmatprep.subr.mxu0 %v2396
      %2428 = vmatpush1.msra.mxu0 %v2395
      %2429 = vmatprep.subr.mxu0 %v2398
      %2430 = vmatpush1.msra.mxu0 %v2397
      %2431 = vmatprep.subr.mxu0 %v2400
      %2432 = vmatpush1.msra.mxu0 %v2399
      %2433 = vmatprep.subr.mxu0 %v2402
      %2434 = vmatpush1.msra.mxu0 %v2401
      %2435 = vmatprep.subr.mxu0 %v2404
      %2436 = vmatpush1.msra.mxu0 %v2403
      %2437 = vmatprep.subr.mxu0 %v2406
      %2438 = vmatpush1.msra.mxu0 %v2405
      %2439 = vmatprep.subr.mxu0 %v2408
      %2440 = vmatpush1.msra.mxu0 %v2407
      %2441 = vmatprep.subr.mxu0 %v2410
      %2442 = vmatpush1.msra.mxu0 %v2409
      %2443 = vmatprep.subr.mxu0 %v2412
      %2444 = vmatpush1.msra.mxu0 %v2411
      %2445 = vmatprep.subr.mxu0 %v2414
      %2446 = vmatpush1.msra.mxu0 %v2413
      %2447 = vmatprep.subr.mxu0 %v2416
      %2448 = vmatpush1.msra.mxu0 %v2415
      %2449 = vmatprep.subr.mxu0 %v2418
      %2450 = vmatpush1.msra.mxu0 %v2417
      %2451 = vmatprep.subr.mxu0 %v2420
      %2452 = vmatpush1.msra.mxu0 %v2419
      %2453 = vmatprep.subr.mxu0 %v2422
      %2454 = vmatpush1.msra.mxu0 %v2421
      %2455 = vmatprep.subr.mxu0 %v2424
      %2456 = vmatpush1.msra.mxu0 %v2423
      %2457 = vmatprep.subr.mxu0 0.0
      %2458 = vmatpush1.msra.mxu0 0.0
      %2459 = vmatprep.subr.mxu0 0.0
      %2460 = vmatpush1.msra.mxu0 0.0
      %2461 = vmatprep.subr.mxu0 0.0
      %2462 = vmatpush1.msra.mxu0 0.0
      %2463 = vmatprep.subr.mxu0 0.0
      %2464 = vmatpush1.msra.mxu0 0.0
      %2465 = vmatprep.subr.mxu0 0.0
      %2466 = vmatpush1.msra.mxu0 0.0
      %2467 = vmatprep.subr.mxu0 0.0
      %2468 = vmatpush1.msra.mxu0 0.0
      %2469 = vmatprep.subr.mxu0 0.0
      %2470 = vmatpush1.msra.mxu0 0.0
      %2471 = vmatprep.subr.mxu0 0.0
      %2472 = vmatpush1.msra.mxu0 0.0
      %2473 = vmatprep.subr.mxu0 0.0
      %2474 = vmatpush1.msra.mxu0 0.0
      %2475 = vmatprep.subr.mxu0 0.0
      %2476 = vmatpush1.msra.mxu0 0.0
      %2477 = vmatprep.subr.mxu0 0.0
      %2478 = vmatpush1.msra.mxu0 0.0
      %2479 = vmatprep.subr.mxu0 0.0
      %2480 = vmatpush1.msra.mxu0 0.0
      %2481 = vmatprep.subr.mxu0 0.0
      %2482 = vmatpush1.msra.mxu0 0.0
      %2483 = vmatprep.subr.mxu0 0.0
      %2484 = vmatpush1.msra.mxu0 0.0
      %2485 = vmatprep.subr.mxu0 0.0
      %2486 = vmatpush1.msra.mxu0 0.0
      %2487 = vmatprep.subr.mxu0 0.0
      %2488 = vmatpush1.msra.mxu0 0.0
      %2489 = vmatprep.mubr.f32.mxu0 0.0
      %2490 = vmatmul.mubr.f32.gmra.mrb[0].mxu0 %v2388
      %v2491 = vpop.f32.mrb[0].mxu0
      %v2492 = vadd.f32 0.0, %v2491
      %v2493 = vpop.f32.mrb[0].mxu0
      %v2494 = vadd.f32 0.0, %v2493
      %2495 = vmatprep.mubr.f32.mxu0 0.0
      %2496 = vmatmul.mubr.f32.gmra.mrb[0].mxu0 %v2389
      %v2497 = vpop.f32.mrb[0].mxu0
      %v2498 = vadd.f32 0.0, %v2497
      %v2499 = vpop.f32.mrb[0].mxu0
      %v2500 = vadd.f32 0.0, %v2499
      %2501 = vmatprep.mubr.f32.mxu0 0.0
      %2502 = vmatmul.mubr.f32.gmra.mrb[0].mxu0 %v2390
      %v2503 = vpop.f32.mrb[0].mxu0
      %v2504 = vadd.f32 0.0, %v2503
      %v2505 = vpop.f32.mrb[0].mxu0
      %v2506 = vadd.f32 0.0, %v2505
      %2507 = vmatprep.mubr.f32.mxu0 0.0
      %2508 = vmatmul.mubr.f32.gmra.mrb[0].mxu0 %v2391
      %v2509 = vpop.f32.mrb[0].mxu0
      %v2510 = vadd.f32 0.0, %v2509
      %v2511 = vpop.f32.mrb[0].mxu0
      %v2512 = vadd.f32 0.0, %v2511
      %2513 = vdwg.mxu0
      %v2514 = vadd.f32 %v2380, %v2492
      %v2515 = vadd.f32 %v2381, %v2498
      %v2516 = vadd.f32 %v2382, %v2504
      %v2517 = vadd.f32 %v2383, %v2510
      %v2518 = vadd.f32 %v2384, %v2494
      %v2519 = vadd.f32 %v2385, %v2500
      %v2520 = vadd.f32 %v2386, %v2506
      %v2521 = vadd.f32 %v2387, %v2512
      %v2523 = vlaneseq
      %v2524 = vshrl.u32 %v2523, 7
      %v2525 = vsub.s32 0, %v2524
      %v2526 = vrot.slane %v567, %v2525
      %v2528 = vadd.f32 %v2514, %v2526
      %v2529 = vadd.f32 %v2515, %v2526
      %v2530 = vadd.f32 %v2516, %v2526
      %v2531 = vadd.f32 %v2517, %v2526
      %v2532 = vadd.f32 %v2518, %v2526
      %v2533 = vadd.f32 %v2519, %v2526
      %v2534 = vadd.f32 %v2520, %v2526
      %v2535 = vadd.f32 %v2521, %v2526
      %2536 = vst [vmem:[%s556] sm:$0xff] %v2528
      %2537 = vst [vmem:[%s556 + $0x8] sm:$0xff] %v2529
      %2538 = vst [vmem:[%s556 + $0x20] sm:$0xff] %v2530
      %2539 = vst [vmem:[%s556 + $0x28] sm:$0xff] %v2531
      %s2540 = scalar_lea.vmem %s556, 16
      %2541 = vst [vmem:[%s2540] sm:$0xff] %v2532
      %2542 = vst [vmem:[%s2540 + $0x8] sm:$0xff] %v2533
      %2543 = vst [vmem:[%s2540 + $0x20] sm:$0xff] %v2534
      %2544 = vst [vmem:[%s2540 + $0x28] sm:$0xff] %v2535
      %v2545 = vadd.f32 %v2528, %v2529
      %v2546 = vadd.f32 %v2545, %v2530
      %v2547 = vadd.f32 %v2546, %v2531
      %v2548 = vrot.slane %v2547, 4
      %v2549 = vadd.f32 %v2547, %v2548
      %v2550 = vrot.slane %v2549, 2
      %v2551 = vadd.f32 %v2549, %v2550
      %v2552 = vrot.slane %v2551, 1
      %v2553 = vadd.f32 %v2551, %v2552
      %v2554 = vadd.f32 %v2532, %v2533
      %v2555 = vadd.f32 %v2554, %v2534
      %v2556 = vadd.f32 %v2555, %v2535
      %v2557 = vrot.slane %v2556, 4
      %v2558 = vadd.f32 %v2556, %v2557
      %v2559 = vrot.slane %v2558, 2
      %v2560 = vadd.f32 %v2558, %v2559
      %v2561 = vrot.slane %v2560, 1
      %v2562 = vadd.f32 %v2560, %v2561
      %v2563 = vadd.f32 %v2553, %v2562
      %v2564 = vrcp.pop 64.0
      %v2565 = vmul.f32 %v2563, %v2564
      %v2566 = vsub.f32 %v2528, %v2565
      %v2567 = vsub.f32 %v2529, %v2565
      %v2568 = vsub.f32 %v2530, %v2565
      %v2569 = vsub.f32 %v2531, %v2565
      %v2570 = vmul.f32 %v2566, %v2566
      %v2571 = vmul.f32 %v2567, %v2567
      %v2572 = vmul.f32 %v2568, %v2568
      %v2573 = vmul.f32 %v2569, %v2569
      %v2574 = vadd.f32 %v2570, %v2571
      %v2575 = vadd.f32 %v2574, %v2572
      %v2576 = vadd.f32 %v2575, %v2573
      %v2577 = vrot.slane %v2576, 4
      %v2578 = vadd.f32 %v2576, %v2577
      %v2579 = vrot.slane %v2578, 2
      %v2580 = vadd.f32 %v2578, %v2579
      %v2581 = vrot.slane %v2580, 1
      %v2582 = vadd.f32 %v2580, %v2581
      %v2583 = vsub.f32 %v2532, %v2565
      %v2584 = vsub.f32 %v2533, %v2565
      %v2585 = vsub.f32 %v2534, %v2565
      %v2586 = vsub.f32 %v2535, %v2565
      %v2587 = vmul.f32 %v2583, %v2583
      %v2588 = vmul.f32 %v2584, %v2584
      %v2589 = vmul.f32 %v2585, %v2585
      %v2590 = vmul.f32 %v2586, %v2586
      %v2591 = vadd.f32 %v2587, %v2588
      %v2592 = vadd.f32 %v2591, %v2589
      %v2593 = vadd.f32 %v2592, %v2590
      %v2594 = vrot.slane %v2593, 4
      %v2595 = vadd.f32 %v2593, %v2594
      %v2596 = vrot.slane %v2595, 2
      %v2597 = vadd.f32 %v2595, %v2596
      %v2598 = vrot.slane %v2597, 1
      %v2599 = vadd.f32 %v2597, %v2598
      %v2600 = vadd.f32 %v2582, %v2599
      %2601 = vst [vmem:[%s565] sm:$0x1] %v2563
      %2602 = vst [vmem:[%s565 + $0x1] sm:$0x1] %v2600
      %s2603 = smul.u32 2, %s29
      %p2604 = scmp.lt.s32.totalorder %s28, 1
      %s2605 = scalar_select %p2604, %s28, 1
      %p2606 = scmp.lt.s32.totalorder %s2603, 7
      %s2607 = scalar_select %p2606, %s2603, 7
      %s2608 = smul.addr %s2607, 4
      %s2609 = smul.addr %s2605, 32
      %s2610 = sadd.s32 %s2608, %s2609
      %s2611 = smul.addr %s2610, 8
      %s2612 = scalar_lea.vmem %s11, %s2611
      %p2613 = scmp.lt.s32.totalorder %s28, 1
      %s2614 = scalar_select %p2613, %s28, 1
      %p2615 = scmp.lt.s32.totalorder %s29, 3
      %s2616 = scalar_select %p2615, %s29, 3
      %s2617 = smul.addr %s2614, 4
      %s2618 = sadd.s32 %s2616, %s2617
      %s2619 = smul.addr %s2618, 2
      %s2620 = scalar_lea.vmem %s12, %s2619
      // Predicated region
      $region65: #{deconv2d_block_forward.2} parent=63 // pred_check
        %p2621 = pneg %p316
      $region66: #{deconv2d_block_forward.2} parent=63 // pred_check_branch
        %2623 = sbr.rel (%p2621) target = $region68
      $region67: #{deconv2d_block_forward.2} parent=63 // pred_region
        %s2624 = smul.u32 2, %s29
      $region68: #{deconv2d_block_forward.2} parent=63 // pred_fallthru
        _
      // Predicated region
      $region69: #{deconv2d_block_forward.2} parent=63 // pred_check
        %p2625 = pneg %p344
      $region70: #{deconv2d_block_forward.2} parent=63 // pred_check_branch
        %2627 = sbr.rel (%p2625) target = $region72
      $region71: #{deconv2d_block_forward.2} parent=63 // pred_region
        _
      $region72: #{deconv2d_block_forward.2} parent=63 // pred_fallthru
        _
    $region64: #{deconv2d_block_forward.2} parent=5 // pred_fallthru
      _
    %p2628 = scmp.le.s32.totalorder 2, %s19
    // Predicated region
    $region73: #{deconv2d_block_forward.2} parent=5 // pred_check
      %p2629 = pneg %p2628
    $region74: #{deconv2d_block_forward.2} parent=5 // pred_check_branch
      %2631 = sbr.rel (%p2629) target = $region76
    $region75: #{deconv2d_block_forward.2} parent=5 // pred_region
      %s2632 = ssub.s32 %s19, 2
      // Predicated region
      $region77: #{deconv2d_block_forward.2} parent=75 // pred_check
        %p2633 = pneg %p322
      $region78: #{deconv2d_block_forward.2} parent=75 // pred_check_branch
        %2635 = sbr.rel (%p2633) target = $region80
      $region79: #{deconv2d_block_forward.2} parent=75 // pred_region
        %s2636 = smul.u32 2, %s31
        %p2637 = scmp.lt.s32.totalorder %s30, 1
        %s2638 = scalar_select %p2637, %s30, 1
        %p2639 = scmp.lt.s32.totalorder %s2636, 7
        %s2640 = scalar_select %p2639, %s2636, 7
        %s2641 = smul.addr %s2640, 4
        %s2642 = smul.addr %s2638, 32
        %s2643 = sadd.s32 %s2641, %s2642
        %s2644 = smul.addr %s2643, 8
        %s2645 = scalar_lea.vmem %s11, %s2644
      $region80: #{deconv2d_block_forward.2} parent=75 // pred_fallthru
        _
      // Predicated region
      $region81: #{deconv2d_block_forward.2} parent=75 // pred_check
        %p2646 = pneg %p350
      $region82: #{deconv2d_block_forward.2} parent=75 // pred_check_branch
        %2648 = sbr.rel (%p2646) target = $region84
      $region83: #{deconv2d_block_forward.2} parent=75 // pred_region
        %p2649 = scmp.lt.s32.totalorder %s30, 1
        %s2650 = scalar_select %p2649, %s30, 1
        %p2651 = scmp.lt.s32.totalorder %s31, 3
        %s2652 = scalar_select %p2651, %s31, 3
        %s2653 = smul.addr %s2650, 4
        %s2654 = sadd.s32 %s2652, %s2653
        %s2655 = smul.addr %s2654, 2
        %s2656 = scalar_lea.vmem %s12, %s2655
      $region84: #{deconv2d_block_forward.2} parent=75 // pred_fallthru
        _
    $region76: #{deconv2d_block_forward.2} parent=5 // pred_fallthru
      _
  $region6: #{deconv2d_block_forward.2} parent=0 // loop_footer
    %s23 = sadd.s32 1, %s19
  $region7: #{deconv2d_block_forward.2} parent=0 // loop_footer_branch
    %18 = sbr.rel target = $region3
  $region8: #{deconv2d_block_forward.2} parent=0 // loop_exit
    _

</llo_original>
